<compile_context>
chip_gen: v6e
topology: v6e:2x2x1
jax: 0.10.0
libtpu: 0.0.40
codegen_flags: <defaults>
</compile_context>

<pallas_src>
import jax
import jax.numpy as jnp
import numpy as np
from jax.experimental import pallas as pl
from jax.experimental.pallas import tpu as pltpu

# Small, deterministic synthetic shapes consistent with an image classifier.
N, CIN, H, W = 2, 4, 16, 16      # batch, channels, spatial
CMID = 32                        # conv output channels
NCLS = 16                        # number of classes (softmax dim 1 in torch)
HW = H * W
PH, PW = H + 2, W + 2            # spatially zero-padded extents ('same' conv)
PHW = PH * PW
NP = N * PHW                     # rows the conv is evaluated on (incl. halo rows)
SHIFT = PW + 1                   # max |row shift| of a 3x3 tap (= 19)
ROWS = NP + 2 * SHIFT            # halo-padded row count of the kernel input
OUT_LANES = 128                  # lane-dense output / param slab width
K1 = 9 * CIN                     # im2col contraction size (3x3 taps)
PARAM_ROWS = CMID + 2            # packed params: [w2 (CMID rows) | b1 | b2]


def _fused_forward_kernel(xrows_ref, w1_ref, pool_ref, params_ref, out_ref):
    # xrows_ref:  (ROWS, CIN) f32      padded NHWC input flattened to rows
    # w1_ref:     (9, CIN, CMID) bf16  conv weight, one (CIN, CMID) slice per tap
    # pool_ref:   (N, NP) f32          per-sample masked-mean matrix (entries 1/HW)
    # params_ref: (PARAM_ROWS, 128) f32 packed [w2 | b1 | b2]
    # out_ref:    (N, OUT_LANES) f32 -> [logits | entropy | zero pad]

    # Unpack the small head parameters (static sub-slices of one VMEM slab).
    w2 = params_ref[0:CMID, 0:NCLS]                                  # (CMID, NCLS)
    b1 = params_ref[CMID:CMID + 1, 0:CMID]                           # (1, CMID)
    b2 = params_ref[CMID + 1:CMID + 2, 0:NCLS]                       # (1, NCLS)

    # 3x3 'same' conv as 9 statically shifted matmuls (im2col fused in-kernel).
    acc = None
    for t in range(9):
        oy, ox = t // 3 - 1, t % 3 - 1
        start = SHIFT + oy * PW + ox                                  # python int
        tap = xrows_ref[start:start + NP, :].astype(jnp.bfloat16)     # (NP, CIN)
        part = jnp.dot(tap, w1_ref[t],
                       preferred_element_type=jnp.float32)            # (NP, CMID)
        acc = part if acc is None else acc + part
    h = jnp.maximum(acc + b1, 0.0)                                    # (NP, CMID)

    # Per-sample global average pool on the MXU: pool rows hold 1/HW at the
    # sample's HW real spatial rows and 0 at halo/pad rows.
    pooled = jnp.dot(pool_ref[...], h,
                     preferred_element_type=jnp.float32)              # (N, CMID)

    # Linear classifier head.
    logits = jnp.dot(pooled, w2,
                     preferred_element_type=jnp.float32) + b2         # (N, NCLS)

    # softmax_entropy: -(softmax(x) * log_softmax(x)).sum(1)
    #                = logsumexp(z) - sum(exp(z)*z)/sum(exp(z)),  z = x - max(x)
    m = jnp.max(logits, axis=-1, keepdims=True)
    z = logits - m
    e = jnp.exp(z)
    s = jnp.sum(e, axis=-1, keepdims=True)
    ent = jnp.log(s) - jnp.sum(e * z, axis=-1, keepdims=True) / s     # (N, 1)

    pad = jnp.zeros((N, OUT_LANES - NCLS - 1), jnp.float32)
    out_ref[...] = jnp.concatenate([logits, ent, pad], axis=-1)       # (N, 128)


def _pool_matrix():
    """(N, NP) matrix: 1/HW at each sample's real (non-halo) spatial rows."""
    q = np.arange(NP)
    b_q = q // PHW
    hp = (q % PHW) // PW
    wp = q % PW
    real = (hp >= 1) & (hp <= H) & (wp >= 1) & (wp <= W)
    m = np.zeros((N, NP), np.float32)
    for b in range(N):
        m[b, (b_q == b) & real] = 1.0 / HW
    return jnp.asarray(m)


_POOL = _pool_matrix()


@jax.jit
def tent_ext_forward(x_nchw, w1, b1, w2, b2):
    """Tent_ext.forward (no-grad branch): returns (logits[N, NCLS], ents[N, 1])."""
    # Glue: NCHW -> NHWC, spatial zero pad, flatten to rows, halo pad for taps.
    x = jnp.transpose(x_nchw, (0, 2, 3, 1))                           # (N,H,W,CIN)
    xp = jnp.pad(x, ((0, 0), (1, 1), (1, 1), (0, 0)))                 # (N,PH,PW,CIN)
    xrows = jnp.pad(xp.reshape(NP, CIN), ((SHIFT, SHIFT), (0, 0)))    # (ROWS,CIN)
    w1_taps = w1.astype(jnp.bfloat16).reshape(9, CIN, CMID)

    # Pack the tiny head parameters into one lane-dense f32 slab.
    params = jnp.zeros((PARAM_ROWS, OUT_LANES), jnp.float32)
    params = params.at[0:CMID, 0:NCLS].set(w2)
    params = params.at[CMID, 0:CMID].set(b1.reshape(CMID))
    params = params.at[CMID + 1, 0:NCLS].set(b2.reshape(NCLS))

    slab = pl.pallas_call(
        _fused_forward_kernel,
        out_shape=jax.ShapeDtypeStruct((N, OUT_LANES), jnp.float32),
        grid=(1,),
        in_specs=[
            pl.BlockSpec((ROWS, CIN), lambda i: (0, 0)),
            pl.BlockSpec((9, CIN, CMID), lambda i: (0, 0, 0)),
            pl.BlockSpec((N, NP), lambda i: (0, 0)),
            pl.BlockSpec((PARAM_ROWS, OUT_LANES), lambda i: (0, 0)),
        ],
        out_specs=pl.BlockSpec((N, OUT_LANES), lambda i: (0, 0)),
        compiler_params=pltpu.CompilerParams(
            dimension_semantics=("arbitrary",)),
    )(xrows, w1_taps, _POOL, params)

    logits = slab[:, :NCLS]
    ents = slab[:, NCLS:NCLS + 1]   # == softmax_entropy(outputs).view(-1, 1)
    # TODO(synk): protector.protect / martingale_slope / forward_and_adapt
    # (autograd + optimizer.step on an external protector object) have no clean
    # Pallas equivalent; we return the un-adapted model outputs, which matches
    # the |slope| < slope_threshold branch of Tent_ext.forward.
    return logits, ents


def _ref_forward(x_nchw, w1, b1, w2, b2):
    """Pure-JAX reference of the same forward (bf16 conv operands, f32 accum)."""
    x = jnp.transpose(x_nchw, (0, 2, 3, 1))
    xp = jnp.pad(x, ((0, 0), (1, 1), (1, 1), (0, 0)))
    taps = [xp[:, dy:dy + H, dx:dx + W, :] for dy in range(3) for dx in range(3)]
    patches = jnp.concatenate(taps, axis=-1).reshape(N, HW, K1)
    h = jnp.einsum('bpk,kc->bpc', patches.astype(jnp.bfloat16),
                   w1.astype(jnp.bfloat16),
                   preferred_element_type=jnp.float32) + b1
    h = jnp.maximum(h, 0.0)
    pooled = jnp.mean(h, axis=1)
    logits = jnp.dot(pooled, w2, precision='highest') + b2
    logp = jax.nn.log_softmax(logits, axis=1)
    ents = -(jnp.exp(logp) * logp).sum(axis=1, keepdims=True)
    return logits, ents


if __name__ == "__main__":
    key = jax.random.PRNGKey(0)
    kx, k1, k2, k3, k4 = jax.random.split(key, 5)
    # Deterministic synthetic parameters (shapes implied by the synthetic model).
    x = jax.random.normal(kx, (N, CIN, H, W), dtype=jnp.float32)
    w1 = jax.random.normal(k1, (K1, CMID), dtype=jnp.float32) * 0.1
    b1 = jax.random.normal(k2, (1, CMID), dtype=jnp.float32) * 0.1
    w2 = jax.random.normal(k3, (CMID, NCLS), dtype=jnp.float32) * 0.1
    b2 = jax.random.normal(k4, (1, NCLS), dtype=jnp.float32) * 0.1

    logits, ents = jax.block_until_ready(tent_ext_forward(x, w1, b1, w2, b2))
    ref_logits, ref_ents = _ref_forward(x, w1, b1, w2, b2)

    assert logits.shape == (N, NCLS) and ents.shape == (N, 1)
    assert np.allclose(np.asarray(logits), np.asarray(ref_logits),
                       atol=2e-3, rtol=2e-3)
    assert np.allclose(np.asarray(ents), np.asarray(ref_ents),
                       atol=2e-3, rtol=2e-3)
    print("KERNEL_OK")
</pallas_src>

<mosaic_0001>
module attributes {stable_mosaic.version = 11 : i64} {
  func.func @_fused_forward_kernel(%arg0: i32, %arg1: memref<686x4xf32, #tpu.memory_space<vmem>>, %arg2: memref<9x4x32xbf16, #tpu.memory_space<vmem>>, %arg3: memref<2x648xf32, #tpu.memory_space<vmem>>, %arg4: memref<34x128xf32, #tpu.memory_space<vmem>>, %arg5: memref<2x128xf32, #tpu.memory_space<vmem>>) attributes {dimension_semantics = [#tpu.dimension_semantics<arbitrary>], iteration_bounds = array<i64: 1>, scalar_prefetch = 0 : i64, scratch_operands = 0 : i64, tpu.core_type = #tpu.core_type<tc>, window_params = [{pipeline_mode = #tpu.pipeline_mode<synchronous>, transform_indices = @transform_0, window_bounds = array<i64: 686, 4>}, {pipeline_mode = #tpu.pipeline_mode<synchronous>, transform_indices = @transform_1, window_bounds = array<i64: 9, 4, 32>}, {pipeline_mode = #tpu.pipeline_mode<synchronous>, transform_indices = @transform_2, window_bounds = array<i64: 2, 648>}, {pipeline_mode = #tpu.pipeline_mode<synchronous>, transform_indices = @transform_3, window_bounds = array<i64: 34, 128>}, {pipeline_mode = #tpu.pipeline_mode<synchronous>, transform_indices = @transform_4, window_bounds = array<i64: 2, 128>}]} {
    %c0 = arith.constant 0 : index
    %c0_0 = arith.constant 0 : index
    %0 = vector.load %arg4[%c0, %c0_0] : memref<34x128xf32, #tpu.memory_space<vmem>>, vector<32x16xf32>
    %c32 = arith.constant 32 : index
    %c0_1 = arith.constant 0 : index
    %1 = vector.load %arg4[%c32, %c0_1] : memref<34x128xf32, #tpu.memory_space<vmem>>, vector<1x32xf32>
    %c33 = arith.constant 33 : index
    %c0_2 = arith.constant 0 : index
    %2 = vector.load %arg4[%c33, %c0_2] : memref<34x128xf32, #tpu.memory_space<vmem>>, vector<1x16xf32>
    %c0_3 = arith.constant 0 : index
    %c0_4 = arith.constant 0 : index
    %3 = vector.load %arg1[%c0_3, %c0_4] : memref<686x4xf32, #tpu.memory_space<vmem>>, vector<648x4xf32>
    %4 = arith.truncf %3 : vector<648x4xf32> to vector<648x4xbf16>
    %c0_5 = arith.constant 0 : index
    %c0_6 = arith.constant 0 : index
    %c0_7 = arith.constant 0 : index
    %5 = vector.load %arg2[%c0_5, %c0_6, %c0_7] : memref<9x4x32xbf16, #tpu.memory_space<vmem>>, vector<1x4x32xbf16>
    %6 = vector.shape_cast %5 : vector<1x4x32xbf16> to vector<4x32xbf16>
    %cst = arith.constant dense<0.000000e+00> : vector<648x32xf32>
    %7 = tpu.matmul %4, %6, %cst {dimension_numbers = #tpu.dot_dimension_numbers<[1], [0], [0], [1], [0, 0, 1, 1], [], []>} : vector<648x4xbf16>, vector<4x32xbf16>, vector<648x32xf32> -> vector<648x32xf32>
    %c1 = arith.constant 1 : index
    %c0_8 = arith.constant 0 : index
    %8 = vector.load %arg1[%c1, %c0_8] : memref<686x4xf32, #tpu.memory_space<vmem>>, vector<648x4xf32>
    %9 = arith.truncf %8 : vector<648x4xf32> to vector<648x4xbf16>
    %c1_9 = arith.constant 1 : index
    %c0_10 = arith.constant 0 : index
    %c0_11 = arith.constant 0 : index
    %10 = vector.load %arg2[%c1_9, %c0_10, %c0_11] : memref<9x4x32xbf16, #tpu.memory_space<vmem>>, vector<1x4x32xbf16>
    %11 = vector.shape_cast %10 : vector<1x4x32xbf16> to vector<4x32xbf16>
    %cst_12 = arith.constant dense<0.000000e+00> : vector<648x32xf32>
    %12 = tpu.matmul %9, %11, %cst_12 {dimension_numbers = #tpu.dot_dimension_numbers<[1], [0], [0], [1], [0, 0, 1, 1], [], []>} : vector<648x4xbf16>, vector<4x32xbf16>, vector<648x32xf32> -> vector<648x32xf32>
    %13 = arith.addf %7, %12 : vector<648x32xf32>
    %c2 = arith.constant 2 : index
    %c0_13 = arith.constant 0 : index
    %14 = vector.load %arg1[%c2, %c0_13] : memref<686x4xf32, #tpu.memory_space<vmem>>, vector<648x4xf32>
    %15 = arith.truncf %14 : vector<648x4xf32> to vector<648x4xbf16>
    %c2_14 = arith.constant 2 : index
    %c0_15 = arith.constant 0 : index
    %c0_16 = arith.constant 0 : index
    %16 = vector.load %arg2[%c2_14, %c0_15, %c0_16] : memref<9x4x32xbf16, #tpu.memory_space<vmem>>, vector<1x4x32xbf16>
    %17 = vector.shape_cast %16 : vector<1x4x32xbf16> to vector<4x32xbf16>
    %cst_17 = arith.constant dense<0.000000e+00> : vector<648x32xf32>
    %18 = tpu.matmul %15, %17, %cst_17 {dimension_numbers = #tpu.dot_dimension_numbers<[1], [0], [0], [1], [0, 0, 1, 1], [], []>} : vector<648x4xbf16>, vector<4x32xbf16>, vector<648x32xf32> -> vector<648x32xf32>
    %19 = arith.addf %13, %18 : vector<648x32xf32>
    %c18 = arith.constant 18 : index
    %c0_18 = arith.constant 0 : index
    %20 = vector.load %arg1[%c18, %c0_18] : memref<686x4xf32, #tpu.memory_space<vmem>>, vector<648x4xf32>
    %21 = arith.truncf %20 : vector<648x4xf32> to vector<648x4xbf16>
    %c3 = arith.constant 3 : index
    %c0_19 = arith.constant 0 : index
    %c0_20 = arith.constant 0 : index
    %22 = vector.load %arg2[%c3, %c0_19, %c0_20] : memref<9x4x32xbf16, #tpu.memory_space<vmem>>, vector<1x4x32xbf16>
    %23 = vector.shape_cast %22 : vector<1x4x32xbf16> to vector<4x32xbf16>
    %cst_21 = arith.constant dense<0.000000e+00> : vector<648x32xf32>
    %24 = tpu.matmul %21, %23, %cst_21 {dimension_numbers = #tpu.dot_dimension_numbers<[1], [0], [0], [1], [0, 0, 1, 1], [], []>} : vector<648x4xbf16>, vector<4x32xbf16>, vector<648x32xf32> -> vector<648x32xf32>
    %25 = arith.addf %19, %24 : vector<648x32xf32>
    %c19 = arith.constant 19 : index
    %c0_22 = arith.constant 0 : index
    %26 = vector.load %arg1[%c19, %c0_22] : memref<686x4xf32, #tpu.memory_space<vmem>>, vector<648x4xf32>
    %27 = arith.truncf %26 : vector<648x4xf32> to vector<648x4xbf16>
    %c4 = arith.constant 4 : index
    %c0_23 = arith.constant 0 : index
    %c0_24 = arith.constant 0 : index
    %28 = vector.load %arg2[%c4, %c0_23, %c0_24] : memref<9x4x32xbf16, #tpu.memory_space<vmem>>, vector<1x4x32xbf16>
    %29 = vector.shape_cast %28 : vector<1x4x32xbf16> to vector<4x32xbf16>
    %cst_25 = arith.constant dense<0.000000e+00> : vector<648x32xf32>
    %30 = tpu.matmul %27, %29, %cst_25 {dimension_numbers = #tpu.dot_dimension_numbers<[1], [0], [0], [1], [0, 0, 1, 1], [], []>} : vector<648x4xbf16>, vector<4x32xbf16>, vector<648x32xf32> -> vector<648x32xf32>
    %31 = arith.addf %25, %30 : vector<648x32xf32>
    %c20 = arith.constant 20 : index
    %c0_26 = arith.constant 0 : index
    %32 = vector.load %arg1[%c20, %c0_26] : memref<686x4xf32, #tpu.memory_space<vmem>>, vector<648x4xf32>
    %33 = arith.truncf %32 : vector<648x4xf32> to vector<648x4xbf16>
    %c5 = arith.constant 5 : index
    %c0_27 = arith.constant 0 : index
    %c0_28 = arith.constant 0 : index
    %34 = vector.load %arg2[%c5, %c0_27, %c0_28] : memref<9x4x32xbf16, #tpu.memory_space<vmem>>, vector<1x4x32xbf16>
    %35 = vector.shape_cast %34 : vector<1x4x32xbf16> to vector<4x32xbf16>
    %cst_29 = arith.constant dense<0.000000e+00> : vector<648x32xf32>
    %36 = tpu.matmul %33, %35, %cst_29 {dimension_numbers = #tpu.dot_dimension_numbers<[1], [0], [0], [1], [0, 0, 1, 1], [], []>} : vector<648x4xbf16>, vector<4x32xbf16>, vector<648x32xf32> -> vector<648x32xf32>
    %37 = arith.addf %31, %36 : vector<648x32xf32>
    %c36 = arith.constant 36 : index
    %c0_30 = arith.constant 0 : index
    %38 = vector.load %arg1[%c36, %c0_30] : memref<686x4xf32, #tpu.memory_space<vmem>>, vector<648x4xf32>
    %39 = arith.truncf %38 : vector<648x4xf32> to vector<648x4xbf16>
    %c6 = arith.constant 6 : index
    %c0_31 = arith.constant 0 : index
    %c0_32 = arith.constant 0 : index
    %40 = vector.load %arg2[%c6, %c0_31, %c0_32] : memref<9x4x32xbf16, #tpu.memory_space<vmem>>, vector<1x4x32xbf16>
    %41 = vector.shape_cast %40 : vector<1x4x32xbf16> to vector<4x32xbf16>
    %cst_33 = arith.constant dense<0.000000e+00> : vector<648x32xf32>
    %42 = tpu.matmul %39, %41, %cst_33 {dimension_numbers = #tpu.dot_dimension_numbers<[1], [0], [0], [1], [0, 0, 1, 1], [], []>} : vector<648x4xbf16>, vector<4x32xbf16>, vector<648x32xf32> -> vector<648x32xf32>
    %43 = arith.addf %37, %42 : vector<648x32xf32>
    %c37 = arith.constant 37 : index
    %c0_34 = arith.constant 0 : index
    %44 = vector.load %arg1[%c37, %c0_34] : memref<686x4xf32, #tpu.memory_space<vmem>>, vector<648x4xf32>
    %45 = arith.truncf %44 : vector<648x4xf32> to vector<648x4xbf16>
    %c7 = arith.constant 7 : index
    %c0_35 = arith.constant 0 : index
    %c0_36 = arith.constant 0 : index
    %46 = vector.load %arg2[%c7, %c0_35, %c0_36] : memref<9x4x32xbf16, #tpu.memory_space<vmem>>, vector<1x4x32xbf16>
    %47 = vector.shape_cast %46 : vector<1x4x32xbf16> to vector<4x32xbf16>
    %cst_37 = arith.constant dense<0.000000e+00> : vector<648x32xf32>
    %48 = tpu.matmul %45, %47, %cst_37 {dimension_numbers = #tpu.dot_dimension_numbers<[1], [0], [0], [1], [0, 0, 1, 1], [], []>} : vector<648x4xbf16>, vector<4x32xbf16>, vector<648x32xf32> -> vector<648x32xf32>
    %49 = arith.addf %43, %48 : vector<648x32xf32>
    %c38 = arith.constant 38 : index
    %c0_38 = arith.constant 0 : index
    %50 = vector.load %arg1[%c38, %c0_38] : memref<686x4xf32, #tpu.memory_space<vmem>>, vector<648x4xf32>
    %51 = arith.truncf %50 : vector<648x4xf32> to vector<648x4xbf16>
    %c8 = arith.constant 8 : index
    %c0_39 = arith.constant 0 : index
    %c0_40 = arith.constant 0 : index
    %52 = vector.load %arg2[%c8, %c0_39, %c0_40] : memref<9x4x32xbf16, #tpu.memory_space<vmem>>, vector<1x4x32xbf16>
    %53 = vector.shape_cast %52 : vector<1x4x32xbf16> to vector<4x32xbf16>
    %cst_41 = arith.constant dense<0.000000e+00> : vector<648x32xf32>
    %54 = tpu.matmul %51, %53, %cst_41 {dimension_numbers = #tpu.dot_dimension_numbers<[1], [0], [0], [1], [0, 0, 1, 1], [], []>} : vector<648x4xbf16>, vector<4x32xbf16>, vector<648x32xf32> -> vector<648x32xf32>
    %55 = arith.addf %49, %54 : vector<648x32xf32>
    %56 = vector.broadcast %1 : vector<1x32xf32> to vector<648x32xf32>
    %57 = arith.addf %55, %56 : vector<648x32xf32>
    %cst_42 = arith.constant 0.000000e+00 : f32
    %58 = vector.broadcast %cst_42 : f32 to vector<648x32xf32>
    %59 = arith.maximumf %57, %58 : vector<648x32xf32>
    %c0_43 = arith.constant 0 : index
    %c0_44 = arith.constant 0 : index
    %60 = vector.load %arg3[%c0_43, %c0_44] : memref<2x648xf32, #tpu.memory_space<vmem>>, vector<2x648xf32>
    %cst_45 = arith.constant dense<0.000000e+00> : vector<2x32xf32>
    %61 = tpu.matmul %60, %59, %cst_45 {dimension_numbers = #tpu.dot_dimension_numbers<[1], [0], [0], [1], [0, 0, 1, 1], [], []>} : vector<2x648xf32>, vector<648x32xf32>, vector<2x32xf32> -> vector<2x32xf32>
    %cst_46 = arith.constant dense<0.000000e+00> : vector<2x16xf32>
    %62 = tpu.matmul %61, %0, %cst_46 {dimension_numbers = #tpu.dot_dimension_numbers<[1], [0], [0], [1], [0, 0, 1, 1], [], []>} : vector<2x32xf32>, vector<32x16xf32>, vector<2x16xf32> -> vector<2x16xf32>
    %63 = vector.broadcast %2 : vector<1x16xf32> to vector<2x16xf32>
    %64 = arith.addf %62, %63 : vector<2x16xf32>
    %cst_47 = arith.constant dense<0xFF800000> : vector<2xf32>
    %65 = vector.multi_reduction <maximumf>, %64, %cst_47 [1] : vector<2x16xf32> to vector<2xf32>
    %66 = vector.shape_cast %65 : vector<2xf32> to vector<2x1xf32>
    %67 = vector.broadcast %66 : vector<2x1xf32> to vector<2x16xf32>
    %68 = arith.subf %64, %67 : vector<2x16xf32>
    %69 = math.exp %68 : vector<2x16xf32>
    %cst_48 = arith.constant dense<0.000000e+00> : vector<2xf32>
    %70 = vector.multi_reduction <add>, %69, %cst_48 [1] : vector<2x16xf32> to vector<2xf32>
    %71 = vector.shape_cast %70 : vector<2xf32> to vector<2x1xf32>
    %72 = math.log %71 : vector<2x1xf32>
    %73 = arith.mulf %69, %68 : vector<2x16xf32>
    %cst_49 = arith.constant dense<0.000000e+00> : vector<2xf32>
    %74 = vector.multi_reduction <add>, %73, %cst_49 [1] : vector<2x16xf32> to vector<2xf32>
    %75 = vector.shape_cast %74 : vector<2xf32> to vector<2x1xf32>
    %76 = arith.divf %75, %71 : vector<2x1xf32>
    %77 = arith.subf %72, %76 : vector<2x1xf32>
    %cst_50 = arith.constant 0.000000e+00 : f32
    %78 = vector.broadcast %cst_50 : f32 to vector<2x111xf32>
    %79 = tpu.concatenate %64, %77, %78 in 1 : vector<2x16xf32>, vector<2x1xf32>, vector<2x111xf32> -> vector<2x128xf32>
    %c0_51 = arith.constant 0 : index
    %c0_52 = arith.constant 0 : index
    %80 = vector.load %arg5[%c0_51, %c0_52] : memref<2x128xf32, #tpu.memory_space<vmem>>, vector<2x128xf32>
    tpu.vector_store %arg5[%c0_51, %c0_52], %79 {strides = array<i32>} : memref<2x128xf32, #tpu.memory_space<vmem>>, vector<2x128xf32>,
    return
  }
  func.func @transform_0(%arg0: i32) -> (i32, i32) {
    %c0_i32 = arith.constant 0 : i32
    %c0_i32_0 = arith.constant 0 : i32
    %c0_i32_1 = arith.constant 0 : i32
    return %c0_i32, %c0_i32_0 : i32, i32
  }
  func.func @transform_1(%arg0: i32) -> (i32, i32, i32) {
    %c0_i32 = arith.constant 0 : i32
    %c0_i32_0 = arith.constant 0 : i32
    %c0_i32_1 = arith.constant 0 : i32
    %c0_i32_2 = arith.constant 0 : i32
    return %c0_i32, %c0_i32_0, %c0_i32_1 : i32, i32, i32
  }
  func.func @transform_2(%arg0: i32) -> (i32, i32) {
    %c0_i32 = arith.constant 0 : i32
    %c0_i32_0 = arith.constant 0 : i32
    %c0_i32_1 = arith.constant 0 : i32
    return %c0_i32, %c0_i32_0 : i32, i32
  }
  func.func @transform_3(%arg0: i32) -> (i32, i32) {
    %c0_i32 = arith.constant 0 : i32
    %c0_i32_0 = arith.constant 0 : i32
    %c0_i32_1 = arith.constant 0 : i32
    return %c0_i32, %c0_i32_0 : i32, i32
  }
  func.func @transform_4(%arg0: i32) -> (i32, i32) {
    %c0_i32 = arith.constant 0 : i32
    %c0_i32_0 = arith.constant 0 : i32
    %c0_i32_1 = arith.constant 0 : i32
    return %c0_i32, %c0_i32_0 : i32, i32
  }
}

</mosaic_0001>

<llo_original>
// kernel: tent_ext_forward.1
$region0: #{tent_ext_forward.1}
  #allocation0 [shape = 'u32[]', space=smem, size = 0x4, offset = 0x4, fixed_abs, tag = 'smem constant byte address 0x4 - core index']
  #allocation1 [shape = 'u32[144,128]{1,0:T(1,128)}', space=vmem, size = 0x12000, scoped, tag = 'internal scratch']
  %s0 = inlined_call_operand.vmem [shape: f32[686,4], index: 0, kind: input, shape index: {}]
  %s1 = inlined_call_operand.vmem [shape: bf16[9,4,32], index: 1, kind: input, shape index: {}]
  %s2 = inlined_call_operand.vmem [shape: f32[2,648], index: 2, kind: input, shape index: {}]
  %s3 = inlined_call_operand.vmem [shape: f32[34,128], index: 3, kind: input, shape index: {}]
  %s4 = inlined_call_operand.vmem [shape: f32[2,128], index: 4, kind: output, shape index: {}]
  %s5 = sld [smem:[#allocation0]]
  $region26: #{tent_ext_forward.1} parent=0
    _
  %s7 = ssub.s32 1, %s5
  %s8 = scalar_select 0, %s7, %s5
  // Predicated region
  $region2: #{tent_ext_forward.1} parent=0 // pred_check
    _
  $region3: #{tent_ext_forward.1} parent=0 // pred_check_branch
    %10 = sbr.rel (0) target = $region5
  $region4: #{tent_ext_forward.1} parent=0 // pred_region
    _
  $region5: #{tent_ext_forward.1} parent=0 // pred_fallthru
    _
  // Predicated region
  $region6: #{tent_ext_forward.1} parent=0 // pred_check
    _
  $region7: #{tent_ext_forward.1} parent=0 // pred_check_branch
    %12 = sbr.rel (0) target = $region9
  $region8: #{tent_ext_forward.1} parent=0 // pred_region
    _
  $region9: #{tent_ext_forward.1} parent=0 // pred_fallthru
    _
  // Predicated region
  $region10: #{tent_ext_forward.1} parent=0 // pred_check
    _
  $region11: #{tent_ext_forward.1} parent=0 // pred_check_branch
    %14 = sbr.rel (0) target = $region13
  $region12: #{tent_ext_forward.1} parent=0 // pred_region
    _
  $region13: #{tent_ext_forward.1} parent=0 // pred_fallthru
    _
  // Predicated region
  $region14: #{tent_ext_forward.1} parent=0 // pred_check
    _
  $region15: #{tent_ext_forward.1} parent=0 // pred_check_branch
    %16 = sbr.rel (0) target = $region17
  $region16: #{tent_ext_forward.1} parent=0 // pred_region
    _
  $region17: #{tent_ext_forward.1} parent=0 // pred_fallthru
    _
  %v18 = vld [vmem:[%s3] sm:$0xff]
  %v19 = vld [vmem:[%s3 + $0x8] sm:$0xff]
  %v20 = vld [vmem:[%s3 + $0x10] sm:$0xff]
  %v21 = vld [vmem:[%s3 + $0x18] sm:$0xff]
  %v22 = vld [vmem:[%s3 + $0x20] sm:$0x1]
  %v23 = vld [vmem:[%s3 + $0x21] sm:$0x1]
  %v24 = vld [vmem:[%s0] sm:$0xff]
  %v25 = vld [vmem:[%s0 + $0x8] sm:$0xff]
  %v26 = vld [vmem:[%s0 + $0x10] sm:$0xff]
  %v27 = vld [vmem:[%s0 + $0x18] sm:$0xff]
  %v28 = vld [vmem:[%s0 + $0x20] sm:$0xff]
  %v29 = vld [vmem:[%s0 + $0x28] sm:$0xff]
  %v30 = vld [vmem:[%s0 + $0x30] sm:$0xff]
  %v31 = vld [vmem:[%s0 + $0x38] sm:$0xff]
  %v32 = vld [vmem:[%s0 + $0x40] sm:$0xff]
  %v33 = vld [vmem:[%s0 + $0x48] sm:$0xff]
  %v34 = vld [vmem:[%s0 + $0x50] sm:$0xff]
  %v35 = vld [vmem:[%s0 + $0x58] sm:$0xff]
  %v36 = vld [vmem:[%s0 + $0x60] sm:$0xff]
  %v37 = vld [vmem:[%s0 + $0x68] sm:$0xff]
  %v38 = vld [vmem:[%s0 + $0x70] sm:$0xff]
  %v39 = vld [vmem:[%s0 + $0x78] sm:$0xff]
  %v40 = vld [vmem:[%s0 + $0x80] sm:$0xff]
  %v41 = vld [vmem:[%s0 + $0x88] sm:$0xff]
  %v42 = vld [vmem:[%s0 + $0x90] sm:$0xff]
  %v43 = vld [vmem:[%s0 + $0x98] sm:$0xff]
  %v44 = vld [vmem:[%s0 + $0xa0] sm:$0xff]
  %v45 = vld [vmem:[%s0 + $0xa8] sm:$0xff]
  %v46 = vld [vmem:[%s0 + $0xb0] sm:$0xff]
  %v47 = vld [vmem:[%s0 + $0xb8] sm:$0xff]
  %v48 = vld [vmem:[%s0 + $0xc0] sm:$0xff]
  %v49 = vld [vmem:[%s0 + $0xc8] sm:$0xff]
  %v50 = vld [vmem:[%s0 + $0xd0] sm:$0xff]
  %v51 = vld [vmem:[%s0 + $0xd8] sm:$0xff]
  %v52 = vld [vmem:[%s0 + $0xe0] sm:$0xff]
  %v53 = vld [vmem:[%s0 + $0xe8] sm:$0xff]
  %v54 = vld [vmem:[%s0 + $0xf0] sm:$0xff]
  %v55 = vld [vmem:[%s0 + $0xf8] sm:$0xff]
  %v56 = vld [vmem:[%s0 + $0x100] sm:$0xff]
  %v57 = vld [vmem:[%s0 + $0x108] sm:$0xff]
  %v58 = vld [vmem:[%s0 + $0x110] sm:$0xff]
  %v59 = vld [vmem:[%s0 + $0x118] sm:$0xff]
  %v60 = vld [vmem:[%s0 + $0x120] sm:$0xff]
  %v61 = vld [vmem:[%s0 + $0x128] sm:$0xff]
  %v62 = vld [vmem:[%s0 + $0x130] sm:$0xff]
  %v63 = vld [vmem:[%s0 + $0x138] sm:$0xff]
  %v64 = vld [vmem:[%s0 + $0x140] sm:$0xff]
  %v65 = vld [vmem:[%s0 + $0x148] sm:$0xff]
  %v66 = vld [vmem:[%s0 + $0x150] sm:$0xff]
  %v67 = vld [vmem:[%s0 + $0x158] sm:$0xff]
  %v68 = vld [vmem:[%s0 + $0x160] sm:$0xff]
  %v69 = vld [vmem:[%s0 + $0x168] sm:$0xff]
  %v70 = vld [vmem:[%s0 + $0x170] sm:$0xff]
  %v71 = vld [vmem:[%s0 + $0x178] sm:$0xff]
  %v72 = vld [vmem:[%s0 + $0x180] sm:$0xff]
  %v73 = vld [vmem:[%s0 + $0x188] sm:$0xff]
  %v74 = vld [vmem:[%s0 + $0x190] sm:$0xff]
  %v75 = vld [vmem:[%s0 + $0x198] sm:$0xff]
  %v76 = vld [vmem:[%s0 + $0x1a0] sm:$0xff]
  %v77 = vld [vmem:[%s0 + $0x1a8] sm:$0xff]
  %v78 = vld [vmem:[%s0 + $0x1b0] sm:$0xff]
  %v79 = vld [vmem:[%s0 + $0x1b8] sm:$0xff]
  %v80 = vld [vmem:[%s0 + $0x1c0] sm:$0xff]
  %v81 = vld [vmem:[%s0 + $0x1c8] sm:$0xff]
  %v82 = vld [vmem:[%s0 + $0x1d0] sm:$0xff]
  %v83 = vld [vmem:[%s0 + $0x1d8] sm:$0xff]
  %v84 = vld [vmem:[%s0 + $0x1e0] sm:$0xff]
  %v85 = vld [vmem:[%s0 + $0x1e8] sm:$0xff]
  %v86 = vld [vmem:[%s0 + $0x1f0] sm:$0xff]
  %v87 = vld [vmem:[%s0 + $0x1f8] sm:$0xff]
  %v88 = vld [vmem:[%s0 + $0x200] sm:$0xff]
  %v89 = vld [vmem:[%s0 + $0x208] sm:$0xff]
  %v90 = vld [vmem:[%s0 + $0x210] sm:$0xff]
  %v91 = vld [vmem:[%s0 + $0x218] sm:$0xff]
  %v92 = vld [vmem:[%s0 + $0x220] sm:$0xff]
  %v93 = vld [vmem:[%s0 + $0x228] sm:$0xff]
  %v94 = vld [vmem:[%s0 + $0x230] sm:$0xff]
  %v95 = vld [vmem:[%s0 + $0x238] sm:$0xff]
  %v96 = vld [vmem:[%s0 + $0x240] sm:$0xff]
  %v97 = vld [vmem:[%s0 + $0x248] sm:$0xff]
  %v98 = vld [vmem:[%s0 + $0x250] sm:$0xff]
  %v99 = vld [vmem:[%s0 + $0x258] sm:$0xff]
  %v100 = vld [vmem:[%s0 + $0x260] sm:$0xff]
  %v101 = vld [vmem:[%s0 + $0x268] sm:$0xff]
  %v102 = vld [vmem:[%s0 + $0x270] sm:$0xff]
  %v103 = vld [vmem:[%s0 + $0x278] sm:$0xff]
  %v104 = vld [vmem:[%s0 + $0x280] sm:$0xff]
  %v105 = vpack.c.bf16 %v25, %v24
  %v106 = vpack.c.bf16 %v27, %v26
  %v107 = vpack.c.bf16 %v29, %v28
  %v108 = vpack.c.bf16 %v31, %v30
  %v109 = vpack.c.bf16 %v33, %v32
  %v110 = vpack.c.bf16 %v35, %v34
  %v111 = vpack.c.bf16 %v37, %v36
  %v112 = vpack.c.bf16 %v39, %v38
  %v113 = vpack.c.bf16 %v41, %v40
  %v114 = vpack.c.bf16 %v43, %v42
  %v115 = vpack.c.bf16 %v45, %v44
  %v116 = vpack.c.bf16 %v47, %v46
  %v117 = vpack.c.bf16 %v49, %v48
  %v118 = vpack.c.bf16 %v51, %v50
  %v119 = vpack.c.bf16 %v53, %v52
  %v120 = vpack.c.bf16 %v55, %v54
  %v121 = vpack.c.bf16 %v57, %v56
  %v122 = vpack.c.bf16 %v59, %v58
  %v123 = vpack.c.bf16 %v61, %v60
  %v124 = vpack.c.bf16 %v63, %v62
  %v125 = vpack.c.bf16 %v65, %v64
  %v126 = vpack.c.bf16 %v67, %v66
  %v127 = vpack.c.bf16 %v69, %v68
  %v128 = vpack.c.bf16 %v71, %v70
  %v129 = vpack.c.bf16 %v73, %v72
  %v130 = vpack.c.bf16 %v75, %v74
  %v131 = vpack.c.bf16 %v77, %v76
  %v132 = vpack.c.bf16 %v79, %v78
  %v133 = vpack.c.bf16 %v81, %v80
  %v134 = vpack.c.bf16 %v83, %v82
  %v135 = vpack.c.bf16 %v85, %v84
  %v136 = vpack.c.bf16 %v87, %v86
  %v137 = vpack.c.bf16 %v89, %v88
  %v138 = vpack.c.bf16 %v91, %v90
  %v139 = vpack.c.bf16 %v93, %v92
  %v140 = vpack.c.bf16 %v95, %v94
  %v141 = vpack.c.bf16 %v97, %v96
  %v142 = vpack.c.bf16 %v99, %v98
  %v143 = vpack.c.bf16 %v101, %v100
  %v144 = vpack.c.bf16 %v103, %v102
  %v145 = vpack.c.bf16 %v104, %v104
  %v146 = vld [vmem:[%s1] sm:$0x3]
  %v147 = vld [vmem:[%s0 + $0x1] sm:$0xff]
  %v148 = vld [vmem:[%s0 + $0x9] sm:$0xff]
  %v149 = vld [vmem:[%s0 + $0x11] sm:$0xff]
  %v150 = vld [vmem:[%s0 + $0x19] sm:$0xff]
  %v151 = vld [vmem:[%s0 + $0x21] sm:$0xff]
  %v152 = vld [vmem:[%s0 + $0x29] sm:$0xff]
  %v153 = vld [vmem:[%s0 + $0x31] sm:$0xff]
  %v154 = vld [vmem:[%s0 + $0x39] sm:$0xff]
  %v155 = vld [vmem:[%s0 + $0x41] sm:$0xff]
  %v156 = vld [vmem:[%s0 + $0x49] sm:$0xff]
  %v157 = vld [vmem:[%s0 + $0x51] sm:$0xff]
  %v158 = vld [vmem:[%s0 + $0x59] sm:$0xff]
  %v159 = vld [vmem:[%s0 + $0x61] sm:$0xff]
  %v160 = vld [vmem:[%s0 + $0x69] sm:$0xff]
  %v161 = vld [vmem:[%s0 + $0x71] sm:$0xff]
  %v162 = vld [vmem:[%s0 + $0x79] sm:$0xff]
  %v163 = vld [vmem:[%s0 + $0x81] sm:$0xff]
  %v164 = vld [vmem:[%s0 + $0x89] sm:$0xff]
  %v165 = vld [vmem:[%s0 + $0x91] sm:$0xff]
  %v166 = vld [vmem:[%s0 + $0x99] sm:$0xff]
  %v167 = vld [vmem:[%s0 + $0xa1] sm:$0xff]
  %v168 = vld [vmem:[%s0 + $0xa9] sm:$0xff]
  %v169 = vld [vmem:[%s0 + $0xb1] sm:$0xff]
  %v170 = vld [vmem:[%s0 + $0xb9] sm:$0xff]
  %v171 = vld [vmem:[%s0 + $0xc1] sm:$0xff]
  %v172 = vld [vmem:[%s0 + $0xc9] sm:$0xff]
  %v173 = vld [vmem:[%s0 + $0xd1] sm:$0xff]
  %v174 = vld [vmem:[%s0 + $0xd9] sm:$0xff]
  %v175 = vld [vmem:[%s0 + $0xe1] sm:$0xff]
  %v176 = vld [vmem:[%s0 + $0xe9] sm:$0xff]
  %v177 = vld [vmem:[%s0 + $0xf1] sm:$0xff]
  %v178 = vld [vmem:[%s0 + $0xf9] sm:$0xff]
  %v179 = vld [vmem:[%s0 + $0x101] sm:$0xff]
  %v180 = vld [vmem:[%s0 + $0x109] sm:$0xff]
  %v181 = vld [vmem:[%s0 + $0x111] sm:$0xff]
  %v182 = vld [vmem:[%s0 + $0x119] sm:$0xff]
  %v183 = vld [vmem:[%s0 + $0x121] sm:$0xff]
  %v184 = vld [vmem:[%s0 + $0x129] sm:$0xff]
  %v185 = vld [vmem:[%s0 + $0x131] sm:$0xff]
  %v186 = vld [vmem:[%s0 + $0x139] sm:$0xff]
  %v187 = vld [vmem:[%s0 + $0x141] sm:$0xff]
  %v188 = vld [vmem:[%s0 + $0x149] sm:$0xff]
  %v189 = vld [vmem:[%s0 + $0x151] sm:$0xff]
  %v190 = vld [vmem:[%s0 + $0x159] sm:$0xff]
  %v191 = vld [vmem:[%s0 + $0x161] sm:$0xff]
  %v192 = vld [vmem:[%s0 + $0x169] sm:$0xff]
  %v193 = vld [vmem:[%s0 + $0x171] sm:$0xff]
  %v194 = vld [vmem:[%s0 + $0x179] sm:$0xff]
  %v195 = vld [vmem:[%s0 + $0x181] sm:$0xff]
  %v196 = vld [vmem:[%s0 + $0x189] sm:$0xff]
  %v197 = vld [vmem:[%s0 + $0x191] sm:$0xff]
  %v198 = vld [vmem:[%s0 + $0x199] sm:$0xff]
  %v199 = vld [vmem:[%s0 + $0x1a1] sm:$0xff]
  %v200 = vld [vmem:[%s0 + $0x1a9] sm:$0xff]
  %v201 = vld [vmem:[%s0 + $0x1b1] sm:$0xff]
  %v202 = vld [vmem:[%s0 + $0x1b9] sm:$0xff]
  %v203 = vld [vmem:[%s0 + $0x1c1] sm:$0xff]
  %v204 = vld [vmem:[%s0 + $0x1c9] sm:$0xff]
  %v205 = vld [vmem:[%s0 + $0x1d1] sm:$0xff]
  %v206 = vld [vmem:[%s0 + $0x1d9] sm:$0xff]
  %v207 = vld [vmem:[%s0 + $0x1e1] sm:$0xff]
  %v208 = vld [vmem:[%s0 + $0x1e9] sm:$0xff]
  %v209 = vld [vmem:[%s0 + $0x1f1] sm:$0xff]
  %v210 = vld [vmem:[%s0 + $0x1f9] sm:$0xff]
  %v211 = vld [vmem:[%s0 + $0x201] sm:$0xff]
  %v212 = vld [vmem:[%s0 + $0x209] sm:$0xff]
  %v213 = vld [vmem:[%s0 + $0x211] sm:$0xff]
  %v214 = vld [vmem:[%s0 + $0x219] sm:$0xff]
  %v215 = vld [vmem:[%s0 + $0x221] sm:$0xff]
  %v216 = vld [vmem:[%s0 + $0x229] sm:$0xff]
  %v217 = vld [vmem:[%s0 + $0x231] sm:$0xff]
  %v218 = vld [vmem:[%s0 + $0x239] sm:$0xff]
  %v219 = vld [vmem:[%s0 + $0x241] sm:$0xff]
  %v220 = vld [vmem:[%s0 + $0x249] sm:$0xff]
  %v221 = vld [vmem:[%s0 + $0x251] sm:$0xff]
  %v222 = vld [vmem:[%s0 + $0x259] sm:$0xff]
  %v223 = vld [vmem:[%s0 + $0x261] sm:$0xff]
  %v224 = vld [vmem:[%s0 + $0x269] sm:$0xff]
  %v225 = vld [vmem:[%s0 + $0x271] sm:$0xff]
  %v226 = vld [vmem:[%s0 + $0x279] sm:$0xff]
  %v227 = vld [vmem:[%s0 + $0x281] sm:$0xff]
  %v228 = vpack.c.bf16 %v148, %v147
  %v229 = vpack.c.bf16 %v150, %v149
  %v230 = vpack.c.bf16 %v152, %v151
  %v231 = vpack.c.bf16 %v154, %v153
  %v232 = vpack.c.bf16 %v156, %v155
  %v233 = vpack.c.bf16 %v158, %v157
  %v234 = vpack.c.bf16 %v160, %v159
  %v235 = vpack.c.bf16 %v162, %v161
  %v236 = vpack.c.bf16 %v164, %v163
  %v237 = vpack.c.bf16 %v166, %v165
  %v238 = vpack.c.bf16 %v168, %v167
  %v239 = vpack.c.bf16 %v170, %v169
  %v240 = vpack.c.bf16 %v172, %v171
  %v241 = vpack.c.bf16 %v174, %v173
  %v242 = vpack.c.bf16 %v176, %v175
  %v243 = vpack.c.bf16 %v178, %v177
  %v244 = vpack.c.bf16 %v180, %v179
  %v245 = vpack.c.bf16 %v182, %v181
  %v246 = vpack.c.bf16 %v184, %v183
  %v247 = vpack.c.bf16 %v186, %v185
  %v248 = vpack.c.bf16 %v188, %v187
  %v249 = vpack.c.bf16 %v190, %v189
  %v250 = vpack.c.bf16 %v192, %v191
  %v251 = vpack.c.bf16 %v194, %v193
  %v252 = vpack.c.bf16 %v196, %v195
  %v253 = vpack.c.bf16 %v198, %v197
  %v254 = vpack.c.bf16 %v200, %v199
  %v255 = vpack.c.bf16 %v202, %v201
  %v256 = vpack.c.bf16 %v204, %v203
  %v257 = vpack.c.bf16 %v206, %v205
  %v258 = vpack.c.bf16 %v208, %v207
  %v259 = vpack.c.bf16 %v210, %v209
  %v260 = vpack.c.bf16 %v212, %v211
  %v261 = vpack.c.bf16 %v214, %v213
  %v262 = vpack.c.bf16 %v216, %v215
  %v263 = vpack.c.bf16 %v218, %v217
  %v264 = vpack.c.bf16 %v220, %v219
  %v265 = vpack.c.bf16 %v222, %v221
  %v266 = vpack.c.bf16 %v224, %v223
  %v267 = vpack.c.bf16 %v226, %v225
  %v268 = vpack.c.bf16 %v227, %v227
  %s269 = scalar_lea.vmem %s1, 2
  %v270 = vld [vmem:[%s269] sm:$0x3]
  %vm271 = vcmask 31744
  %v273 = vsel %vm271, %v228, 0
  %v276 = vsel %vm271, %v229, 0
  %v279 = vsel %vm271, %v230, 0
  %v282 = vsel %vm271, %v231, 0
  %v285 = vsel %vm271, %v232, 0
  %v288 = vsel %vm271, %v233, 0
  %v291 = vsel %vm271, %v234, 0
  %v294 = vsel %vm271, %v235, 0
  %v297 = vsel %vm271, %v236, 0
  %v300 = vsel %vm271, %v237, 0
  %v303 = vsel %vm271, %v238, 0
  %v306 = vsel %vm271, %v239, 0
  %v309 = vsel %vm271, %v240, 0
  %v312 = vsel %vm271, %v241, 0
  %v315 = vsel %vm271, %v242, 0
  %v318 = vsel %vm271, %v243, 0
  %v321 = vsel %vm271, %v244, 0
  %v324 = vsel %vm271, %v245, 0
  %v327 = vsel %vm271, %v246, 0
  %v330 = vsel %vm271, %v247, 0
  %v333 = vsel %vm271, %v248, 0
  %v336 = vsel %vm271, %v249, 0
  %v339 = vsel %vm271, %v250, 0
  %v342 = vsel %vm271, %v251, 0
  %v345 = vsel %vm271, %v252, 0
  %v348 = vsel %vm271, %v253, 0
  %v351 = vsel %vm271, %v254, 0
  %v354 = vsel %vm271, %v255, 0
  %v357 = vsel %vm271, %v256, 0
  %v360 = vsel %vm271, %v257, 0
  %v363 = vsel %vm271, %v258, 0
  %v366 = vsel %vm271, %v259, 0
  %v369 = vsel %vm271, %v260, 0
  %v372 = vsel %vm271, %v261, 0
  %v375 = vsel %vm271, %v262, 0
  %v378 = vsel %vm271, %v263, 0
  %v381 = vsel %vm271, %v264, 0
  %v384 = vsel %vm271, %v265, 0
  %v387 = vsel %vm271, %v266, 0
  %v390 = vsel %vm271, %v267, 0
  %v393 = vsel %vm271, %v268, 0
  %vm395 = vcmask 1041408
  %v397 = vsel %vm395, %v270, 0
  %399 = vmatprep.subr.bf16.mxu0 0
  %400 = vmatpush1.bf16.msra.mxu0 0
  %401 = vmatprep.subr.bf16.mxu0 0
  %402 = vmatpush1.bf16.msra.mxu0 0
  %403 = vmatprep.subr.bf16.mxu0 0
  %404 = vmatpush1.bf16.msra.mxu0 0
  %405 = vmatprep.subr.bf16.mxu0 0
  %406 = vmatpush1.bf16.msra.mxu0 0
  %407 = vmatprep.subr.bf16.mxu0 0
  %408 = vmatpush1.bf16.msra.mxu0 0
  %409 = vmatprep.subr.bf16.mxu0 0
  %410 = vmatpush1.bf16.msra.mxu0 0
  %411 = vmatprep.subr.bf16.mxu0 0
  %412 = vmatpush1.bf16.msra.mxu0 0
  %413 = vmatprep.subr.bf16.mxu0 0
  %414 = vmatpush1.bf16.msra.mxu0 %v397
  %415 = vmatprep.subr.bf16.mxu0 0
  %416 = vmatpush2.bf16.msra.mxu0 0
  %417 = vmatprep.subr.bf16.mxu0 0
  %418 = vmatpush2.bf16.msra.mxu0 0
  %419 = vmatprep.subr.bf16.mxu0 0
  %420 = vmatpush2.bf16.msra.mxu0 0
  %421 = vmatprep.subr.bf16.mxu0 0
  %422 = vmatpush2.bf16.msra.mxu0 0
  %423 = vmatprep.subr.bf16.mxu0 0
  %424 = vmatpush2.bf16.msra.mxu0 0
  %425 = vmatprep.subr.bf16.mxu0 0
  %426 = vmatpush2.bf16.msra.mxu0 0
  %427 = vmatprep.subr.bf16.mxu0 0
  %428 = vmatpush2.bf16.msra.mxu0 0
  %429 = vmatprep.subr.bf16.mxu0 0
  %430 = vmatpush2.bf16.msra.mxu0 0
  %431 = vmatprep.mubr.bf16.mxu0 0
  %432 = vmatmul.mubr.bf16.gmra.mxu0 %v273
  %v433 = vpop.f32.mrf.mxu0
  %v434 = vadd.f32 0.0, %v433
  %v435 = vpop.f32.mrf.mxu0
  %v436 = vpop.f32.mrf.mxu0
  %v437 = vadd.f32 0.0, %v436
  %v438 = vpop.f32.mrf.mxu0
  %439 = vmatprep.mubr.bf16.mxu0 0
  %440 = vmatmul.mubr.bf16.gmra.mxu0 %v276
  %v441 = vpop.f32.mrf.mxu0
  %v442 = vadd.f32 0.0, %v441
  %v443 = vpop.f32.mrf.mxu0
  %v444 = vpop.f32.mrf.mxu0
  %v445 = vadd.f32 0.0, %v444
  %v446 = vpop.f32.mrf.mxu0
  %447 = vmatprep.mubr.bf16.mxu0 0
  %448 = vmatmul.mubr.bf16.gmra.mxu0 %v279
  %v449 = vpop.f32.mrf.mxu0
  %v450 = vadd.f32 0.0, %v449
  %v451 = vpop.f32.mrf.mxu0
  %v452 = vpop.f32.mrf.mxu0
  %v453 = vadd.f32 0.0, %v452
  %v454 = vpop.f32.mrf.mxu0
  %455 = vmatprep.mubr.bf16.mxu0 0
  %456 = vmatmul.mubr.bf16.gmra.mxu0 %v282
  %v457 = vpop.f32.mrf.mxu0
  %v458 = vadd.f32 0.0, %v457
  %v459 = vpop.f32.mrf.mxu0
  %v460 = vpop.f32.mrf.mxu0
  %v461 = vadd.f32 0.0, %v460
  %v462 = vpop.f32.mrf.mxu0
  %463 = vmatprep.mubr.bf16.mxu0 0
  %464 = vmatmul.mubr.bf16.gmra.mxu0 %v285
  %v465 = vpop.f32.mrf.mxu0
  %v466 = vadd.f32 0.0, %v465
  %v467 = vpop.f32.mrf.mxu0
  %v468 = vpop.f32.mrf.mxu0
  %v469 = vadd.f32 0.0, %v468
  %v470 = vpop.f32.mrf.mxu0
  %471 = vmatprep.mubr.bf16.mxu0 0
  %472 = vmatmul.mubr.bf16.gmra.mxu0 %v288
  %v473 = vpop.f32.mrf.mxu0
  %v474 = vadd.f32 0.0, %v473
  %v475 = vpop.f32.mrf.mxu0
  %v476 = vpop.f32.mrf.mxu0
  %v477 = vadd.f32 0.0, %v476
  %v478 = vpop.f32.mrf.mxu0
  %479 = vmatprep.mubr.bf16.mxu0 0
  %480 = vmatmul.mubr.bf16.gmra.mxu0 %v291
  %v481 = vpop.f32.mrf.mxu0
  %v482 = vadd.f32 0.0, %v481
  %v483 = vpop.f32.mrf.mxu0
  %v484 = vpop.f32.mrf.mxu0
  %v485 = vadd.f32 0.0, %v484
  %v486 = vpop.f32.mrf.mxu0
  %487 = vmatprep.mubr.bf16.mxu0 0
  %488 = vmatmul.mubr.bf16.gmra.mxu0 %v294
  %v489 = vpop.f32.mrf.mxu0
  %v490 = vadd.f32 0.0, %v489
  %v491 = vpop.f32.mrf.mxu0
  %v492 = vpop.f32.mrf.mxu0
  %v493 = vadd.f32 0.0, %v492
  %v494 = vpop.f32.mrf.mxu0
  %495 = vmatprep.mubr.bf16.mxu0 0
  %496 = vmatmul.mubr.bf16.gmra.mxu0 %v297
  %v497 = vpop.f32.mrf.mxu0
  %v498 = vadd.f32 0.0, %v497
  %v499 = vpop.f32.mrf.mxu0
  %v500 = vpop.f32.mrf.mxu0
  %v501 = vadd.f32 0.0, %v500
  %v502 = vpop.f32.mrf.mxu0
  %503 = vmatprep.mubr.bf16.mxu0 0
  %504 = vmatmul.mubr.bf16.gmra.mxu0 %v300
  %v505 = vpop.f32.mrf.mxu0
  %v506 = vadd.f32 0.0, %v505
  %v507 = vpop.f32.mrf.mxu0
  %v508 = vpop.f32.mrf.mxu0
  %v509 = vadd.f32 0.0, %v508
  %v510 = vpop.f32.mrf.mxu0
  %511 = vmatprep.mubr.bf16.mxu0 0
  %512 = vmatmul.mubr.bf16.gmra.mxu0 %v303
  %v513 = vpop.f32.mrf.mxu0
  %v514 = vadd.f32 0.0, %v513
  %v515 = vpop.f32.mrf.mxu0
  %v516 = vpop.f32.mrf.mxu0
  %v517 = vadd.f32 0.0, %v516
  %v518 = vpop.f32.mrf.mxu0
  %519 = vmatprep.mubr.bf16.mxu0 0
  %520 = vmatmul.mubr.bf16.gmra.mxu0 %v306
  %v521 = vpop.f32.mrf.mxu0
  %v522 = vadd.f32 0.0, %v521
  %v523 = vpop.f32.mrf.mxu0
  %v524 = vpop.f32.mrf.mxu0
  %v525 = vadd.f32 0.0, %v524
  %v526 = vpop.f32.mrf.mxu0
  %527 = vmatprep.mubr.bf16.mxu0 0
  %528 = vmatmul.mubr.bf16.gmra.mxu0 %v309
  %v529 = vpop.f32.mrf.mxu0
  %v530 = vadd.f32 0.0, %v529
  %v531 = vpop.f32.mrf.mxu0
  %v532 = vpop.f32.mrf.mxu0
  %v533 = vadd.f32 0.0, %v532
  %v534 = vpop.f32.mrf.mxu0
  %535 = vmatprep.mubr.bf16.mxu0 0
  %536 = vmatmul.mubr.bf16.gmra.mxu0 %v312
  %v537 = vpop.f32.mrf.mxu0
  %v538 = vadd.f32 0.0, %v537
  %v539 = vpop.f32.mrf.mxu0
  %v540 = vpop.f32.mrf.mxu0
  %v541 = vadd.f32 0.0, %v540
  %v542 = vpop.f32.mrf.mxu0
  %543 = vmatprep.mubr.bf16.mxu0 0
  %544 = vmatmul.mubr.bf16.gmra.mxu0 %v315
  %v545 = vpop.f32.mrf.mxu0
  %v546 = vadd.f32 0.0, %v545
  %v547 = vpop.f32.mrf.mxu0
  %v548 = vpop.f32.mrf.mxu0
  %v549 = vadd.f32 0.0, %v548
  %v550 = vpop.f32.mrf.mxu0
  %551 = vmatprep.mubr.bf16.mxu0 0
  %552 = vmatmul.mubr.bf16.gmra.mxu0 %v318
  %v553 = vpop.f32.mrf.mxu0
  %v554 = vadd.f32 0.0, %v553
  %v555 = vpop.f32.mrf.mxu0
  %v556 = vpop.f32.mrf.mxu0
  %v557 = vadd.f32 0.0, %v556
  %v558 = vpop.f32.mrf.mxu0
  %559 = vmatprep.mubr.bf16.mxu0 0
  %560 = vmatmul.mubr.bf16.gmra.mxu0 %v321
  %v561 = vpop.f32.mrf.mxu0
  %v562 = vadd.f32 0.0, %v561
  %v563 = vpop.f32.mrf.mxu0
  %v564 = vpop.f32.mrf.mxu0
  %v565 = vadd.f32 0.0, %v564
  %v566 = vpop.f32.mrf.mxu0
  %567 = vmatprep.mubr.bf16.mxu0 0
  %568 = vmatmul.mubr.bf16.gmra.mxu0 %v324
  %v569 = vpop.f32.mrf.mxu0
  %v570 = vadd.f32 0.0, %v569
  %v571 = vpop.f32.mrf.mxu0
  %v572 = vpop.f32.mrf.mxu0
  %v573 = vadd.f32 0.0, %v572
  %v574 = vpop.f32.mrf.mxu0
  %575 = vmatprep.mubr.bf16.mxu0 0
  %576 = vmatmul.mubr.bf16.gmra.mxu0 %v327
  %v577 = vpop.f32.mrf.mxu0
  %v578 = vadd.f32 0.0, %v577
  %v579 = vpop.f32.mrf.mxu0
  %v580 = vpop.f32.mrf.mxu0
  %v581 = vadd.f32 0.0, %v580
  %v582 = vpop.f32.mrf.mxu0
  %583 = vmatprep.mubr.bf16.mxu0 0
  %584 = vmatmul.mubr.bf16.gmra.mxu0 %v330
  %v585 = vpop.f32.mrf.mxu0
  %v586 = vadd.f32 0.0, %v585
  %v587 = vpop.f32.mrf.mxu0
  %v588 = vpop.f32.mrf.mxu0
  %v589 = vadd.f32 0.0, %v588
  %v590 = vpop.f32.mrf.mxu0
  %591 = vmatprep.mubr.bf16.mxu0 0
  %592 = vmatmul.mubr.bf16.gmra.mxu0 %v333
  %v593 = vpop.f32.mrf.mxu0
  %v594 = vadd.f32 0.0, %v593
  %v595 = vpop.f32.mrf.mxu0
  %v596 = vpop.f32.mrf.mxu0
  %v597 = vadd.f32 0.0, %v596
  %v598 = vpop.f32.mrf.mxu0
  %599 = vmatprep.mubr.bf16.mxu0 0
  %600 = vmatmul.mubr.bf16.gmra.mxu0 %v336
  %v601 = vpop.f32.mrf.mxu0
  %v602 = vadd.f32 0.0, %v601
  %v603 = vpop.f32.mrf.mxu0
  %v604 = vpop.f32.mrf.mxu0
  %v605 = vadd.f32 0.0, %v604
  %v606 = vpop.f32.mrf.mxu0
  %607 = vmatprep.mubr.bf16.mxu0 0
  %608 = vmatmul.mubr.bf16.gmra.mxu0 %v339
  %v609 = vpop.f32.mrf.mxu0
  %v610 = vadd.f32 0.0, %v609
  %v611 = vpop.f32.mrf.mxu0
  %v612 = vpop.f32.mrf.mxu0
  %v613 = vadd.f32 0.0, %v612
  %v614 = vpop.f32.mrf.mxu0
  %615 = vmatprep.mubr.bf16.mxu0 0
  %616 = vmatmul.mubr.bf16.gmra.mxu0 %v342
  %v617 = vpop.f32.mrf.mxu0
  %v618 = vadd.f32 0.0, %v617
  %v619 = vpop.f32.mrf.mxu0
  %v620 = vpop.f32.mrf.mxu0
  %v621 = vadd.f32 0.0, %v620
  %v622 = vpop.f32.mrf.mxu0
  %623 = vmatprep.mubr.bf16.mxu0 0
  %624 = vmatmul.mubr.bf16.gmra.mxu0 %v345
  %v625 = vpop.f32.mrf.mxu0
  %v626 = vadd.f32 0.0, %v625
  %v627 = vpop.f32.mrf.mxu0
  %v628 = vpop.f32.mrf.mxu0
  %v629 = vadd.f32 0.0, %v628
  %v630 = vpop.f32.mrf.mxu0
  %631 = vmatprep.mubr.bf16.mxu0 0
  %632 = vmatmul.mubr.bf16.gmra.mxu0 %v348
  %v633 = vpop.f32.mrf.mxu0
  %v634 = vadd.f32 0.0, %v633
  %v635 = vpop.f32.mrf.mxu0
  %v636 = vpop.f32.mrf.mxu0
  %v637 = vadd.f32 0.0, %v636
  %v638 = vpop.f32.mrf.mxu0
  %639 = vmatprep.mubr.bf16.mxu0 0
  %640 = vmatmul.mubr.bf16.gmra.mxu0 %v351
  %v641 = vpop.f32.mrf.mxu0
  %v642 = vadd.f32 0.0, %v641
  %v643 = vpop.f32.mrf.mxu0
  %v644 = vpop.f32.mrf.mxu0
  %v645 = vadd.f32 0.0, %v644
  %v646 = vpop.f32.mrf.mxu0
  %647 = vmatprep.mubr.bf16.mxu0 0
  %648 = vmatmul.mubr.bf16.gmra.mxu0 %v354
  %v649 = vpop.f32.mrf.mxu0
  %v650 = vadd.f32 0.0, %v649
  %v651 = vpop.f32.mrf.mxu0
  %v652 = vpop.f32.mrf.mxu0
  %v653 = vadd.f32 0.0, %v652
  %v654 = vpop.f32.mrf.mxu0
  %655 = vmatprep.mubr.bf16.mxu0 0
  %656 = vmatmul.mubr.bf16.gmra.mxu0 %v357
  %v657 = vpop.f32.mrf.mxu0
  %v658 = vadd.f32 0.0, %v657
  %v659 = vpop.f32.mrf.mxu0
  %v660 = vpop.f32.mrf.mxu0
  %v661 = vadd.f32 0.0, %v660
  %v662 = vpop.f32.mrf.mxu0
  %663 = vmatprep.mubr.bf16.mxu0 0
  %664 = vmatmul.mubr.bf16.gmra.mxu0 %v360
  %v665 = vpop.f32.mrf.mxu0
  %v666 = vadd.f32 0.0, %v665
  %v667 = vpop.f32.mrf.mxu0
  %v668 = vpop.f32.mrf.mxu0
  %v669 = vadd.f32 0.0, %v668
  %v670 = vpop.f32.mrf.mxu0
  %671 = vmatprep.mubr.bf16.mxu0 0
  %672 = vmatmul.mubr.bf16.gmra.mxu0 %v363
  %v673 = vpop.f32.mrf.mxu0
  %v674 = vadd.f32 0.0, %v673
  %v675 = vpop.f32.mrf.mxu0
  %v676 = vpop.f32.mrf.mxu0
  %v677 = vadd.f32 0.0, %v676
  %v678 = vpop.f32.mrf.mxu0
  %679 = vmatprep.mubr.bf16.mxu0 0
  %680 = vmatmul.mubr.bf16.gmra.mxu0 %v366
  %v681 = vpop.f32.mrf.mxu0
  %v682 = vadd.f32 0.0, %v681
  %v683 = vpop.f32.mrf.mxu0
  %v684 = vpop.f32.mrf.mxu0
  %v685 = vadd.f32 0.0, %v684
  %v686 = vpop.f32.mrf.mxu0
  %687 = vmatprep.mubr.bf16.mxu0 0
  %688 = vmatmul.mubr.bf16.gmra.mxu0 %v369
  %v689 = vpop.f32.mrf.mxu0
  %v690 = vadd.f32 0.0, %v689
  %v691 = vpop.f32.mrf.mxu0
  %v692 = vpop.f32.mrf.mxu0
  %v693 = vadd.f32 0.0, %v692
  %v694 = vpop.f32.mrf.mxu0
  %695 = vmatprep.mubr.bf16.mxu0 0
  %696 = vmatmul.mubr.bf16.gmra.mxu0 %v372
  %v697 = vpop.f32.mrf.mxu0
  %v698 = vadd.f32 0.0, %v697
  %v699 = vpop.f32.mrf.mxu0
  %v700 = vpop.f32.mrf.mxu0
  %v701 = vadd.f32 0.0, %v700
  %v702 = vpop.f32.mrf.mxu0
  %703 = vmatprep.mubr.bf16.mxu0 0
  %704 = vmatmul.mubr.bf16.gmra.mxu0 %v375
  %v705 = vpop.f32.mrf.mxu0
  %v706 = vadd.f32 0.0, %v705
  %v707 = vpop.f32.mrf.mxu0
  %v708 = vpop.f32.mrf.mxu0
  %v709 = vadd.f32 0.0, %v708
  %v710 = vpop.f32.mrf.mxu0
  %711 = vmatprep.mubr.bf16.mxu0 0
  %712 = vmatmul.mubr.bf16.gmra.mxu0 %v378
  %v713 = vpop.f32.mrf.mxu0
  %v714 = vadd.f32 0.0, %v713
  %v715 = vpop.f32.mrf.mxu0
  %v716 = vpop.f32.mrf.mxu0
  %v717 = vadd.f32 0.0, %v716
  %v718 = vpop.f32.mrf.mxu0
  %719 = vmatprep.mubr.bf16.mxu0 0
  %720 = vmatmul.mubr.bf16.gmra.mxu0 %v381
  %v721 = vpop.f32.mrf.mxu0
  %v722 = vadd.f32 0.0, %v721
  %v723 = vpop.f32.mrf.mxu0
  %v724 = vpop.f32.mrf.mxu0
  %v725 = vadd.f32 0.0, %v724
  %v726 = vpop.f32.mrf.mxu0
  %727 = vmatprep.mubr.bf16.mxu0 0
  %728 = vmatmul.mubr.bf16.gmra.mxu0 %v384
  %v729 = vpop.f32.mrf.mxu0
  %v730 = vadd.f32 0.0, %v729
  %v731 = vpop.f32.mrf.mxu0
  %v732 = vpop.f32.mrf.mxu0
  %v733 = vadd.f32 0.0, %v732
  %v734 = vpop.f32.mrf.mxu0
  %735 = vmatprep.mubr.bf16.mxu0 0
  %736 = vmatmul.mubr.bf16.gmra.mxu0 %v387
  %v737 = vpop.f32.mrf.mxu0
  %v738 = vadd.f32 0.0, %v737
  %v739 = vpop.f32.mrf.mxu0
  %v740 = vpop.f32.mrf.mxu0
  %v741 = vadd.f32 0.0, %v740
  %v742 = vpop.f32.mrf.mxu0
  %743 = vmatprep.mubr.bf16.mxu0 0
  %744 = vmatmul.mubr.bf16.gmra.mxu0 %v390
  %v745 = vpop.f32.mrf.mxu0
  %v746 = vadd.f32 0.0, %v745
  %v747 = vpop.f32.mrf.mxu0
  %v748 = vpop.f32.mrf.mxu0
  %v749 = vadd.f32 0.0, %v748
  %v750 = vpop.f32.mrf.mxu0
  %751 = vmatprep.mubr.bf16.mxu0 0
  %752 = vmatmul.mubr.bf16.gmra.mxu0 %v393
  %v753 = vpop.f32.mrf.mxu0
  %v754 = vadd.f32 0.0, %v753
  %v755 = vpop.f32.mrf.mxu0
  %v756 = vpop.f32.mrf.mxu0
  %v757 = vpop.f32.mrf.mxu0
  %758 = vdwg.mxu0
  %v760 = vsel %vm271, %v105, 0
  %v763 = vsel %vm271, %v106, 0
  %v766 = vsel %vm271, %v107, 0
  %v769 = vsel %vm271, %v108, 0
  %v772 = vsel %vm271, %v109, 0
  %v775 = vsel %vm271, %v110, 0
  %v778 = vsel %vm271, %v111, 0
  %v781 = vsel %vm271, %v112, 0
  %v784 = vsel %vm271, %v113, 0
  %v787 = vsel %vm271, %v114, 0
  %v790 = vsel %vm271, %v115, 0
  %v793 = vsel %vm271, %v116, 0
  %v796 = vsel %vm271, %v117, 0
  %v799 = vsel %vm271, %v118, 0
  %v802 = vsel %vm271, %v119, 0
  %v805 = vsel %vm271, %v120, 0
  %v808 = vsel %vm271, %v121, 0
  %v811 = vsel %vm271, %v122, 0
  %v814 = vsel %vm271, %v123, 0
  %v817 = vsel %vm271, %v124, 0
  %v820 = vsel %vm271, %v125, 0
  %v823 = vsel %vm271, %v126, 0
  %v826 = vsel %vm271, %v127, 0
  %v829 = vsel %vm271, %v128, 0
  %v832 = vsel %vm271, %v129, 0
  %v835 = vsel %vm271, %v130, 0
  %v838 = vsel %vm271, %v131, 0
  %v841 = vsel %vm271, %v132, 0
  %v844 = vsel %vm271, %v133, 0
  %v847 = vsel %vm271, %v134, 0
  %v850 = vsel %vm271, %v135, 0
  %v853 = vsel %vm271, %v136, 0
  %v856 = vsel %vm271, %v137, 0
  %v859 = vsel %vm271, %v138, 0
  %v862 = vsel %vm271, %v139, 0
  %v865 = vsel %vm271, %v140, 0
  %v868 = vsel %vm271, %v141, 0
  %v871 = vsel %vm271, %v142, 0
  %v874 = vsel %vm271, %v143, 0
  %v877 = vsel %vm271, %v144, 0
  %v880 = vsel %vm271, %v145, 0
  %v883 = vsel %vm395, %v146, 0
  %885 = vmatprep.subr.bf16.mxu0 0
  %886 = vmatpush1.bf16.msra.mxu0 0
  %887 = vmatprep.subr.bf16.mxu0 0
  %888 = vmatpush1.bf16.msra.mxu0 0
  %889 = vmatprep.subr.bf16.mxu0 0
  %890 = vmatpush1.bf16.msra.mxu0 0
  %891 = vmatprep.subr.bf16.mxu0 0
  %892 = vmatpush1.bf16.msra.mxu0 0
  %893 = vmatprep.subr.bf16.mxu0 0
  %894 = vmatpush1.bf16.msra.mxu0 0
  %895 = vmatprep.subr.bf16.mxu0 0
  %896 = vmatpush1.bf16.msra.mxu0 0
  %897 = vmatprep.subr.bf16.mxu0 0
  %898 = vmatpush1.bf16.msra.mxu0 0
  %899 = vmatprep.subr.bf16.mxu0 0
  %900 = vmatpush1.bf16.msra.mxu0 %v883
  %901 = vmatprep.subr.bf16.mxu0 0
  %902 = vmatpush2.bf16.msra.mxu0 0
  %903 = vmatprep.subr.bf16.mxu0 0
  %904 = vmatpush2.bf16.msra.mxu0 0
  %905 = vmatprep.subr.bf16.mxu0 0
  %906 = vmatpush2.bf16.msra.mxu0 0
  %907 = vmatprep.subr.bf16.mxu0 0
  %908 = vmatpush2.bf16.msra.mxu0 0
  %909 = vmatprep.subr.bf16.mxu0 0
  %910 = vmatpush2.bf16.msra.mxu0 0
  %911 = vmatprep.subr.bf16.mxu0 0
  %912 = vmatpush2.bf16.msra.mxu0 0
  %913 = vmatprep.subr.bf16.mxu0 0
  %914 = vmatpush2.bf16.msra.mxu0 0
  %915 = vmatprep.subr.bf16.mxu0 0
  %916 = vmatpush2.bf16.msra.mxu0 0
  %917 = vmatprep.mubr.bf16.mxu0 0
  %918 = vmatmul.mubr.bf16.gmra.mxu0 %v760
  %v919 = vpop.f32.mrf.mxu0
  %v920 = vadd.f32 %v434, %v919
  %v921 = vpop.f32.mrf.mxu0
  %v922 = vpop.f32.mrf.mxu0
  %v923 = vadd.f32 %v437, %v922
  %v924 = vpop.f32.mrf.mxu0
  %925 = vmatprep.mubr.bf16.mxu0 0
  %926 = vmatmul.mubr.bf16.gmra.mxu0 %v763
  %v927 = vpop.f32.mrf.mxu0
  %v928 = vadd.f32 %v442, %v927
  %v929 = vpop.f32.mrf.mxu0
  %v930 = vpop.f32.mrf.mxu0
  %v931 = vadd.f32 %v445, %v930
  %v932 = vpop.f32.mrf.mxu0
  %933 = vmatprep.mubr.bf16.mxu0 0
  %934 = vmatmul.mubr.bf16.gmra.mxu0 %v766
  %v935 = vpop.f32.mrf.mxu0
  %v936 = vadd.f32 %v450, %v935
  %v937 = vpop.f32.mrf.mxu0
  %v938 = vpop.f32.mrf.mxu0
  %v939 = vadd.f32 %v453, %v938
  %v940 = vpop.f32.mrf.mxu0
  %941 = vmatprep.mubr.bf16.mxu0 0
  %942 = vmatmul.mubr.bf16.gmra.mxu0 %v769
  %v943 = vpop.f32.mrf.mxu0
  %v944 = vadd.f32 %v458, %v943
  %v945 = vpop.f32.mrf.mxu0
  %v946 = vpop.f32.mrf.mxu0
  %v947 = vadd.f32 %v461, %v946
  %v948 = vpop.f32.mrf.mxu0
  %949 = vmatprep.mubr.bf16.mxu0 0
  %950 = vmatmul.mubr.bf16.gmra.mxu0 %v772
  %v951 = vpop.f32.mrf.mxu0
  %v952 = vadd.f32 %v466, %v951
  %v953 = vpop.f32.mrf.mxu0
  %v954 = vpop.f32.mrf.mxu0
  %v955 = vadd.f32 %v469, %v954
  %v956 = vpop.f32.mrf.mxu0
  %957 = vmatprep.mubr.bf16.mxu0 0
  %958 = vmatmul.mubr.bf16.gmra.mxu0 %v775
  %v959 = vpop.f32.mrf.mxu0
  %v960 = vadd.f32 %v474, %v959
  %v961 = vpop.f32.mrf.mxu0
  %v962 = vpop.f32.mrf.mxu0
  %v963 = vadd.f32 %v477, %v962
  %v964 = vpop.f32.mrf.mxu0
  %965 = vmatprep.mubr.bf16.mxu0 0
  %966 = vmatmul.mubr.bf16.gmra.mxu0 %v778
  %v967 = vpop.f32.mrf.mxu0
  %v968 = vadd.f32 %v482, %v967
  %v969 = vpop.f32.mrf.mxu0
  %v970 = vpop.f32.mrf.mxu0
  %v971 = vadd.f32 %v485, %v970
  %v972 = vpop.f32.mrf.mxu0
  %973 = vmatprep.mubr.bf16.mxu0 0
  %974 = vmatmul.mubr.bf16.gmra.mxu0 %v781
  %v975 = vpop.f32.mrf.mxu0
  %v976 = vadd.f32 %v490, %v975
  %v977 = vpop.f32.mrf.mxu0
  %v978 = vpop.f32.mrf.mxu0
  %v979 = vadd.f32 %v493, %v978
  %v980 = vpop.f32.mrf.mxu0
  %981 = vmatprep.mubr.bf16.mxu0 0
  %982 = vmatmul.mubr.bf16.gmra.mxu0 %v784
  %v983 = vpop.f32.mrf.mxu0
  %v984 = vadd.f32 %v498, %v983
  %v985 = vpop.f32.mrf.mxu0
  %v986 = vpop.f32.mrf.mxu0
  %v987 = vadd.f32 %v501, %v986
  %v988 = vpop.f32.mrf.mxu0
  %989 = vmatprep.mubr.bf16.mxu0 0
  %990 = vmatmul.mubr.bf16.gmra.mxu0 %v787
  %v991 = vpop.f32.mrf.mxu0
  %v992 = vadd.f32 %v506, %v991
  %v993 = vpop.f32.mrf.mxu0
  %v994 = vpop.f32.mrf.mxu0
  %v995 = vadd.f32 %v509, %v994
  %v996 = vpop.f32.mrf.mxu0
  %997 = vmatprep.mubr.bf16.mxu0 0
  %998 = vmatmul.mubr.bf16.gmra.mxu0 %v790
  %v999 = vpop.f32.mrf.mxu0
  %v1000 = vadd.f32 %v514, %v999
  %v1001 = vpop.f32.mrf.mxu0
  %v1002 = vpop.f32.mrf.mxu0
  %v1003 = vadd.f32 %v517, %v1002
  %v1004 = vpop.f32.mrf.mxu0
  %1005 = vmatprep.mubr.bf16.mxu0 0
  %1006 = vmatmul.mubr.bf16.gmra.mxu0 %v793
  %v1007 = vpop.f32.mrf.mxu0
  %v1008 = vadd.f32 %v522, %v1007
  %v1009 = vpop.f32.mrf.mxu0
  %v1010 = vpop.f32.mrf.mxu0
  %v1011 = vadd.f32 %v525, %v1010
  %v1012 = vpop.f32.mrf.mxu0
  %1013 = vmatprep.mubr.bf16.mxu0 0
  %1014 = vmatmul.mubr.bf16.gmra.mxu0 %v796
  %v1015 = vpop.f32.mrf.mxu0
  %v1016 = vadd.f32 %v530, %v1015
  %v1017 = vpop.f32.mrf.mxu0
  %v1018 = vpop.f32.mrf.mxu0
  %v1019 = vadd.f32 %v533, %v1018
  %v1020 = vpop.f32.mrf.mxu0
  %1021 = vmatprep.mubr.bf16.mxu0 0
  %1022 = vmatmul.mubr.bf16.gmra.mxu0 %v799
  %v1023 = vpop.f32.mrf.mxu0
  %v1024 = vadd.f32 %v538, %v1023
  %v1025 = vpop.f32.mrf.mxu0
  %v1026 = vpop.f32.mrf.mxu0
  %v1027 = vadd.f32 %v541, %v1026
  %v1028 = vpop.f32.mrf.mxu0
  %1029 = vmatprep.mubr.bf16.mxu0 0
  %1030 = vmatmul.mubr.bf16.gmra.mxu0 %v802
  %v1031 = vpop.f32.mrf.mxu0
  %v1032 = vadd.f32 %v546, %v1031
  %v1033 = vpop.f32.mrf.mxu0
  %v1034 = vpop.f32.mrf.mxu0
  %v1035 = vadd.f32 %v549, %v1034
  %v1036 = vpop.f32.mrf.mxu0
  %1037 = vmatprep.mubr.bf16.mxu0 0
  %1038 = vmatmul.mubr.bf16.gmra.mxu0 %v805
  %v1039 = vpop.f32.mrf.mxu0
  %v1040 = vadd.f32 %v554, %v1039
  %v1041 = vpop.f32.mrf.mxu0
  %v1042 = vpop.f32.mrf.mxu0
  %v1043 = vadd.f32 %v557, %v1042
  %v1044 = vpop.f32.mrf.mxu0
  %1045 = vmatprep.mubr.bf16.mxu0 0
  %1046 = vmatmul.mubr.bf16.gmra.mxu0 %v808
  %v1047 = vpop.f32.mrf.mxu0
  %v1048 = vadd.f32 %v562, %v1047
  %v1049 = vpop.f32.mrf.mxu0
  %v1050 = vpop.f32.mrf.mxu0
  %v1051 = vadd.f32 %v565, %v1050
  %v1052 = vpop.f32.mrf.mxu0
  %1053 = vmatprep.mubr.bf16.mxu0 0
  %1054 = vmatmul.mubr.bf16.gmra.mxu0 %v811
  %v1055 = vpop.f32.mrf.mxu0
  %v1056 = vadd.f32 %v570, %v1055
  %v1057 = vpop.f32.mrf.mxu0
  %v1058 = vpop.f32.mrf.mxu0
  %v1059 = vadd.f32 %v573, %v1058
  %v1060 = vpop.f32.mrf.mxu0
  %1061 = vmatprep.mubr.bf16.mxu0 0
  %1062 = vmatmul.mubr.bf16.gmra.mxu0 %v814
  %v1063 = vpop.f32.mrf.mxu0
  %v1064 = vadd.f32 %v578, %v1063
  %v1065 = vpop.f32.mrf.mxu0
  %v1066 = vpop.f32.mrf.mxu0
  %v1067 = vadd.f32 %v581, %v1066
  %v1068 = vpop.f32.mrf.mxu0
  %1069 = vmatprep.mubr.bf16.mxu0 0
  %1070 = vmatmul.mubr.bf16.gmra.mxu0 %v817
  %v1071 = vpop.f32.mrf.mxu0
  %v1072 = vadd.f32 %v586, %v1071
  %v1073 = vpop.f32.mrf.mxu0
  %v1074 = vpop.f32.mrf.mxu0
  %v1075 = vadd.f32 %v589, %v1074
  %v1076 = vpop.f32.mrf.mxu0
  %1077 = vmatprep.mubr.bf16.mxu0 0
  %1078 = vmatmul.mubr.bf16.gmra.mxu0 %v820
  %v1079 = vpop.f32.mrf.mxu0
  %v1080 = vadd.f32 %v594, %v1079
  %v1081 = vpop.f32.mrf.mxu0
  %v1082 = vpop.f32.mrf.mxu0
  %v1083 = vadd.f32 %v597, %v1082
  %v1084 = vpop.f32.mrf.mxu0
  %1085 = vmatprep.mubr.bf16.mxu0 0
  %1086 = vmatmul.mubr.bf16.gmra.mxu0 %v823
  %v1087 = vpop.f32.mrf.mxu0
  %v1088 = vadd.f32 %v602, %v1087
  %v1089 = vpop.f32.mrf.mxu0
  %v1090 = vpop.f32.mrf.mxu0
  %v1091 = vadd.f32 %v605, %v1090
  %v1092 = vpop.f32.mrf.mxu0
  %1093 = vmatprep.mubr.bf16.mxu0 0
  %1094 = vmatmul.mubr.bf16.gmra.mxu0 %v826
  %v1095 = vpop.f32.mrf.mxu0
  %v1096 = vadd.f32 %v610, %v1095
  %v1097 = vpop.f32.mrf.mxu0
  %v1098 = vpop.f32.mrf.mxu0
  %v1099 = vadd.f32 %v613, %v1098
  %v1100 = vpop.f32.mrf.mxu0
  %1101 = vmatprep.mubr.bf16.mxu0 0
  %1102 = vmatmul.mubr.bf16.gmra.mxu0 %v829
  %v1103 = vpop.f32.mrf.mxu0
  %v1104 = vadd.f32 %v618, %v1103
  %v1105 = vpop.f32.mrf.mxu0
  %v1106 = vpop.f32.mrf.mxu0
  %v1107 = vadd.f32 %v621, %v1106
  %v1108 = vpop.f32.mrf.mxu0
  %1109 = vmatprep.mubr.bf16.mxu0 0
  %1110 = vmatmul.mubr.bf16.gmra.mxu0 %v832
  %v1111 = vpop.f32.mrf.mxu0
  %v1112 = vadd.f32 %v626, %v1111
  %v1113 = vpop.f32.mrf.mxu0
  %v1114 = vpop.f32.mrf.mxu0
  %v1115 = vadd.f32 %v629, %v1114
  %v1116 = vpop.f32.mrf.mxu0
  %1117 = vmatprep.mubr.bf16.mxu0 0
  %1118 = vmatmul.mubr.bf16.gmra.mxu0 %v835
  %v1119 = vpop.f32.mrf.mxu0
  %v1120 = vadd.f32 %v634, %v1119
  %v1121 = vpop.f32.mrf.mxu0
  %v1122 = vpop.f32.mrf.mxu0
  %v1123 = vadd.f32 %v637, %v1122
  %v1124 = vpop.f32.mrf.mxu0
  %1125 = vmatprep.mubr.bf16.mxu0 0
  %1126 = vmatmul.mubr.bf16.gmra.mxu0 %v838
  %v1127 = vpop.f32.mrf.mxu0
  %v1128 = vadd.f32 %v642, %v1127
  %v1129 = vpop.f32.mrf.mxu0
  %v1130 = vpop.f32.mrf.mxu0
  %v1131 = vadd.f32 %v645, %v1130
  %v1132 = vpop.f32.mrf.mxu0
  %1133 = vmatprep.mubr.bf16.mxu0 0
  %1134 = vmatmul.mubr.bf16.gmra.mxu0 %v841
  %v1135 = vpop.f32.mrf.mxu0
  %v1136 = vadd.f32 %v650, %v1135
  %v1137 = vpop.f32.mrf.mxu0
  %v1138 = vpop.f32.mrf.mxu0
  %v1139 = vadd.f32 %v653, %v1138
  %v1140 = vpop.f32.mrf.mxu0
  %1141 = vmatprep.mubr.bf16.mxu0 0
  %1142 = vmatmul.mubr.bf16.gmra.mxu0 %v844
  %v1143 = vpop.f32.mrf.mxu0
  %v1144 = vadd.f32 %v658, %v1143
  %v1145 = vpop.f32.mrf.mxu0
  %v1146 = vpop.f32.mrf.mxu0
  %v1147 = vadd.f32 %v661, %v1146
  %v1148 = vpop.f32.mrf.mxu0
  %1149 = vmatprep.mubr.bf16.mxu0 0
  %1150 = vmatmul.mubr.bf16.gmra.mxu0 %v847
  %v1151 = vpop.f32.mrf.mxu0
  %v1152 = vadd.f32 %v666, %v1151
  %v1153 = vpop.f32.mrf.mxu0
  %v1154 = vpop.f32.mrf.mxu0
  %v1155 = vadd.f32 %v669, %v1154
  %v1156 = vpop.f32.mrf.mxu0
  %1157 = vmatprep.mubr.bf16.mxu0 0
  %1158 = vmatmul.mubr.bf16.gmra.mxu0 %v850
  %v1159 = vpop.f32.mrf.mxu0
  %v1160 = vadd.f32 %v674, %v1159
  %v1161 = vpop.f32.mrf.mxu0
  %v1162 = vpop.f32.mrf.mxu0
  %v1163 = vadd.f32 %v677, %v1162
  %v1164 = vpop.f32.mrf.mxu0
  %1165 = vmatprep.mubr.bf16.mxu0 0
  %1166 = vmatmul.mubr.bf16.gmra.mxu0 %v853
  %v1167 = vpop.f32.mrf.mxu0
  %v1168 = vadd.f32 %v682, %v1167
  %v1169 = vpop.f32.mrf.mxu0
  %v1170 = vpop.f32.mrf.mxu0
  %v1171 = vadd.f32 %v685, %v1170
  %v1172 = vpop.f32.mrf.mxu0
  %1173 = vmatprep.mubr.bf16.mxu0 0
  %1174 = vmatmul.mubr.bf16.gmra.mxu0 %v856
  %v1175 = vpop.f32.mrf.mxu0
  %v1176 = vadd.f32 %v690, %v1175
  %v1177 = vpop.f32.mrf.mxu0
  %v1178 = vpop.f32.mrf.mxu0
  %v1179 = vadd.f32 %v693, %v1178
  %v1180 = vpop.f32.mrf.mxu0
  %1181 = vmatprep.mubr.bf16.mxu0 0
  %1182 = vmatmul.mubr.bf16.gmra.mxu0 %v859
  %v1183 = vpop.f32.mrf.mxu0
  %v1184 = vadd.f32 %v698, %v1183
  %v1185 = vpop.f32.mrf.mxu0
  %v1186 = vpop.f32.mrf.mxu0
  %v1187 = vadd.f32 %v701, %v1186
  %v1188 = vpop.f32.mrf.mxu0
  %1189 = vmatprep.mubr.bf16.mxu0 0
  %1190 = vmatmul.mubr.bf16.gmra.mxu0 %v862
  %v1191 = vpop.f32.mrf.mxu0
  %v1192 = vadd.f32 %v706, %v1191
  %v1193 = vpop.f32.mrf.mxu0
  %v1194 = vpop.f32.mrf.mxu0
  %v1195 = vadd.f32 %v709, %v1194
  %v1196 = vpop.f32.mrf.mxu0
  %1197 = vmatprep.mubr.bf16.mxu0 0
  %1198 = vmatmul.mubr.bf16.gmra.mxu0 %v865
  %v1199 = vpop.f32.mrf.mxu0
  %v1200 = vadd.f32 %v714, %v1199
  %v1201 = vpop.f32.mrf.mxu0
  %v1202 = vpop.f32.mrf.mxu0
  %v1203 = vadd.f32 %v717, %v1202
  %v1204 = vpop.f32.mrf.mxu0
  %1205 = vmatprep.mubr.bf16.mxu0 0
  %1206 = vmatmul.mubr.bf16.gmra.mxu0 %v868
  %v1207 = vpop.f32.mrf.mxu0
  %v1208 = vadd.f32 %v722, %v1207
  %v1209 = vpop.f32.mrf.mxu0
  %v1210 = vpop.f32.mrf.mxu0
  %v1211 = vadd.f32 %v725, %v1210
  %v1212 = vpop.f32.mrf.mxu0
  %1213 = vmatprep.mubr.bf16.mxu0 0
  %1214 = vmatmul.mubr.bf16.gmra.mxu0 %v871
  %v1215 = vpop.f32.mrf.mxu0
  %v1216 = vadd.f32 %v730, %v1215
  %v1217 = vpop.f32.mrf.mxu0
  %v1218 = vpop.f32.mrf.mxu0
  %v1219 = vadd.f32 %v733, %v1218
  %v1220 = vpop.f32.mrf.mxu0
  %1221 = vmatprep.mubr.bf16.mxu0 0
  %1222 = vmatmul.mubr.bf16.gmra.mxu0 %v874
  %v1223 = vpop.f32.mrf.mxu0
  %v1224 = vadd.f32 %v738, %v1223
  %v1225 = vpop.f32.mrf.mxu0
  %v1226 = vpop.f32.mrf.mxu0
  %v1227 = vadd.f32 %v741, %v1226
  %v1228 = vpop.f32.mrf.mxu0
  %1229 = vmatprep.mubr.bf16.mxu0 0
  %1230 = vmatmul.mubr.bf16.gmra.mxu0 %v877
  %v1231 = vpop.f32.mrf.mxu0
  %v1232 = vadd.f32 %v746, %v1231
  %v1233 = vpop.f32.mrf.mxu0
  %v1234 = vpop.f32.mrf.mxu0
  %v1235 = vadd.f32 %v749, %v1234
  %v1236 = vpop.f32.mrf.mxu0
  %1237 = vmatprep.mubr.bf16.mxu0 0
  %1238 = vmatmul.mubr.bf16.gmra.mxu0 %v880
  %v1239 = vpop.f32.mrf.mxu0
  %v1240 = vadd.f32 %v754, %v1239
  %v1241 = vpop.f32.mrf.mxu0
  %v1242 = vpop.f32.mrf.mxu0
  %v1243 = vpop.f32.mrf.mxu0
  %1244 = vdwg.mxu0
  %v1245 = vld [vmem:[%s0 + $0x2] sm:$0xff]
  %v1246 = vld [vmem:[%s0 + $0xa] sm:$0xff]
  %v1247 = vld [vmem:[%s0 + $0x12] sm:$0xff]
  %v1248 = vld [vmem:[%s0 + $0x1a] sm:$0xff]
  %v1249 = vld [vmem:[%s0 + $0x22] sm:$0xff]
  %v1250 = vld [vmem:[%s0 + $0x2a] sm:$0xff]
  %v1251 = vld [vmem:[%s0 + $0x32] sm:$0xff]
  %v1252 = vld [vmem:[%s0 + $0x3a] sm:$0xff]
  %v1253 = vld [vmem:[%s0 + $0x42] sm:$0xff]
  %v1254 = vld [vmem:[%s0 + $0x4a] sm:$0xff]
  %v1255 = vld [vmem:[%s0 + $0x52] sm:$0xff]
  %v1256 = vld [vmem:[%s0 + $0x5a] sm:$0xff]
  %v1257 = vld [vmem:[%s0 + $0x62] sm:$0xff]
  %v1258 = vld [vmem:[%s0 + $0x6a] sm:$0xff]
  %v1259 = vld [vmem:[%s0 + $0x72] sm:$0xff]
  %v1260 = vld [vmem:[%s0 + $0x7a] sm:$0xff]
  %v1261 = vld [vmem:[%s0 + $0x82] sm:$0xff]
  %v1262 = vld [vmem:[%s0 + $0x8a] sm:$0xff]
  %v1263 = vld [vmem:[%s0 + $0x92] sm:$0xff]
  %v1264 = vld [vmem:[%s0 + $0x9a] sm:$0xff]
  %v1265 = vld [vmem:[%s0 + $0xa2] sm:$0xff]
  %v1266 = vld [vmem:[%s0 + $0xaa] sm:$0xff]
  %v1267 = vld [vmem:[%s0 + $0xb2] sm:$0xff]
  %v1268 = vld [vmem:[%s0 + $0xba] sm:$0xff]
  %v1269 = vld [vmem:[%s0 + $0xc2] sm:$0xff]
  %v1270 = vld [vmem:[%s0 + $0xca] sm:$0xff]
  %v1271 = vld [vmem:[%s0 + $0xd2] sm:$0xff]
  %v1272 = vld [vmem:[%s0 + $0xda] sm:$0xff]
  %v1273 = vld [vmem:[%s0 + $0xe2] sm:$0xff]
  %v1274 = vld [vmem:[%s0 + $0xea] sm:$0xff]
  %v1275 = vld [vmem:[%s0 + $0xf2] sm:$0xff]
  %v1276 = vld [vmem:[%s0 + $0xfa] sm:$0xff]
  %v1277 = vld [vmem:[%s0 + $0x102] sm:$0xff]
  %v1278 = vld [vmem:[%s0 + $0x10a] sm:$0xff]
  %v1279 = vld [vmem:[%s0 + $0x112] sm:$0xff]
  %v1280 = vld [vmem:[%s0 + $0x11a] sm:$0xff]
  %v1281 = vld [vmem:[%s0 + $0x122] sm:$0xff]
  %v1282 = vld [vmem:[%s0 + $0x12a] sm:$0xff]
  %v1283 = vld [vmem:[%s0 + $0x132] sm:$0xff]
  %v1284 = vld [vmem:[%s0 + $0x13a] sm:$0xff]
  %v1285 = vld [vmem:[%s0 + $0x142] sm:$0xff]
  %v1286 = vld [vmem:[%s0 + $0x14a] sm:$0xff]
  %v1287 = vld [vmem:[%s0 + $0x152] sm:$0xff]
  %v1288 = vld [vmem:[%s0 + $0x15a] sm:$0xff]
  %v1289 = vld [vmem:[%s0 + $0x162] sm:$0xff]
  %v1290 = vld [vmem:[%s0 + $0x16a] sm:$0xff]
  %v1291 = vld [vmem:[%s0 + $0x172] sm:$0xff]
  %v1292 = vld [vmem:[%s0 + $0x17a] sm:$0xff]
  %v1293 = vld [vmem:[%s0 + $0x182] sm:$0xff]
  %v1294 = vld [vmem:[%s0 + $0x18a] sm:$0xff]
  %v1295 = vld [vmem:[%s0 + $0x192] sm:$0xff]
  %v1296 = vld [vmem:[%s0 + $0x19a] sm:$0xff]
  %v1297 = vld [vmem:[%s0 + $0x1a2] sm:$0xff]
  %v1298 = vld [vmem:[%s0 + $0x1aa] sm:$0xff]
  %v1299 = vld [vmem:[%s0 + $0x1b2] sm:$0xff]
  %v1300 = vld [vmem:[%s0 + $0x1ba] sm:$0xff]
  %v1301 = vld [vmem:[%s0 + $0x1c2] sm:$0xff]
  %v1302 = vld [vmem:[%s0 + $0x1ca] sm:$0xff]
  %v1303 = vld [vmem:[%s0 + $0x1d2] sm:$0xff]
  %v1304 = vld [vmem:[%s0 + $0x1da] sm:$0xff]
  %v1305 = vld [vmem:[%s0 + $0x1e2] sm:$0xff]
  %v1306 = vld [vmem:[%s0 + $0x1ea] sm:$0xff]
  %v1307 = vld [vmem:[%s0 + $0x1f2] sm:$0xff]
  %v1308 = vld [vmem:[%s0 + $0x1fa] sm:$0xff]
  %v1309 = vld [vmem:[%s0 + $0x202] sm:$0xff]
  %v1310 = vld [vmem:[%s0 + $0x20a] sm:$0xff]
  %v1311 = vld [vmem:[%s0 + $0x212] sm:$0xff]
  %v1312 = vld [vmem:[%s0 + $0x21a] sm:$0xff]
  %v1313 = vld [vmem:[%s0 + $0x222] sm:$0xff]
  %v1314 = vld [vmem:[%s0 + $0x22a] sm:$0xff]
  %v1315 = vld [vmem:[%s0 + $0x232] sm:$0xff]
  %v1316 = vld [vmem:[%s0 + $0x23a] sm:$0xff]
  %v1317 = vld [vmem:[%s0 + $0x242] sm:$0xff]
  %v1318 = vld [vmem:[%s0 + $0x24a] sm:$0xff]
  %v1319 = vld [vmem:[%s0 + $0x252] sm:$0xff]
  %v1320 = vld [vmem:[%s0 + $0x25a] sm:$0xff]
  %v1321 = vld [vmem:[%s0 + $0x262] sm:$0xff]
  %v1322 = vld [vmem:[%s0 + $0x26a] sm:$0xff]
  %v1323 = vld [vmem:[%s0 + $0x272] sm:$0xff]
  %v1324 = vld [vmem:[%s0 + $0x27a] sm:$0xff]
  %v1325 = vld [vmem:[%s0 + $0x282] sm:$0xff]
  %v1326 = vpack.c.bf16 %v1246, %v1245
  %v1327 = vpack.c.bf16 %v1248, %v1247
  %v1328 = vpack.c.bf16 %v1250, %v1249
  %v1329 = vpack.c.bf16 %v1252, %v1251
  %v1330 = vpack.c.bf16 %v1254, %v1253
  %v1331 = vpack.c.bf16 %v1256, %v1255
  %v1332 = vpack.c.bf16 %v1258, %v1257
  %v1333 = vpack.c.bf16 %v1260, %v1259
  %v1334 = vpack.c.bf16 %v1262, %v1261
  %v1335 = vpack.c.bf16 %v1264, %v1263
  %v1336 = vpack.c.bf16 %v1266, %v1265
  %v1337 = vpack.c.bf16 %v1268, %v1267
  %v1338 = vpack.c.bf16 %v1270, %v1269
  %v1339 = vpack.c.bf16 %v1272, %v1271
  %v1340 = vpack.c.bf16 %v1274, %v1273
  %v1341 = vpack.c.bf16 %v1276, %v1275
  %v1342 = vpack.c.bf16 %v1278, %v1277
  %v1343 = vpack.c.bf16 %v1280, %v1279
  %v1344 = vpack.c.bf16 %v1282, %v1281
  %v1345 = vpack.c.bf16 %v1284, %v1283
  %v1346 = vpack.c.bf16 %v1286, %v1285
  %v1347 = vpack.c.bf16 %v1288, %v1287
  %v1348 = vpack.c.bf16 %v1290, %v1289
  %v1349 = vpack.c.bf16 %v1292, %v1291
  %v1350 = vpack.c.bf16 %v1294, %v1293
  %v1351 = vpack.c.bf16 %v1296, %v1295
  %v1352 = vpack.c.bf16 %v1298, %v1297
  %v1353 = vpack.c.bf16 %v1300, %v1299
  %v1354 = vpack.c.bf16 %v1302, %v1301
  %v1355 = vpack.c.bf16 %v1304, %v1303
  %v1356 = vpack.c.bf16 %v1306, %v1305
  %v1357 = vpack.c.bf16 %v1308, %v1307
  %v1358 = vpack.c.bf16 %v1310, %v1309
  %v1359 = vpack.c.bf16 %v1312, %v1311
  %v1360 = vpack.c.bf16 %v1314, %v1313
  %v1361 = vpack.c.bf16 %v1316, %v1315
  %v1362 = vpack.c.bf16 %v1318, %v1317
  %v1363 = vpack.c.bf16 %v1320, %v1319
  %v1364 = vpack.c.bf16 %v1322, %v1321
  %v1365 = vpack.c.bf16 %v1324, %v1323
  %v1366 = vpack.c.bf16 %v1325, %v1325
  %s1367 = scalar_lea.vmem %s1, 4
  %v1368 = vld [vmem:[%s1367] sm:$0x3]
  %v1370 = vsel %vm271, %v1326, 0
  %v1373 = vsel %vm271, %v1327, 0
  %v1376 = vsel %vm271, %v1328, 0
  %v1379 = vsel %vm271, %v1329, 0
  %v1382 = vsel %vm271, %v1330, 0
  %v1385 = vsel %vm271, %v1331, 0
  %v1388 = vsel %vm271, %v1332, 0
  %v1391 = vsel %vm271, %v1333, 0
  %v1394 = vsel %vm271, %v1334, 0
  %v1397 = vsel %vm271, %v1335, 0
  %v1400 = vsel %vm271, %v1336, 0
  %v1403 = vsel %vm271, %v1337, 0
  %v1406 = vsel %vm271, %v1338, 0
  %v1409 = vsel %vm271, %v1339, 0
  %v1412 = vsel %vm271, %v1340, 0
  %v1415 = vsel %vm271, %v1341, 0
  %v1418 = vsel %vm271, %v1342, 0
  %v1421 = vsel %vm271, %v1343, 0
  %v1424 = vsel %vm271, %v1344, 0
  %v1427 = vsel %vm271, %v1345, 0
  %v1430 = vsel %vm271, %v1346, 0
  %v1433 = vsel %vm271, %v1347, 0
  %v1436 = vsel %vm271, %v1348, 0
  %v1439 = vsel %vm271, %v1349, 0
  %v1442 = vsel %vm271, %v1350, 0
  %v1445 = vsel %vm271, %v1351, 0
  %v1448 = vsel %vm271, %v1352, 0
  %v1451 = vsel %vm271, %v1353, 0
  %v1454 = vsel %vm271, %v1354, 0
  %v1457 = vsel %vm271, %v1355, 0
  %v1460 = vsel %vm271, %v1356, 0
  %v1463 = vsel %vm271, %v1357, 0
  %v1466 = vsel %vm271, %v1358, 0
  %v1469 = vsel %vm271, %v1359, 0
  %v1472 = vsel %vm271, %v1360, 0
  %v1475 = vsel %vm271, %v1361, 0
  %v1478 = vsel %vm271, %v1362, 0
  %v1481 = vsel %vm271, %v1363, 0
  %v1484 = vsel %vm271, %v1364, 0
  %v1487 = vsel %vm271, %v1365, 0
  %v1490 = vsel %vm271, %v1366, 0
  %v1493 = vsel %vm395, %v1368, 0
  %1495 = vmatprep.subr.bf16.mxu0 0
  %1496 = vmatpush1.bf16.msra.mxu0 0
  %1497 = vmatprep.subr.bf16.mxu0 0
  %1498 = vmatpush1.bf16.msra.mxu0 0
  %1499 = vmatprep.subr.bf16.mxu0 0
  %1500 = vmatpush1.bf16.msra.mxu0 0
  %1501 = vmatprep.subr.bf16.mxu0 0
  %1502 = vmatpush1.bf16.msra.mxu0 0
  %1503 = vmatprep.subr.bf16.mxu0 0
  %1504 = vmatpush1.bf16.msra.mxu0 0
  %1505 = vmatprep.subr.bf16.mxu0 0
  %1506 = vmatpush1.bf16.msra.mxu0 0
  %1507 = vmatprep.subr.bf16.mxu0 0
  %1508 = vmatpush1.bf16.msra.mxu0 0
  %1509 = vmatprep.subr.bf16.mxu0 0
  %1510 = vmatpush1.bf16.msra.mxu0 %v1493
  %1511 = vmatprep.subr.bf16.mxu0 0
  %1512 = vmatpush2.bf16.msra.mxu0 0
  %1513 = vmatprep.subr.bf16.mxu0 0
  %1514 = vmatpush2.bf16.msra.mxu0 0
  %1515 = vmatprep.subr.bf16.mxu0 0
  %1516 = vmatpush2.bf16.msra.mxu0 0
  %1517 = vmatprep.subr.bf16.mxu0 0
  %1518 = vmatpush2.bf16.msra.mxu0 0
  %1519 = vmatprep.subr.bf16.mxu0 0
  %1520 = vmatpush2.bf16.msra.mxu0 0
  %1521 = vmatprep.subr.bf16.mxu0 0
  %1522 = vmatpush2.bf16.msra.mxu0 0
  %1523 = vmatprep.subr.bf16.mxu0 0
  %1524 = vmatpush2.bf16.msra.mxu0 0
  %1525 = vmatprep.subr.bf16.mxu0 0
  %1526 = vmatpush2.bf16.msra.mxu0 0
  %1527 = vmatprep.mubr.bf16.mxu0 0
  %1528 = vmatmul.mubr.bf16.gmra.mxu0 %v1370
  %v1529 = vpop.f32.mrf.mxu0
  %v1530 = vadd.f32 0.0, %v1529
  %v1531 = vpop.f32.mrf.mxu0
  %v1532 = vpop.f32.mrf.mxu0
  %v1533 = vadd.f32 0.0, %v1532
  %v1534 = vpop.f32.mrf.mxu0
  %1535 = vmatprep.mubr.bf16.mxu0 0
  %1536 = vmatmul.mubr.bf16.gmra.mxu0 %v1373
  %v1537 = vpop.f32.mrf.mxu0
  %v1538 = vadd.f32 0.0, %v1537
  %v1539 = vpop.f32.mrf.mxu0
  %v1540 = vpop.f32.mrf.mxu0
  %v1541 = vadd.f32 0.0, %v1540
  %v1542 = vpop.f32.mrf.mxu0
  %1543 = vmatprep.mubr.bf16.mxu0 0
  %1544 = vmatmul.mubr.bf16.gmra.mxu0 %v1376
  %v1545 = vpop.f32.mrf.mxu0
  %v1546 = vadd.f32 0.0, %v1545
  %v1547 = vpop.f32.mrf.mxu0
  %v1548 = vpop.f32.mrf.mxu0
  %v1549 = vadd.f32 0.0, %v1548
  %v1550 = vpop.f32.mrf.mxu0
  %1551 = vmatprep.mubr.bf16.mxu0 0
  %1552 = vmatmul.mubr.bf16.gmra.mxu0 %v1379
  %v1553 = vpop.f32.mrf.mxu0
  %v1554 = vadd.f32 0.0, %v1553
  %v1555 = vpop.f32.mrf.mxu0
  %v1556 = vpop.f32.mrf.mxu0
  %v1557 = vadd.f32 0.0, %v1556
  %v1558 = vpop.f32.mrf.mxu0
  %1559 = vmatprep.mubr.bf16.mxu0 0
  %1560 = vmatmul.mubr.bf16.gmra.mxu0 %v1382
  %v1561 = vpop.f32.mrf.mxu0
  %v1562 = vadd.f32 0.0, %v1561
  %v1563 = vpop.f32.mrf.mxu0
  %v1564 = vpop.f32.mrf.mxu0
  %v1565 = vadd.f32 0.0, %v1564
  %v1566 = vpop.f32.mrf.mxu0
  %1567 = vmatprep.mubr.bf16.mxu0 0
  %1568 = vmatmul.mubr.bf16.gmra.mxu0 %v1385
  %v1569 = vpop.f32.mrf.mxu0
  %v1570 = vadd.f32 0.0, %v1569
  %v1571 = vpop.f32.mrf.mxu0
  %v1572 = vpop.f32.mrf.mxu0
  %v1573 = vadd.f32 0.0, %v1572
  %v1574 = vpop.f32.mrf.mxu0
  %1575 = vmatprep.mubr.bf16.mxu0 0
  %1576 = vmatmul.mubr.bf16.gmra.mxu0 %v1388
  %v1577 = vpop.f32.mrf.mxu0
  %v1578 = vadd.f32 0.0, %v1577
  %v1579 = vpop.f32.mrf.mxu0
  %v1580 = vpop.f32.mrf.mxu0
  %v1581 = vadd.f32 0.0, %v1580
  %v1582 = vpop.f32.mrf.mxu0
  %1583 = vmatprep.mubr.bf16.mxu0 0
  %1584 = vmatmul.mubr.bf16.gmra.mxu0 %v1391
  %v1585 = vpop.f32.mrf.mxu0
  %v1586 = vadd.f32 0.0, %v1585
  %v1587 = vpop.f32.mrf.mxu0
  %v1588 = vpop.f32.mrf.mxu0
  %v1589 = vadd.f32 0.0, %v1588
  %v1590 = vpop.f32.mrf.mxu0
  %1591 = vmatprep.mubr.bf16.mxu0 0
  %1592 = vmatmul.mubr.bf16.gmra.mxu0 %v1394
  %v1593 = vpop.f32.mrf.mxu0
  %v1594 = vadd.f32 0.0, %v1593
  %v1595 = vpop.f32.mrf.mxu0
  %v1596 = vpop.f32.mrf.mxu0
  %v1597 = vadd.f32 0.0, %v1596
  %v1598 = vpop.f32.mrf.mxu0
  %1599 = vmatprep.mubr.bf16.mxu0 0
  %1600 = vmatmul.mubr.bf16.gmra.mxu0 %v1397
  %v1601 = vpop.f32.mrf.mxu0
  %v1602 = vadd.f32 0.0, %v1601
  %v1603 = vpop.f32.mrf.mxu0
  %v1604 = vpop.f32.mrf.mxu0
  %v1605 = vadd.f32 0.0, %v1604
  %v1606 = vpop.f32.mrf.mxu0
  %1607 = vmatprep.mubr.bf16.mxu0 0
  %1608 = vmatmul.mubr.bf16.gmra.mxu0 %v1400
  %v1609 = vpop.f32.mrf.mxu0
  %v1610 = vadd.f32 0.0, %v1609
  %v1611 = vpop.f32.mrf.mxu0
  %v1612 = vpop.f32.mrf.mxu0
  %v1613 = vadd.f32 0.0, %v1612
  %v1614 = vpop.f32.mrf.mxu0
  %1615 = vmatprep.mubr.bf16.mxu0 0
  %1616 = vmatmul.mubr.bf16.gmra.mxu0 %v1403
  %v1617 = vpop.f32.mrf.mxu0
  %v1618 = vadd.f32 0.0, %v1617
  %v1619 = vpop.f32.mrf.mxu0
  %v1620 = vpop.f32.mrf.mxu0
  %v1621 = vadd.f32 0.0, %v1620
  %v1622 = vpop.f32.mrf.mxu0
  %1623 = vmatprep.mubr.bf16.mxu0 0
  %1624 = vmatmul.mubr.bf16.gmra.mxu0 %v1406
  %v1625 = vpop.f32.mrf.mxu0
  %v1626 = vadd.f32 0.0, %v1625
  %v1627 = vpop.f32.mrf.mxu0
  %v1628 = vpop.f32.mrf.mxu0
  %v1629 = vadd.f32 0.0, %v1628
  %v1630 = vpop.f32.mrf.mxu0
  %1631 = vmatprep.mubr.bf16.mxu0 0
  %1632 = vmatmul.mubr.bf16.gmra.mxu0 %v1409
  %v1633 = vpop.f32.mrf.mxu0
  %v1634 = vadd.f32 0.0, %v1633
  %v1635 = vpop.f32.mrf.mxu0
  %v1636 = vpop.f32.mrf.mxu0
  %v1637 = vadd.f32 0.0, %v1636
  %v1638 = vpop.f32.mrf.mxu0
  %1639 = vmatprep.mubr.bf16.mxu0 0
  %1640 = vmatmul.mubr.bf16.gmra.mxu0 %v1412
  %v1641 = vpop.f32.mrf.mxu0
  %v1642 = vadd.f32 0.0, %v1641
  %v1643 = vpop.f32.mrf.mxu0
  %v1644 = vpop.f32.mrf.mxu0
  %v1645 = vadd.f32 0.0, %v1644
  %v1646 = vpop.f32.mrf.mxu0
  %1647 = vmatprep.mubr.bf16.mxu0 0
  %1648 = vmatmul.mubr.bf16.gmra.mxu0 %v1415
  %v1649 = vpop.f32.mrf.mxu0
  %v1650 = vadd.f32 0.0, %v1649
  %v1651 = vpop.f32.mrf.mxu0
  %v1652 = vpop.f32.mrf.mxu0
  %v1653 = vadd.f32 0.0, %v1652
  %v1654 = vpop.f32.mrf.mxu0
  %1655 = vmatprep.mubr.bf16.mxu0 0
  %1656 = vmatmul.mubr.bf16.gmra.mxu0 %v1418
  %v1657 = vpop.f32.mrf.mxu0
  %v1658 = vadd.f32 0.0, %v1657
  %v1659 = vpop.f32.mrf.mxu0
  %v1660 = vpop.f32.mrf.mxu0
  %v1661 = vadd.f32 0.0, %v1660
  %v1662 = vpop.f32.mrf.mxu0
  %1663 = vmatprep.mubr.bf16.mxu0 0
  %1664 = vmatmul.mubr.bf16.gmra.mxu0 %v1421
  %v1665 = vpop.f32.mrf.mxu0
  %v1666 = vadd.f32 0.0, %v1665
  %v1667 = vpop.f32.mrf.mxu0
  %v1668 = vpop.f32.mrf.mxu0
  %v1669 = vadd.f32 0.0, %v1668
  %v1670 = vpop.f32.mrf.mxu0
  %1671 = vmatprep.mubr.bf16.mxu0 0
  %1672 = vmatmul.mubr.bf16.gmra.mxu0 %v1424
  %v1673 = vpop.f32.mrf.mxu0
  %v1674 = vadd.f32 0.0, %v1673
  %v1675 = vpop.f32.mrf.mxu0
  %v1676 = vpop.f32.mrf.mxu0
  %v1677 = vadd.f32 0.0, %v1676
  %v1678 = vpop.f32.mrf.mxu0
  %1679 = vmatprep.mubr.bf16.mxu0 0
  %1680 = vmatmul.mubr.bf16.gmra.mxu0 %v1427
  %v1681 = vpop.f32.mrf.mxu0
  %v1682 = vadd.f32 0.0, %v1681
  %v1683 = vpop.f32.mrf.mxu0
  %v1684 = vpop.f32.mrf.mxu0
  %v1685 = vadd.f32 0.0, %v1684
  %v1686 = vpop.f32.mrf.mxu0
  %1687 = vmatprep.mubr.bf16.mxu0 0
  %1688 = vmatmul.mubr.bf16.gmra.mxu0 %v1430
  %v1689 = vpop.f32.mrf.mxu0
  %v1690 = vadd.f32 0.0, %v1689
  %v1691 = vpop.f32.mrf.mxu0
  %v1692 = vpop.f32.mrf.mxu0
  %v1693 = vadd.f32 0.0, %v1692
  %v1694 = vpop.f32.mrf.mxu0
  %1695 = vmatprep.mubr.bf16.mxu0 0
  %1696 = vmatmul.mubr.bf16.gmra.mxu0 %v1433
  %v1697 = vpop.f32.mrf.mxu0
  %v1698 = vadd.f32 0.0, %v1697
  %v1699 = vpop.f32.mrf.mxu0
  %v1700 = vpop.f32.mrf.mxu0
  %v1701 = vadd.f32 0.0, %v1700
  %v1702 = vpop.f32.mrf.mxu0
  %1703 = vmatprep.mubr.bf16.mxu0 0
  %1704 = vmatmul.mubr.bf16.gmra.mxu0 %v1436
  %v1705 = vpop.f32.mrf.mxu0
  %v1706 = vadd.f32 0.0, %v1705
  %v1707 = vpop.f32.mrf.mxu0
  %v1708 = vpop.f32.mrf.mxu0
  %v1709 = vadd.f32 0.0, %v1708
  %v1710 = vpop.f32.mrf.mxu0
  %1711 = vmatprep.mubr.bf16.mxu0 0
  %1712 = vmatmul.mubr.bf16.gmra.mxu0 %v1439
  %v1713 = vpop.f32.mrf.mxu0
  %v1714 = vadd.f32 0.0, %v1713
  %v1715 = vpop.f32.mrf.mxu0
  %v1716 = vpop.f32.mrf.mxu0
  %v1717 = vadd.f32 0.0, %v1716
  %v1718 = vpop.f32.mrf.mxu0
  %1719 = vmatprep.mubr.bf16.mxu0 0
  %1720 = vmatmul.mubr.bf16.gmra.mxu0 %v1442
  %v1721 = vpop.f32.mrf.mxu0
  %v1722 = vadd.f32 0.0, %v1721
  %v1723 = vpop.f32.mrf.mxu0
  %v1724 = vpop.f32.mrf.mxu0
  %v1725 = vadd.f32 0.0, %v1724
  %v1726 = vpop.f32.mrf.mxu0
  %1727 = vmatprep.mubr.bf16.mxu0 0
  %1728 = vmatmul.mubr.bf16.gmra.mxu0 %v1445
  %v1729 = vpop.f32.mrf.mxu0
  %v1730 = vadd.f32 0.0, %v1729
  %v1731 = vpop.f32.mrf.mxu0
  %v1732 = vpop.f32.mrf.mxu0
  %v1733 = vadd.f32 0.0, %v1732
  %v1734 = vpop.f32.mrf.mxu0
  %1735 = vmatprep.mubr.bf16.mxu0 0
  %1736 = vmatmul.mubr.bf16.gmra.mxu0 %v1448
  %v1737 = vpop.f32.mrf.mxu0
  %v1738 = vadd.f32 0.0, %v1737
  %v1739 = vpop.f32.mrf.mxu0
  %v1740 = vpop.f32.mrf.mxu0
  %v1741 = vadd.f32 0.0, %v1740
  %v1742 = vpop.f32.mrf.mxu0
  %1743 = vmatprep.mubr.bf16.mxu0 0
  %1744 = vmatmul.mubr.bf16.gmra.mxu0 %v1451
  %v1745 = vpop.f32.mrf.mxu0
  %v1746 = vadd.f32 0.0, %v1745
  %v1747 = vpop.f32.mrf.mxu0
  %v1748 = vpop.f32.mrf.mxu0
  %v1749 = vadd.f32 0.0, %v1748
  %v1750 = vpop.f32.mrf.mxu0
  %1751 = vmatprep.mubr.bf16.mxu0 0
  %1752 = vmatmul.mubr.bf16.gmra.mxu0 %v1454
  %v1753 = vpop.f32.mrf.mxu0
  %v1754 = vadd.f32 0.0, %v1753
  %v1755 = vpop.f32.mrf.mxu0
  %v1756 = vpop.f32.mrf.mxu0
  %v1757 = vadd.f32 0.0, %v1756
  %v1758 = vpop.f32.mrf.mxu0
  %1759 = vmatprep.mubr.bf16.mxu0 0
  %1760 = vmatmul.mubr.bf16.gmra.mxu0 %v1457
  %v1761 = vpop.f32.mrf.mxu0
  %v1762 = vadd.f32 0.0, %v1761
  %v1763 = vpop.f32.mrf.mxu0
  %v1764 = vpop.f32.mrf.mxu0
  %v1765 = vadd.f32 0.0, %v1764
  %v1766 = vpop.f32.mrf.mxu0
  %1767 = vmatprep.mubr.bf16.mxu0 0
  %1768 = vmatmul.mubr.bf16.gmra.mxu0 %v1460
  %v1769 = vpop.f32.mrf.mxu0
  %v1770 = vadd.f32 0.0, %v1769
  %v1771 = vpop.f32.mrf.mxu0
  %v1772 = vpop.f32.mrf.mxu0
  %v1773 = vadd.f32 0.0, %v1772
  %v1774 = vpop.f32.mrf.mxu0
  %1775 = vmatprep.mubr.bf16.mxu0 0
  %1776 = vmatmul.mubr.bf16.gmra.mxu0 %v1463
  %v1777 = vpop.f32.mrf.mxu0
  %v1778 = vadd.f32 0.0, %v1777
  %v1779 = vpop.f32.mrf.mxu0
  %v1780 = vpop.f32.mrf.mxu0
  %v1781 = vadd.f32 0.0, %v1780
  %v1782 = vpop.f32.mrf.mxu0
  %1783 = vmatprep.mubr.bf16.mxu0 0
  %1784 = vmatmul.mubr.bf16.gmra.mxu0 %v1466
  %v1785 = vpop.f32.mrf.mxu0
  %v1786 = vadd.f32 0.0, %v1785
  %v1787 = vpop.f32.mrf.mxu0
  %v1788 = vpop.f32.mrf.mxu0
  %v1789 = vadd.f32 0.0, %v1788
  %v1790 = vpop.f32.mrf.mxu0
  %1791 = vmatprep.mubr.bf16.mxu0 0
  %1792 = vmatmul.mubr.bf16.gmra.mxu0 %v1469
  %v1793 = vpop.f32.mrf.mxu0
  %v1794 = vadd.f32 0.0, %v1793
  %v1795 = vpop.f32.mrf.mxu0
  %v1796 = vpop.f32.mrf.mxu0
  %v1797 = vadd.f32 0.0, %v1796
  %v1798 = vpop.f32.mrf.mxu0
  %1799 = vmatprep.mubr.bf16.mxu0 0
  %1800 = vmatmul.mubr.bf16.gmra.mxu0 %v1472
  %v1801 = vpop.f32.mrf.mxu0
  %v1802 = vadd.f32 0.0, %v1801
  %v1803 = vpop.f32.mrf.mxu0
  %v1804 = vpop.f32.mrf.mxu0
  %v1805 = vadd.f32 0.0, %v1804
  %v1806 = vpop.f32.mrf.mxu0
  %1807 = vmatprep.mubr.bf16.mxu0 0
  %1808 = vmatmul.mubr.bf16.gmra.mxu0 %v1475
  %v1809 = vpop.f32.mrf.mxu0
  %v1810 = vadd.f32 0.0, %v1809
  %v1811 = vpop.f32.mrf.mxu0
  %v1812 = vpop.f32.mrf.mxu0
  %v1813 = vadd.f32 0.0, %v1812
  %v1814 = vpop.f32.mrf.mxu0
  %1815 = vmatprep.mubr.bf16.mxu0 0
  %1816 = vmatmul.mubr.bf16.gmra.mxu0 %v1478
  %v1817 = vpop.f32.mrf.mxu0
  %v1818 = vadd.f32 0.0, %v1817
  %v1819 = vpop.f32.mrf.mxu0
  %v1820 = vpop.f32.mrf.mxu0
  %v1821 = vadd.f32 0.0, %v1820
  %v1822 = vpop.f32.mrf.mxu0
  %1823 = vmatprep.mubr.bf16.mxu0 0
  %1824 = vmatmul.mubr.bf16.gmra.mxu0 %v1481
  %v1825 = vpop.f32.mrf.mxu0
  %v1826 = vadd.f32 0.0, %v1825
  %v1827 = vpop.f32.mrf.mxu0
  %v1828 = vpop.f32.mrf.mxu0
  %v1829 = vadd.f32 0.0, %v1828
  %v1830 = vpop.f32.mrf.mxu0
  %1831 = vmatprep.mubr.bf16.mxu0 0
  %1832 = vmatmul.mubr.bf16.gmra.mxu0 %v1484
  %v1833 = vpop.f32.mrf.mxu0
  %v1834 = vadd.f32 0.0, %v1833
  %v1835 = vpop.f32.mrf.mxu0
  %v1836 = vpop.f32.mrf.mxu0
  %v1837 = vadd.f32 0.0, %v1836
  %v1838 = vpop.f32.mrf.mxu0
  %1839 = vmatprep.mubr.bf16.mxu0 0
  %1840 = vmatmul.mubr.bf16.gmra.mxu0 %v1487
  %v1841 = vpop.f32.mrf.mxu0
  %v1842 = vadd.f32 0.0, %v1841
  %v1843 = vpop.f32.mrf.mxu0
  %v1844 = vpop.f32.mrf.mxu0
  %v1845 = vadd.f32 0.0, %v1844
  %v1846 = vpop.f32.mrf.mxu0
  %1847 = vmatprep.mubr.bf16.mxu0 0
  %1848 = vmatmul.mubr.bf16.gmra.mxu0 %v1490
  %v1849 = vpop.f32.mrf.mxu0
  %v1850 = vadd.f32 0.0, %v1849
  %v1851 = vpop.f32.mrf.mxu0
  %v1852 = vpop.f32.mrf.mxu0
  %v1853 = vpop.f32.mrf.mxu0
  %1854 = vdwg.mxu0
  %v1855 = vadd.f32 %v920, %v1530
  %v1856 = vadd.f32 %v923, %v1533
  %v1857 = vadd.f32 %v928, %v1538
  %v1858 = vadd.f32 %v931, %v1541
  %v1859 = vadd.f32 %v936, %v1546
  %v1860 = vadd.f32 %v939, %v1549
  %v1861 = vadd.f32 %v944, %v1554
  %v1862 = vadd.f32 %v947, %v1557
  %v1863 = vadd.f32 %v952, %v1562
  %v1864 = vadd.f32 %v955, %v1565
  %v1865 = vadd.f32 %v960, %v1570
  %v1866 = vadd.f32 %v963, %v1573
  %v1867 = vadd.f32 %v968, %v1578
  %v1868 = vadd.f32 %v971, %v1581
  %v1869 = vadd.f32 %v976, %v1586
  %v1870 = vadd.f32 %v979, %v1589
  %v1871 = vadd.f32 %v984, %v1594
  %v1872 = vadd.f32 %v987, %v1597
  %v1873 = vadd.f32 %v992, %v1602
  %v1874 = vadd.f32 %v995, %v1605
  %v1875 = vadd.f32 %v1000, %v1610
  %v1876 = vadd.f32 %v1003, %v1613
  %v1877 = vadd.f32 %v1008, %v1618
  %v1878 = vadd.f32 %v1011, %v1621
  %v1879 = vadd.f32 %v1016, %v1626
  %v1880 = vadd.f32 %v1019, %v1629
  %v1881 = vadd.f32 %v1024, %v1634
  %v1882 = vadd.f32 %v1027, %v1637
  %v1883 = vadd.f32 %v1032, %v1642
  %v1884 = vadd.f32 %v1035, %v1645
  %v1885 = vadd.f32 %v1040, %v1650
  %v1886 = vadd.f32 %v1043, %v1653
  %v1887 = vadd.f32 %v1048, %v1658
  %v1888 = vadd.f32 %v1051, %v1661
  %v1889 = vadd.f32 %v1056, %v1666
  %v1890 = vadd.f32 %v1059, %v1669
  %v1891 = vadd.f32 %v1064, %v1674
  %v1892 = vadd.f32 %v1067, %v1677
  %v1893 = vadd.f32 %v1072, %v1682
  %v1894 = vadd.f32 %v1075, %v1685
  %v1895 = vadd.f32 %v1080, %v1690
  %v1896 = vadd.f32 %v1083, %v1693
  %v1897 = vadd.f32 %v1088, %v1698
  %v1898 = vadd.f32 %v1091, %v1701
  %v1899 = vadd.f32 %v1096, %v1706
  %v1900 = vadd.f32 %v1099, %v1709
  %v1901 = vadd.f32 %v1104, %v1714
  %v1902 = vadd.f32 %v1107, %v1717
  %v1903 = vadd.f32 %v1112, %v1722
  %v1904 = vadd.f32 %v1115, %v1725
  %v1905 = vadd.f32 %v1120, %v1730
  %v1906 = vadd.f32 %v1123, %v1733
  %v1907 = vadd.f32 %v1128, %v1738
  %v1908 = vadd.f32 %v1131, %v1741
  %v1909 = vadd.f32 %v1136, %v1746
  %v1910 = vadd.f32 %v1139, %v1749
  %v1911 = vadd.f32 %v1144, %v1754
  %v1912 = vadd.f32 %v1147, %v1757
  %v1913 = vadd.f32 %v1152, %v1762
  %v1914 = vadd.f32 %v1155, %v1765
  %v1915 = vadd.f32 %v1160, %v1770
  %v1916 = vadd.f32 %v1163, %v1773
  %v1917 = vadd.f32 %v1168, %v1778
  %v1918 = vadd.f32 %v1171, %v1781
  %v1919 = vadd.f32 %v1176, %v1786
  %v1920 = vadd.f32 %v1179, %v1789
  %v1921 = vadd.f32 %v1184, %v1794
  %v1922 = vadd.f32 %v1187, %v1797
  %v1923 = vadd.f32 %v1192, %v1802
  %v1924 = vadd.f32 %v1195, %v1805
  %v1925 = vadd.f32 %v1200, %v1810
  %v1926 = vadd.f32 %v1203, %v1813
  %v1927 = vadd.f32 %v1208, %v1818
  %v1928 = vadd.f32 %v1211, %v1821
  %v1929 = vadd.f32 %v1216, %v1826
  %v1930 = vadd.f32 %v1219, %v1829
  %v1931 = vadd.f32 %v1224, %v1834
  %v1932 = vadd.f32 %v1227, %v1837
  %v1933 = vadd.f32 %v1232, %v1842
  %v1934 = vadd.f32 %v1235, %v1845
  %v1935 = vadd.f32 %v1240, %v1850
  %v1936 = vld [vmem:[%s0 + $0x12] sm:$0xff]
  %v1937 = vld [vmem:[%s0 + $0x1a] sm:$0xff]
  %v1938 = vld [vmem:[%s0 + $0x22] sm:$0xff]
  %v1939 = vld [vmem:[%s0 + $0x2a] sm:$0xff]
  %v1940 = vld [vmem:[%s0 + $0x32] sm:$0xff]
  %v1941 = vld [vmem:[%s0 + $0x3a] sm:$0xff]
  %v1942 = vld [vmem:[%s0 + $0x42] sm:$0xff]
  %v1943 = vld [vmem:[%s0 + $0x4a] sm:$0xff]
  %v1944 = vld [vmem:[%s0 + $0x52] sm:$0xff]
  %v1945 = vld [vmem:[%s0 + $0x5a] sm:$0xff]
  %v1946 = vld [vmem:[%s0 + $0x62] sm:$0xff]
  %v1947 = vld [vmem:[%s0 + $0x6a] sm:$0xff]
  %v1948 = vld [vmem:[%s0 + $0x72] sm:$0xff]
  %v1949 = vld [vmem:[%s0 + $0x7a] sm:$0xff]
  %v1950 = vld [vmem:[%s0 + $0x82] sm:$0xff]
  %v1951 = vld [vmem:[%s0 + $0x8a] sm:$0xff]
  %v1952 = vld [vmem:[%s0 + $0x92] sm:$0xff]
  %v1953 = vld [vmem:[%s0 + $0x9a] sm:$0xff]
  %v1954 = vld [vmem:[%s0 + $0xa2] sm:$0xff]
  %v1955 = vld [vmem:[%s0 + $0xaa] sm:$0xff]
  %v1956 = vld [vmem:[%s0 + $0xb2] sm:$0xff]
  %v1957 = vld [vmem:[%s0 + $0xba] sm:$0xff]
  %v1958 = vld [vmem:[%s0 + $0xc2] sm:$0xff]
  %v1959 = vld [vmem:[%s0 + $0xca] sm:$0xff]
  %v1960 = vld [vmem:[%s0 + $0xd2] sm:$0xff]
  %v1961 = vld [vmem:[%s0 + $0xda] sm:$0xff]
  %v1962 = vld [vmem:[%s0 + $0xe2] sm:$0xff]
  %v1963 = vld [vmem:[%s0 + $0xea] sm:$0xff]
  %v1964 = vld [vmem:[%s0 + $0xf2] sm:$0xff]
  %v1965 = vld [vmem:[%s0 + $0xfa] sm:$0xff]
  %v1966 = vld [vmem:[%s0 + $0x102] sm:$0xff]
  %v1967 = vld [vmem:[%s0 + $0x10a] sm:$0xff]
  %v1968 = vld [vmem:[%s0 + $0x112] sm:$0xff]
  %v1969 = vld [vmem:[%s0 + $0x11a] sm:$0xff]
  %v1970 = vld [vmem:[%s0 + $0x122] sm:$0xff]
  %v1971 = vld [vmem:[%s0 + $0x12a] sm:$0xff]
  %v1972 = vld [vmem:[%s0 + $0x132] sm:$0xff]
  %v1973 = vld [vmem:[%s0 + $0x13a] sm:$0xff]
  %v1974 = vld [vmem:[%s0 + $0x142] sm:$0xff]
  %v1975 = vld [vmem:[%s0 + $0x14a] sm:$0xff]
  %v1976 = vld [vmem:[%s0 + $0x152] sm:$0xff]
  %v1977 = vld [vmem:[%s0 + $0x15a] sm:$0xff]
  %v1978 = vld [vmem:[%s0 + $0x162] sm:$0xff]
  %v1979 = vld [vmem:[%s0 + $0x16a] sm:$0xff]
  %v1980 = vld [vmem:[%s0 + $0x172] sm:$0xff]
  %v1981 = vld [vmem:[%s0 + $0x17a] sm:$0xff]
  %v1982 = vld [vmem:[%s0 + $0x182] sm:$0xff]
  %v1983 = vld [vmem:[%s0 + $0x18a] sm:$0xff]
  %v1984 = vld [vmem:[%s0 + $0x192] sm:$0xff]
  %v1985 = vld [vmem:[%s0 + $0x19a] sm:$0xff]
  %v1986 = vld [vmem:[%s0 + $0x1a2] sm:$0xff]
  %v1987 = vld [vmem:[%s0 + $0x1aa] sm:$0xff]
  %v1988 = vld [vmem:[%s0 + $0x1b2] sm:$0xff]
  %v1989 = vld [vmem:[%s0 + $0x1ba] sm:$0xff]
  %v1990 = vld [vmem:[%s0 + $0x1c2] sm:$0xff]
  %v1991 = vld [vmem:[%s0 + $0x1ca] sm:$0xff]
  %v1992 = vld [vmem:[%s0 + $0x1d2] sm:$0xff]
  %v1993 = vld [vmem:[%s0 + $0x1da] sm:$0xff]
  %v1994 = vld [vmem:[%s0 + $0x1e2] sm:$0xff]
  %v1995 = vld [vmem:[%s0 + $0x1ea] sm:$0xff]
  %v1996 = vld [vmem:[%s0 + $0x1f2] sm:$0xff]
  %v1997 = vld [vmem:[%s0 + $0x1fa] sm:$0xff]
  %v1998 = vld [vmem:[%s0 + $0x202] sm:$0xff]
  %v1999 = vld [vmem:[%s0 + $0x20a] sm:$0xff]
  %v2000 = vld [vmem:[%s0 + $0x212] sm:$0xff]
  %v2001 = vld [vmem:[%s0 + $0x21a] sm:$0xff]
  %v2002 = vld [vmem:[%s0 + $0x222] sm:$0xff]
  %v2003 = vld [vmem:[%s0 + $0x22a] sm:$0xff]
  %v2004 = vld [vmem:[%s0 + $0x232] sm:$0xff]
  %v2005 = vld [vmem:[%s0 + $0x23a] sm:$0xff]
  %v2006 = vld [vmem:[%s0 + $0x242] sm:$0xff]
  %v2007 = vld [vmem:[%s0 + $0x24a] sm:$0xff]
  %v2008 = vld [vmem:[%s0 + $0x252] sm:$0xff]
  %v2009 = vld [vmem:[%s0 + $0x25a] sm:$0xff]
  %v2010 = vld [vmem:[%s0 + $0x262] sm:$0xff]
  %v2011 = vld [vmem:[%s0 + $0x26a] sm:$0xff]
  %v2012 = vld [vmem:[%s0 + $0x272] sm:$0xff]
  %v2013 = vld [vmem:[%s0 + $0x27a] sm:$0xff]
  %v2014 = vld [vmem:[%s0 + $0x282] sm:$0xff]
  %v2015 = vld [vmem:[%s0 + $0x28a] sm:$0xff]
  %v2016 = vld [vmem:[%s0 + $0x292] sm:$0xff]
  %v2017 = vpack.c.bf16 %v1937, %v1936
  %v2018 = vpack.c.bf16 %v1939, %v1938
  %v2019 = vpack.c.bf16 %v1941, %v1940
  %v2020 = vpack.c.bf16 %v1943, %v1942
  %v2021 = vpack.c.bf16 %v1945, %v1944
  %v2022 = vpack.c.bf16 %v1947, %v1946
  %v2023 = vpack.c.bf16 %v1949, %v1948
  %v2024 = vpack.c.bf16 %v1951, %v1950
  %v2025 = vpack.c.bf16 %v1953, %v1952
  %v2026 = vpack.c.bf16 %v1955, %v1954
  %v2027 = vpack.c.bf16 %v1957, %v1956
  %v2028 = vpack.c.bf16 %v1959, %v1958
  %v2029 = vpack.c.bf16 %v1961, %v1960
  %v2030 = vpack.c.bf16 %v1963, %v1962
  %v2031 = vpack.c.bf16 %v1965, %v1964
  %v2032 = vpack.c.bf16 %v1967, %v1966
  %v2033 = vpack.c.bf16 %v1969, %v1968
  %v2034 = vpack.c.bf16 %v1971, %v1970
  %v2035 = vpack.c.bf16 %v1973, %v1972
  %v2036 = vpack.c.bf16 %v1975, %v1974
  %v2037 = vpack.c.bf16 %v1977, %v1976
  %v2038 = vpack.c.bf16 %v1979, %v1978
  %v2039 = vpack.c.bf16 %v1981, %v1980
  %v2040 = vpack.c.bf16 %v1983, %v1982
  %v2041 = vpack.c.bf16 %v1985, %v1984
  %v2042 = vpack.c.bf16 %v1987, %v1986
  %v2043 = vpack.c.bf16 %v1989, %v1988
  %v2044 = vpack.c.bf16 %v1991, %v1990
  %v2045 = vpack.c.bf16 %v1993, %v1992
  %v2046 = vpack.c.bf16 %v1995, %v1994
  %v2047 = vpack.c.bf16 %v1997, %v1996
  %v2048 = vpack.c.bf16 %v1999, %v1998
  %v2049 = vpack.c.bf16 %v2001, %v2000
  %v2050 = vpack.c.bf16 %v2003, %v2002
  %v2051 = vpack.c.bf16 %v2005, %v2004
  %v2052 = vpack.c.bf16 %v2007, %v2006
  %v2053 = vpack.c.bf16 %v2009, %v2008
  %v2054 = vpack.c.bf16 %v2011, %v2010
  %v2055 = vpack.c.bf16 %v2013, %v2012
  %v2056 = vpack.c.bf16 %v2015, %v2014
  %v2057 = vpack.c.bf16 %v2016, %v2016
  %s2058 = scalar_lea.vmem %s1, 6
  %v2059 = vld [vmem:[%s2058] sm:$0x3]
  %v2061 = vsel %vm271, %v2017, 0
  %v2064 = vsel %vm271, %v2018, 0
  %v2067 = vsel %vm271, %v2019, 0
  %v2070 = vsel %vm271, %v2020, 0
  %v2073 = vsel %vm271, %v2021, 0
  %v2076 = vsel %vm271, %v2022, 0
  %v2079 = vsel %vm271, %v2023, 0
  %v2082 = vsel %vm271, %v2024, 0
  %v2085 = vsel %vm271, %v2025, 0
  %v2088 = vsel %vm271, %v2026, 0
  %v2091 = vsel %vm271, %v2027, 0
  %v2094 = vsel %vm271, %v2028, 0
  %v2097 = vsel %vm271, %v2029, 0
  %v2100 = vsel %vm271, %v2030, 0
  %v2103 = vsel %vm271, %v2031, 0
  %v2106 = vsel %vm271, %v2032, 0
  %v2109 = vsel %vm271, %v2033, 0
  %v2112 = vsel %vm271, %v2034, 0
  %v2115 = vsel %vm271, %v2035, 0
  %v2118 = vsel %vm271, %v2036, 0
  %v2121 = vsel %vm271, %v2037, 0
  %v2124 = vsel %vm271, %v2038, 0
  %v2127 = vsel %vm271, %v2039, 0
  %v2130 = vsel %vm271, %v2040, 0
  %v2133 = vsel %vm271, %v2041, 0
  %v2136 = vsel %vm271, %v2042, 0
  %v2139 = vsel %vm271, %v2043, 0
  %v2142 = vsel %vm271, %v2044, 0
  %v2145 = vsel %vm271, %v2045, 0
  %v2148 = vsel %vm271, %v2046, 0
  %v2151 = vsel %vm271, %v2047, 0
  %v2154 = vsel %vm271, %v2048, 0
  %v2157 = vsel %vm271, %v2049, 0
  %v2160 = vsel %vm271, %v2050, 0
  %v2163 = vsel %vm271, %v2051, 0
  %v2166 = vsel %vm271, %v2052, 0
  %v2169 = vsel %vm271, %v2053, 0
  %v2172 = vsel %vm271, %v2054, 0
  %v2175 = vsel %vm271, %v2055, 0
  %v2178 = vsel %vm271, %v2056, 0
  %v2181 = vsel %vm271, %v2057, 0
  %v2184 = vsel %vm395, %v2059, 0
  %2186 = vmatprep.subr.bf16.mxu0 0
  %2187 = vmatpush1.bf16.msra.mxu0 0
  %2188 = vmatprep.subr.bf16.mxu0 0
  %2189 = vmatpush1.bf16.msra.mxu0 0
  %2190 = vmatprep.subr.bf16.mxu0 0
  %2191 = vmatpush1.bf16.msra.mxu0 0
  %2192 = vmatprep.subr.bf16.mxu0 0
  %2193 = vmatpush1.bf16.msra.mxu0 0
  %2194 = vmatprep.subr.bf16.mxu0 0
  %2195 = vmatpush1.bf16.msra.mxu0 0
  %2196 = vmatprep.subr.bf16.mxu0 0
  %2197 = vmatpush1.bf16.msra.mxu0 0
  %2198 = vmatprep.subr.bf16.mxu0 0
  %2199 = vmatpush1.bf16.msra.mxu0 0
  %2200 = vmatprep.subr.bf16.mxu0 0
  %2201 = vmatpush1.bf16.msra.mxu0 %v2184
  %2202 = vmatprep.subr.bf16.mxu0 0
  %2203 = vmatpush2.bf16.msra.mxu0 0
  %2204 = vmatprep.subr.bf16.mxu0 0
  %2205 = vmatpush2.bf16.msra.mxu0 0
  %2206 = vmatprep.subr.bf16.mxu0 0
  %2207 = vmatpush2.bf16.msra.mxu0 0
  %2208 = vmatprep.subr.bf16.mxu0 0
  %2209 = vmatpush2.bf16.msra.mxu0 0
  %2210 = vmatprep.subr.bf16.mxu0 0
  %2211 = vmatpush2.bf16.msra.mxu0 0
  %2212 = vmatprep.subr.bf16.mxu0 0
  %2213 = vmatpush2.bf16.msra.mxu0 0
  %2214 = vmatprep.subr.bf16.mxu0 0
  %2215 = vmatpush2.bf16.msra.mxu0 0
  %2216 = vmatprep.subr.bf16.mxu0 0
  %2217 = vmatpush2.bf16.msra.mxu0 0
  %2218 = vmatprep.mubr.bf16.mxu0 0
  %2219 = vmatmul.mubr.bf16.gmra.mxu0 %v2061
  %v2220 = vpop.f32.mrf.mxu0
  %v2221 = vadd.f32 0.0, %v2220
  %v2222 = vpop.f32.mrf.mxu0
  %v2223 = vpop.f32.mrf.mxu0
  %v2224 = vadd.f32 0.0, %v2223
  %v2225 = vpop.f32.mrf.mxu0
  %2226 = vmatprep.mubr.bf16.mxu0 0
  %2227 = vmatmul.mubr.bf16.gmra.mxu0 %v2064
  %v2228 = vpop.f32.mrf.mxu0
  %v2229 = vadd.f32 0.0, %v2228
  %v2230 = vpop.f32.mrf.mxu0
  %v2231 = vpop.f32.mrf.mxu0
  %v2232 = vadd.f32 0.0, %v2231
  %v2233 = vpop.f32.mrf.mxu0
  %2234 = vmatprep.mubr.bf16.mxu0 0
  %2235 = vmatmul.mubr.bf16.gmra.mxu0 %v2067
  %v2236 = vpop.f32.mrf.mxu0
  %v2237 = vadd.f32 0.0, %v2236
  %v2238 = vpop.f32.mrf.mxu0
  %v2239 = vpop.f32.mrf.mxu0
  %v2240 = vadd.f32 0.0, %v2239
  %v2241 = vpop.f32.mrf.mxu0
  %2242 = vmatprep.mubr.bf16.mxu0 0
  %2243 = vmatmul.mubr.bf16.gmra.mxu0 %v2070
  %v2244 = vpop.f32.mrf.mxu0
  %v2245 = vadd.f32 0.0, %v2244
  %v2246 = vpop.f32.mrf.mxu0
  %v2247 = vpop.f32.mrf.mxu0
  %v2248 = vadd.f32 0.0, %v2247
  %v2249 = vpop.f32.mrf.mxu0
  %2250 = vmatprep.mubr.bf16.mxu0 0
  %2251 = vmatmul.mubr.bf16.gmra.mxu0 %v2073
  %v2252 = vpop.f32.mrf.mxu0
  %v2253 = vadd.f32 0.0, %v2252
  %v2254 = vpop.f32.mrf.mxu0
  %v2255 = vpop.f32.mrf.mxu0
  %v2256 = vadd.f32 0.0, %v2255
  %v2257 = vpop.f32.mrf.mxu0
  %2258 = vmatprep.mubr.bf16.mxu0 0
  %2259 = vmatmul.mubr.bf16.gmra.mxu0 %v2076
  %v2260 = vpop.f32.mrf.mxu0
  %v2261 = vadd.f32 0.0, %v2260
  %v2262 = vpop.f32.mrf.mxu0
  %v2263 = vpop.f32.mrf.mxu0
  %v2264 = vadd.f32 0.0, %v2263
  %v2265 = vpop.f32.mrf.mxu0
  %2266 = vmatprep.mubr.bf16.mxu0 0
  %2267 = vmatmul.mubr.bf16.gmra.mxu0 %v2079
  %v2268 = vpop.f32.mrf.mxu0
  %v2269 = vadd.f32 0.0, %v2268
  %v2270 = vpop.f32.mrf.mxu0
  %v2271 = vpop.f32.mrf.mxu0
  %v2272 = vadd.f32 0.0, %v2271
  %v2273 = vpop.f32.mrf.mxu0
  %2274 = vmatprep.mubr.bf16.mxu0 0
  %2275 = vmatmul.mubr.bf16.gmra.mxu0 %v2082
  %v2276 = vpop.f32.mrf.mxu0
  %v2277 = vadd.f32 0.0, %v2276
  %v2278 = vpop.f32.mrf.mxu0
  %v2279 = vpop.f32.mrf.mxu0
  %v2280 = vadd.f32 0.0, %v2279
  %v2281 = vpop.f32.mrf.mxu0
  %2282 = vmatprep.mubr.bf16.mxu0 0
  %2283 = vmatmul.mubr.bf16.gmra.mxu0 %v2085
  %v2284 = vpop.f32.mrf.mxu0
  %v2285 = vadd.f32 0.0, %v2284
  %v2286 = vpop.f32.mrf.mxu0
  %v2287 = vpop.f32.mrf.mxu0
  %v2288 = vadd.f32 0.0, %v2287
  %v2289 = vpop.f32.mrf.mxu0
  %2290 = vmatprep.mubr.bf16.mxu0 0
  %2291 = vmatmul.mubr.bf16.gmra.mxu0 %v2088
  %v2292 = vpop.f32.mrf.mxu0
  %v2293 = vadd.f32 0.0, %v2292
  %v2294 = vpop.f32.mrf.mxu0
  %v2295 = vpop.f32.mrf.mxu0
  %v2296 = vadd.f32 0.0, %v2295
  %v2297 = vpop.f32.mrf.mxu0
  %2298 = vmatprep.mubr.bf16.mxu0 0
  %2299 = vmatmul.mubr.bf16.gmra.mxu0 %v2091
  %v2300 = vpop.f32.mrf.mxu0
  %v2301 = vadd.f32 0.0, %v2300
  %v2302 = vpop.f32.mrf.mxu0
  %v2303 = vpop.f32.mrf.mxu0
  %v2304 = vadd.f32 0.0, %v2303
  %v2305 = vpop.f32.mrf.mxu0
  %2306 = vmatprep.mubr.bf16.mxu0 0
  %2307 = vmatmul.mubr.bf16.gmra.mxu0 %v2094
  %v2308 = vpop.f32.mrf.mxu0
  %v2309 = vadd.f32 0.0, %v2308
  %v2310 = vpop.f32.mrf.mxu0
  %v2311 = vpop.f32.mrf.mxu0
  %v2312 = vadd.f32 0.0, %v2311
  %v2313 = vpop.f32.mrf.mxu0
  %2314 = vmatprep.mubr.bf16.mxu0 0
  %2315 = vmatmul.mubr.bf16.gmra.mxu0 %v2097
  %v2316 = vpop.f32.mrf.mxu0
  %v2317 = vadd.f32 0.0, %v2316
  %v2318 = vpop.f32.mrf.mxu0
  %v2319 = vpop.f32.mrf.mxu0
  %v2320 = vadd.f32 0.0, %v2319
  %v2321 = vpop.f32.mrf.mxu0
  %2322 = vmatprep.mubr.bf16.mxu0 0
  %2323 = vmatmul.mubr.bf16.gmra.mxu0 %v2100
  %v2324 = vpop.f32.mrf.mxu0
  %v2325 = vadd.f32 0.0, %v2324
  %v2326 = vpop.f32.mrf.mxu0
  %v2327 = vpop.f32.mrf.mxu0
  %v2328 = vadd.f32 0.0, %v2327
  %v2329 = vpop.f32.mrf.mxu0
  %2330 = vmatprep.mubr.bf16.mxu0 0
  %2331 = vmatmul.mubr.bf16.gmra.mxu0 %v2103
  %v2332 = vpop.f32.mrf.mxu0
  %v2333 = vadd.f32 0.0, %v2332
  %v2334 = vpop.f32.mrf.mxu0
  %v2335 = vpop.f32.mrf.mxu0
  %v2336 = vadd.f32 0.0, %v2335
  %v2337 = vpop.f32.mrf.mxu0
  %2338 = vmatprep.mubr.bf16.mxu0 0
  %2339 = vmatmul.mubr.bf16.gmra.mxu0 %v2106
  %v2340 = vpop.f32.mrf.mxu0
  %v2341 = vadd.f32 0.0, %v2340
  %v2342 = vpop.f32.mrf.mxu0
  %v2343 = vpop.f32.mrf.mxu0
  %v2344 = vadd.f32 0.0, %v2343
  %v2345 = vpop.f32.mrf.mxu0
  %2346 = vmatprep.mubr.bf16.mxu0 0
  %2347 = vmatmul.mubr.bf16.gmra.mxu0 %v2109
  %v2348 = vpop.f32.mrf.mxu0
  %v2349 = vadd.f32 0.0, %v2348
  %v2350 = vpop.f32.mrf.mxu0
  %v2351 = vpop.f32.mrf.mxu0
  %v2352 = vadd.f32 0.0, %v2351
  %v2353 = vpop.f32.mrf.mxu0
  %2354 = vmatprep.mubr.bf16.mxu0 0
  %2355 = vmatmul.mubr.bf16.gmra.mxu0 %v2112
  %v2356 = vpop.f32.mrf.mxu0
  %v2357 = vadd.f32 0.0, %v2356
  %v2358 = vpop.f32.mrf.mxu0
  %v2359 = vpop.f32.mrf.mxu0
  %v2360 = vadd.f32 0.0, %v2359
  %v2361 = vpop.f32.mrf.mxu0
  %2362 = vmatprep.mubr.bf16.mxu0 0
  %2363 = vmatmul.mubr.bf16.gmra.mxu0 %v2115
  %v2364 = vpop.f32.mrf.mxu0
  %v2365 = vadd.f32 0.0, %v2364
  %v2366 = vpop.f32.mrf.mxu0
  %v2367 = vpop.f32.mrf.mxu0
  %v2368 = vadd.f32 0.0, %v2367
  %v2369 = vpop.f32.mrf.mxu0
  %2370 = vmatprep.mubr.bf16.mxu0 0
  %2371 = vmatmul.mubr.bf16.gmra.mxu0 %v2118
  %v2372 = vpop.f32.mrf.mxu0
  %v2373 = vadd.f32 0.0, %v2372
  %v2374 = vpop.f32.mrf.mxu0
  %v2375 = vpop.f32.mrf.mxu0
  %v2376 = vadd.f32 0.0, %v2375
  %v2377 = vpop.f32.mrf.mxu0
  %2378 = vmatprep.mubr.bf16.mxu0 0
  %2379 = vmatmul.mubr.bf16.gmra.mxu0 %v2121
  %v2380 = vpop.f32.mrf.mxu0
  %v2381 = vadd.f32 0.0, %v2380
  %v2382 = vpop.f32.mrf.mxu0
  %v2383 = vpop.f32.mrf.mxu0
  %v2384 = vadd.f32 0.0, %v2383
  %v2385 = vpop.f32.mrf.mxu0
  %2386 = vmatprep.mubr.bf16.mxu0 0
  %2387 = vmatmul.mubr.bf16.gmra.mxu0 %v2124
  %v2388 = vpop.f32.mrf.mxu0
  %v2389 = vadd.f32 0.0, %v2388
  %v2390 = vpop.f32.mrf.mxu0
  %v2391 = vpop.f32.mrf.mxu0
  %v2392 = vadd.f32 0.0, %v2391
  %v2393 = vpop.f32.mrf.mxu0
  %2394 = vmatprep.mubr.bf16.mxu0 0
  %2395 = vmatmul.mubr.bf16.gmra.mxu0 %v2127
  %v2396 = vpop.f32.mrf.mxu0
  %v2397 = vadd.f32 0.0, %v2396
  %v2398 = vpop.f32.mrf.mxu0
  %v2399 = vpop.f32.mrf.mxu0
  %v2400 = vadd.f32 0.0, %v2399
  %v2401 = vpop.f32.mrf.mxu0
  %2402 = vmatprep.mubr.bf16.mxu0 0
  %2403 = vmatmul.mubr.bf16.gmra.mxu0 %v2130
  %v2404 = vpop.f32.mrf.mxu0
  %v2405 = vadd.f32 0.0, %v2404
  %v2406 = vpop.f32.mrf.mxu0
  %v2407 = vpop.f32.mrf.mxu0
  %v2408 = vadd.f32 0.0, %v2407
  %v2409 = vpop.f32.mrf.mxu0
  %2410 = vmatprep.mubr.bf16.mxu0 0
  %2411 = vmatmul.mubr.bf16.gmra.mxu0 %v2133
  %v2412 = vpop.f32.mrf.mxu0
  %v2413 = vadd.f32 0.0, %v2412
  %v2414 = vpop.f32.mrf.mxu0
  %v2415 = vpop.f32.mrf.mxu0
  %v2416 = vadd.f32 0.0, %v2415
  %v2417 = vpop.f32.mrf.mxu0
  %2418 = vmatprep.mubr.bf16.mxu0 0
  %2419 = vmatmul.mubr.bf16.gmra.mxu0 %v2136
  %v2420 = vpop.f32.mrf.mxu0
  %v2421 = vadd.f32 0.0, %v2420
  %v2422 = vpop.f32.mrf.mxu0
  %v2423 = vpop.f32.mrf.mxu0
  %v2424 = vadd.f32 0.0, %v2423
  %v2425 = vpop.f32.mrf.mxu0
  %2426 = vmatprep.mubr.bf16.mxu0 0
  %2427 = vmatmul.mubr.bf16.gmra.mxu0 %v2139
  %v2428 = vpop.f32.mrf.mxu0
  %v2429 = vadd.f32 0.0, %v2428
  %v2430 = vpop.f32.mrf.mxu0
  %v2431 = vpop.f32.mrf.mxu0
  %v2432 = vadd.f32 0.0, %v2431
  %v2433 = vpop.f32.mrf.mxu0
  %2434 = vmatprep.mubr.bf16.mxu0 0
  %2435 = vmatmul.mubr.bf16.gmra.mxu0 %v2142
  %v2436 = vpop.f32.mrf.mxu0
  %v2437 = vadd.f32 0.0, %v2436
  %v2438 = vpop.f32.mrf.mxu0
  %v2439 = vpop.f32.mrf.mxu0
  %v2440 = vadd.f32 0.0, %v2439
  %v2441 = vpop.f32.mrf.mxu0
  %2442 = vmatprep.mubr.bf16.mxu0 0
  %2443 = vmatmul.mubr.bf16.gmra.mxu0 %v2145
  %v2444 = vpop.f32.mrf.mxu0
  %v2445 = vadd.f32 0.0, %v2444
  %v2446 = vpop.f32.mrf.mxu0
  %v2447 = vpop.f32.mrf.mxu0
  %v2448 = vadd.f32 0.0, %v2447
  %v2449 = vpop.f32.mrf.mxu0
  %2450 = vmatprep.mubr.bf16.mxu0 0
  %2451 = vmatmul.mubr.bf16.gmra.mxu0 %v2148
  %v2452 = vpop.f32.mrf.mxu0
  %v2453 = vadd.f32 0.0, %v2452
  %v2454 = vpop.f32.mrf.mxu0
  %v2455 = vpop.f32.mrf.mxu0
  %v2456 = vadd.f32 0.0, %v2455
  %v2457 = vpop.f32.mrf.mxu0
  %2458 = vmatprep.mubr.bf16.mxu0 0
  %2459 = vmatmul.mubr.bf16.gmra.mxu0 %v2151
  %v2460 = vpop.f32.mrf.mxu0
  %v2461 = vadd.f32 0.0, %v2460
  %v2462 = vpop.f32.mrf.mxu0
  %v2463 = vpop.f32.mrf.mxu0
  %v2464 = vadd.f32 0.0, %v2463
  %v2465 = vpop.f32.mrf.mxu0
  %2466 = vmatprep.mubr.bf16.mxu0 0
  %2467 = vmatmul.mubr.bf16.gmra.mxu0 %v2154
  %v2468 = vpop.f32.mrf.mxu0
  %v2469 = vadd.f32 0.0, %v2468
  %v2470 = vpop.f32.mrf.mxu0
  %v2471 = vpop.f32.mrf.mxu0
  %v2472 = vadd.f32 0.0, %v2471
  %v2473 = vpop.f32.mrf.mxu0
  %2474 = vmatprep.mubr.bf16.mxu0 0
  %2475 = vmatmul.mubr.bf16.gmra.mxu0 %v2157
  %v2476 = vpop.f32.mrf.mxu0
  %v2477 = vadd.f32 0.0, %v2476
  %v2478 = vpop.f32.mrf.mxu0
  %v2479 = vpop.f32.mrf.mxu0
  %v2480 = vadd.f32 0.0, %v2479
  %v2481 = vpop.f32.mrf.mxu0
  %2482 = vmatprep.mubr.bf16.mxu0 0
  %2483 = vmatmul.mubr.bf16.gmra.mxu0 %v2160
  %v2484 = vpop.f32.mrf.mxu0
  %v2485 = vadd.f32 0.0, %v2484
  %v2486 = vpop.f32.mrf.mxu0
  %v2487 = vpop.f32.mrf.mxu0
  %v2488 = vadd.f32 0.0, %v2487
  %v2489 = vpop.f32.mrf.mxu0
  %2490 = vmatprep.mubr.bf16.mxu0 0
  %2491 = vmatmul.mubr.bf16.gmra.mxu0 %v2163
  %v2492 = vpop.f32.mrf.mxu0
  %v2493 = vadd.f32 0.0, %v2492
  %v2494 = vpop.f32.mrf.mxu0
  %v2495 = vpop.f32.mrf.mxu0
  %v2496 = vadd.f32 0.0, %v2495
  %v2497 = vpop.f32.mrf.mxu0
  %2498 = vmatprep.mubr.bf16.mxu0 0
  %2499 = vmatmul.mubr.bf16.gmra.mxu0 %v2166
  %v2500 = vpop.f32.mrf.mxu0
  %v2501 = vadd.f32 0.0, %v2500
  %v2502 = vpop.f32.mrf.mxu0
  %v2503 = vpop.f32.mrf.mxu0
  %v2504 = vadd.f32 0.0, %v2503
  %v2505 = vpop.f32.mrf.mxu0
  %2506 = vmatprep.mubr.bf16.mxu0 0
  %2507 = vmatmul.mubr.bf16.gmra.mxu0 %v2169
  %v2508 = vpop.f32.mrf.mxu0
  %v2509 = vadd.f32 0.0, %v2508
  %v2510 = vpop.f32.mrf.mxu0
  %v2511 = vpop.f32.mrf.mxu0
  %v2512 = vadd.f32 0.0, %v2511
  %v2513 = vpop.f32.mrf.mxu0
  %2514 = vmatprep.mubr.bf16.mxu0 0
  %2515 = vmatmul.mubr.bf16.gmra.mxu0 %v2172
  %v2516 = vpop.f32.mrf.mxu0
  %v2517 = vadd.f32 0.0, %v2516
  %v2518 = vpop.f32.mrf.mxu0
  %v2519 = vpop.f32.mrf.mxu0
  %v2520 = vadd.f32 0.0, %v2519
  %v2521 = vpop.f32.mrf.mxu0
  %2522 = vmatprep.mubr.bf16.mxu0 0
  %2523 = vmatmul.mubr.bf16.gmra.mxu0 %v2175
  %v2524 = vpop.f32.mrf.mxu0
  %v2525 = vadd.f32 0.0, %v2524
  %v2526 = vpop.f32.mrf.mxu0
  %v2527 = vpop.f32.mrf.mxu0
  %v2528 = vadd.f32 0.0, %v2527
  %v2529 = vpop.f32.mrf.mxu0
  %2530 = vmatprep.mubr.bf16.mxu0 0
  %2531 = vmatmul.mubr.bf16.gmra.mxu0 %v2178
  %v2532 = vpop.f32.mrf.mxu0
  %v2533 = vadd.f32 0.0, %v2532
  %v2534 = vpop.f32.mrf.mxu0
  %v2535 = vpop.f32.mrf.mxu0
  %v2536 = vadd.f32 0.0, %v2535
  %v2537 = vpop.f32.mrf.mxu0
  %2538 = vmatprep.mubr.bf16.mxu0 0
  %2539 = vmatmul.mubr.bf16.gmra.mxu0 %v2181
  %v2540 = vpop.f32.mrf.mxu0
  %v2541 = vadd.f32 0.0, %v2540
  %v2542 = vpop.f32.mrf.mxu0
  %v2543 = vpop.f32.mrf.mxu0
  %v2544 = vpop.f32.mrf.mxu0
  %2545 = vdwg.mxu0
  %v2546 = vadd.f32 %v1855, %v2221
  %v2547 = vadd.f32 %v1856, %v2224
  %v2548 = vadd.f32 %v1857, %v2229
  %v2549 = vadd.f32 %v1858, %v2232
  %v2550 = vadd.f32 %v1859, %v2237
  %v2551 = vadd.f32 %v1860, %v2240
  %v2552 = vadd.f32 %v1861, %v2245
  %v2553 = vadd.f32 %v1862, %v2248
  %v2554 = vadd.f32 %v1863, %v2253
  %v2555 = vadd.f32 %v1864, %v2256
  %v2556 = vadd.f32 %v1865, %v2261
  %v2557 = vadd.f32 %v1866, %v2264
  %v2558 = vadd.f32 %v1867, %v2269
  %v2559 = vadd.f32 %v1868, %v2272
  %v2560 = vadd.f32 %v1869, %v2277
  %v2561 = vadd.f32 %v1870, %v2280
  %v2562 = vadd.f32 %v1871, %v2285
  %v2563 = vadd.f32 %v1872, %v2288
  %v2564 = vadd.f32 %v1873, %v2293
  %v2565 = vadd.f32 %v1874, %v2296
  %v2566 = vadd.f32 %v1875, %v2301
  %v2567 = vadd.f32 %v1876, %v2304
  %v2568 = vadd.f32 %v1877, %v2309
  %v2569 = vadd.f32 %v1878, %v2312
  %v2570 = vadd.f32 %v1879, %v2317
  %v2571 = vadd.f32 %v1880, %v2320
  %v2572 = vadd.f32 %v1881, %v2325
  %v2573 = vadd.f32 %v1882, %v2328
  %v2574 = vadd.f32 %v1883, %v2333
  %v2575 = vadd.f32 %v1884, %v2336
  %v2576 = vadd.f32 %v1885, %v2341
  %v2577 = vadd.f32 %v1886, %v2344
  %v2578 = vadd.f32 %v1887, %v2349
  %v2579 = vadd.f32 %v1888, %v2352
  %v2580 = vadd.f32 %v1889, %v2357
  %v2581 = vadd.f32 %v1890, %v2360
  %v2582 = vadd.f32 %v1891, %v2365
  %v2583 = vadd.f32 %v1892, %v2368
  %v2584 = vadd.f32 %v1893, %v2373
  %v2585 = vadd.f32 %v1894, %v2376
  %v2586 = vadd.f32 %v1895, %v2381
  %v2587 = vadd.f32 %v1896, %v2384
  %v2588 = vadd.f32 %v1897, %v2389
  %v2589 = vadd.f32 %v1898, %v2392
  %v2590 = vadd.f32 %v1899, %v2397
  %v2591 = vadd.f32 %v1900, %v2400
  %v2592 = vadd.f32 %v1901, %v2405
  %v2593 = vadd.f32 %v1902, %v2408
  %v2594 = vadd.f32 %v1903, %v2413
  %v2595 = vadd.f32 %v1904, %v2416
  %v2596 = vadd.f32 %v1905, %v2421
  %v2597 = vadd.f32 %v1906, %v2424
  %v2598 = vadd.f32 %v1907, %v2429
  %v2599 = vadd.f32 %v1908, %v2432
  %v2600 = vadd.f32 %v1909, %v2437
  %v2601 = vadd.f32 %v1910, %v2440
  %v2602 = vadd.f32 %v1911, %v2445
  %v2603 = vadd.f32 %v1912, %v2448
  %v2604 = vadd.f32 %v1913, %v2453
  %v2605 = vadd.f32 %v1914, %v2456
  %v2606 = vadd.f32 %v1915, %v2461
  %v2607 = vadd.f32 %v1916, %v2464
  %v2608 = vadd.f32 %v1917, %v2469
  %v2609 = vadd.f32 %v1918, %v2472
  %v2610 = vadd.f32 %v1919, %v2477
  %v2611 = vadd.f32 %v1920, %v2480
  %v2612 = vadd.f32 %v1921, %v2485
  %v2613 = vadd.f32 %v1922, %v2488
  %v2614 = vadd.f32 %v1923, %v2493
  %v2615 = vadd.f32 %v1924, %v2496
  %v2616 = vadd.f32 %v1925, %v2501
  %v2617 = vadd.f32 %v1926, %v2504
  %v2618 = vadd.f32 %v1927, %v2509
  %v2619 = vadd.f32 %v1928, %v2512
  %v2620 = vadd.f32 %v1929, %v2517
  %v2621 = vadd.f32 %v1930, %v2520
  %v2622 = vadd.f32 %v1931, %v2525
  %v2623 = vadd.f32 %v1932, %v2528
  %v2624 = vadd.f32 %v1933, %v2533
  %v2625 = vadd.f32 %v1934, %v2536
  %v2626 = vadd.f32 %v1935, %v2541
  %v2627 = vld [vmem:[%s0 + $0x13] sm:$0xff]
  %v2628 = vld [vmem:[%s0 + $0x1b] sm:$0xff]
  %v2629 = vld [vmem:[%s0 + $0x23] sm:$0xff]
  %v2630 = vld [vmem:[%s0 + $0x2b] sm:$0xff]
  %v2631 = vld [vmem:[%s0 + $0x33] sm:$0xff]
  %v2632 = vld [vmem:[%s0 + $0x3b] sm:$0xff]
  %v2633 = vld [vmem:[%s0 + $0x43] sm:$0xff]
  %v2634 = vld [vmem:[%s0 + $0x4b] sm:$0xff]
  %v2635 = vld [vmem:[%s0 + $0x53] sm:$0xff]
  %v2636 = vld [vmem:[%s0 + $0x5b] sm:$0xff]
  %v2637 = vld [vmem:[%s0 + $0x63] sm:$0xff]
  %v2638 = vld [vmem:[%s0 + $0x6b] sm:$0xff]
  %v2639 = vld [vmem:[%s0 + $0x73] sm:$0xff]
  %v2640 = vld [vmem:[%s0 + $0x7b] sm:$0xff]
  %v2641 = vld [vmem:[%s0 + $0x83] sm:$0xff]
  %v2642 = vld [vmem:[%s0 + $0x8b] sm:$0xff]
  %v2643 = vld [vmem:[%s0 + $0x93] sm:$0xff]
  %v2644 = vld [vmem:[%s0 + $0x9b] sm:$0xff]
  %v2645 = vld [vmem:[%s0 + $0xa3] sm:$0xff]
  %v2646 = vld [vmem:[%s0 + $0xab] sm:$0xff]
  %v2647 = vld [vmem:[%s0 + $0xb3] sm:$0xff]
  %v2648 = vld [vmem:[%s0 + $0xbb] sm:$0xff]
  %v2649 = vld [vmem:[%s0 + $0xc3] sm:$0xff]
  %v2650 = vld [vmem:[%s0 + $0xcb] sm:$0xff]
  %v2651 = vld [vmem:[%s0 + $0xd3] sm:$0xff]
  %v2652 = vld [vmem:[%s0 + $0xdb] sm:$0xff]
  %v2653 = vld [vmem:[%s0 + $0xe3] sm:$0xff]
  %v2654 = vld [vmem:[%s0 + $0xeb] sm:$0xff]
  %v2655 = vld [vmem:[%s0 + $0xf3] sm:$0xff]
  %v2656 = vld [vmem:[%s0 + $0xfb] sm:$0xff]
  %v2657 = vld [vmem:[%s0 + $0x103] sm:$0xff]
  %v2658 = vld [vmem:[%s0 + $0x10b] sm:$0xff]
  %v2659 = vld [vmem:[%s0 + $0x113] sm:$0xff]
  %v2660 = vld [vmem:[%s0 + $0x11b] sm:$0xff]
  %v2661 = vld [vmem:[%s0 + $0x123] sm:$0xff]
  %v2662 = vld [vmem:[%s0 + $0x12b] sm:$0xff]
  %v2663 = vld [vmem:[%s0 + $0x133] sm:$0xff]
  %v2664 = vld [vmem:[%s0 + $0x13b] sm:$0xff]
  %v2665 = vld [vmem:[%s0 + $0x143] sm:$0xff]
  %v2666 = vld [vmem:[%s0 + $0x14b] sm:$0xff]
  %v2667 = vld [vmem:[%s0 + $0x153] sm:$0xff]
  %v2668 = vld [vmem:[%s0 + $0x15b] sm:$0xff]
  %v2669 = vld [vmem:[%s0 + $0x163] sm:$0xff]
  %v2670 = vld [vmem:[%s0 + $0x16b] sm:$0xff]
  %v2671 = vld [vmem:[%s0 + $0x173] sm:$0xff]
  %v2672 = vld [vmem:[%s0 + $0x17b] sm:$0xff]
  %v2673 = vld [vmem:[%s0 + $0x183] sm:$0xff]
  %v2674 = vld [vmem:[%s0 + $0x18b] sm:$0xff]
  %v2675 = vld [vmem:[%s0 + $0x193] sm:$0xff]
  %v2676 = vld [vmem:[%s0 + $0x19b] sm:$0xff]
  %v2677 = vld [vmem:[%s0 + $0x1a3] sm:$0xff]
  %v2678 = vld [vmem:[%s0 + $0x1ab] sm:$0xff]
  %v2679 = vld [vmem:[%s0 + $0x1b3] sm:$0xff]
  %v2680 = vld [vmem:[%s0 + $0x1bb] sm:$0xff]
  %v2681 = vld [vmem:[%s0 + $0x1c3] sm:$0xff]
  %v2682 = vld [vmem:[%s0 + $0x1cb] sm:$0xff]
  %v2683 = vld [vmem:[%s0 + $0x1d3] sm:$0xff]
  %v2684 = vld [vmem:[%s0 + $0x1db] sm:$0xff]
  %v2685 = vld [vmem:[%s0 + $0x1e3] sm:$0xff]
  %v2686 = vld [vmem:[%s0 + $0x1eb] sm:$0xff]
  %v2687 = vld [vmem:[%s0 + $0x1f3] sm:$0xff]
  %v2688 = vld [vmem:[%s0 + $0x1fb] sm:$0xff]
  %v2689 = vld [vmem:[%s0 + $0x203] sm:$0xff]
  %v2690 = vld [vmem:[%s0 + $0x20b] sm:$0xff]
  %v2691 = vld [vmem:[%s0 + $0x213] sm:$0xff]
  %v2692 = vld [vmem:[%s0 + $0x21b] sm:$0xff]
  %v2693 = vld [vmem:[%s0 + $0x223] sm:$0xff]
  %v2694 = vld [vmem:[%s0 + $0x22b] sm:$0xff]
  %v2695 = vld [vmem:[%s0 + $0x233] sm:$0xff]
  %v2696 = vld [vmem:[%s0 + $0x23b] sm:$0xff]
  %v2697 = vld [vmem:[%s0 + $0x243] sm:$0xff]
  %v2698 = vld [vmem:[%s0 + $0x24b] sm:$0xff]
  %v2699 = vld [vmem:[%s0 + $0x253] sm:$0xff]
  %v2700 = vld [vmem:[%s0 + $0x25b] sm:$0xff]
  %v2701 = vld [vmem:[%s0 + $0x263] sm:$0xff]
  %v2702 = vld [vmem:[%s0 + $0x26b] sm:$0xff]
  %v2703 = vld [vmem:[%s0 + $0x273] sm:$0xff]
  %v2704 = vld [vmem:[%s0 + $0x27b] sm:$0xff]
  %v2705 = vld [vmem:[%s0 + $0x283] sm:$0xff]
  %v2706 = vld [vmem:[%s0 + $0x28b] sm:$0xff]
  %v2707 = vld [vmem:[%s0 + $0x293] sm:$0xff]
  %v2708 = vpack.c.bf16 %v2628, %v2627
  %v2709 = vpack.c.bf16 %v2630, %v2629
  %v2710 = vpack.c.bf16 %v2632, %v2631
  %v2711 = vpack.c.bf16 %v2634, %v2633
  %v2712 = vpack.c.bf16 %v2636, %v2635
  %v2713 = vpack.c.bf16 %v2638, %v2637
  %v2714 = vpack.c.bf16 %v2640, %v2639
  %v2715 = vpack.c.bf16 %v2642, %v2641
  %v2716 = vpack.c.bf16 %v2644, %v2643
  %v2717 = vpack.c.bf16 %v2646, %v2645
  %v2718 = vpack.c.bf16 %v2648, %v2647
  %v2719 = vpack.c.bf16 %v2650, %v2649
  %v2720 = vpack.c.bf16 %v2652, %v2651
  %v2721 = vpack.c.bf16 %v2654, %v2653
  %v2722 = vpack.c.bf16 %v2656, %v2655
  %v2723 = vpack.c.bf16 %v2658, %v2657
  %v2724 = vpack.c.bf16 %v2660, %v2659
  %v2725 = vpack.c.bf16 %v2662, %v2661
  %v2726 = vpack.c.bf16 %v2664, %v2663
  %v2727 = vpack.c.bf16 %v2666, %v2665
  %v2728 = vpack.c.bf16 %v2668, %v2667
  %v2729 = vpack.c.bf16 %v2670, %v2669
  %v2730 = vpack.c.bf16 %v2672, %v2671
  %v2731 = vpack.c.bf16 %v2674, %v2673
  %v2732 = vpack.c.bf16 %v2676, %v2675
  %v2733 = vpack.c.bf16 %v2678, %v2677
  %v2734 = vpack.c.bf16 %v2680, %v2679
  %v2735 = vpack.c.bf16 %v2682, %v2681
  %v2736 = vpack.c.bf16 %v2684, %v2683
  %v2737 = vpack.c.bf16 %v2686, %v2685
  %v2738 = vpack.c.bf16 %v2688, %v2687
  %v2739 = vpack.c.bf16 %v2690, %v2689
  %v2740 = vpack.c.bf16 %v2692, %v2691
  %v2741 = vpack.c.bf16 %v2694, %v2693
  %v2742 = vpack.c.bf16 %v2696, %v2695
  %v2743 = vpack.c.bf16 %v2698, %v2697
  %v2744 = vpack.c.bf16 %v2700, %v2699
  %v2745 = vpack.c.bf16 %v2702, %v2701
  %v2746 = vpack.c.bf16 %v2704, %v2703
  %v2747 = vpack.c.bf16 %v2706, %v2705
  %v2748 = vpack.c.bf16 %v2707, %v2707
  %s2749 = scalar_lea.vmem %s1, 8
  %v2750 = vld [vmem:[%s2749] sm:$0x3]
  %v2752 = vsel %vm271, %v2708, 0
  %v2755 = vsel %vm271, %v2709, 0
  %v2758 = vsel %vm271, %v2710, 0
  %v2761 = vsel %vm271, %v2711, 0
  %v2764 = vsel %vm271, %v2712, 0
  %v2767 = vsel %vm271, %v2713, 0
  %v2770 = vsel %vm271, %v2714, 0
  %v2773 = vsel %vm271, %v2715, 0
  %v2776 = vsel %vm271, %v2716, 0
  %v2779 = vsel %vm271, %v2717, 0
  %v2782 = vsel %vm271, %v2718, 0
  %v2785 = vsel %vm271, %v2719, 0
  %v2788 = vsel %vm271, %v2720, 0
  %v2791 = vsel %vm271, %v2721, 0
  %v2794 = vsel %vm271, %v2722, 0
  %v2797 = vsel %vm271, %v2723, 0
  %v2800 = vsel %vm271, %v2724, 0
  %v2803 = vsel %vm271, %v2725, 0
  %v2806 = vsel %vm271, %v2726, 0
  %v2809 = vsel %vm271, %v2727, 0
  %v2812 = vsel %vm271, %v2728, 0
  %v2815 = vsel %vm271, %v2729, 0
  %v2818 = vsel %vm271, %v2730, 0
  %v2821 = vsel %vm271, %v2731, 0
  %v2824 = vsel %vm271, %v2732, 0
  %v2827 = vsel %vm271, %v2733, 0
  %v2830 = vsel %vm271, %v2734, 0
  %v2833 = vsel %vm271, %v2735, 0
  %v2836 = vsel %vm271, %v2736, 0
  %v2839 = vsel %vm271, %v2737, 0
  %v2842 = vsel %vm271, %v2738, 0
  %v2845 = vsel %vm271, %v2739, 0
  %v2848 = vsel %vm271, %v2740, 0
  %v2851 = vsel %vm271, %v2741, 0
  %v2854 = vsel %vm271, %v2742, 0
  %v2857 = vsel %vm271, %v2743, 0
  %v2860 = vsel %vm271, %v2744, 0
  %v2863 = vsel %vm271, %v2745, 0
  %v2866 = vsel %vm271, %v2746, 0
  %v2869 = vsel %vm271, %v2747, 0
  %v2872 = vsel %vm271, %v2748, 0
  %v2875 = vsel %vm395, %v2750, 0
  %2877 = vmatprep.subr.bf16.mxu0 0
  %2878 = vmatpush1.bf16.msra.mxu0 0
  %2879 = vmatprep.subr.bf16.mxu0 0
  %2880 = vmatpush1.bf16.msra.mxu0 0
  %2881 = vmatprep.subr.bf16.mxu0 0
  %2882 = vmatpush1.bf16.msra.mxu0 0
  %2883 = vmatprep.subr.bf16.mxu0 0
  %2884 = vmatpush1.bf16.msra.mxu0 0
  %2885 = vmatprep.subr.bf16.mxu0 0
  %2886 = vmatpush1.bf16.msra.mxu0 0
  %2887 = vmatprep.subr.bf16.mxu0 0
  %2888 = vmatpush1.bf16.msra.mxu0 0
  %2889 = vmatprep.subr.bf16.mxu0 0
  %2890 = vmatpush1.bf16.msra.mxu0 0
  %2891 = vmatprep.subr.bf16.mxu0 0
  %2892 = vmatpush1.bf16.msra.mxu0 %v2875
  %2893 = vmatprep.subr.bf16.mxu0 0
  %2894 = vmatpush2.bf16.msra.mxu0 0
  %2895 = vmatprep.subr.bf16.mxu0 0
  %2896 = vmatpush2.bf16.msra.mxu0 0
  %2897 = vmatprep.subr.bf16.mxu0 0
  %2898 = vmatpush2.bf16.msra.mxu0 0
  %2899 = vmatprep.subr.bf16.mxu0 0
  %2900 = vmatpush2.bf16.msra.mxu0 0
  %2901 = vmatprep.subr.bf16.mxu0 0
  %2902 = vmatpush2.bf16.msra.mxu0 0
  %2903 = vmatprep.subr.bf16.mxu0 0
  %2904 = vmatpush2.bf16.msra.mxu0 0
  %2905 = vmatprep.subr.bf16.mxu0 0
  %2906 = vmatpush2.bf16.msra.mxu0 0
  %2907 = vmatprep.subr.bf16.mxu0 0
  %2908 = vmatpush2.bf16.msra.mxu0 0
  %2909 = vmatprep.mubr.bf16.mxu0 0
  %2910 = vmatmul.mubr.bf16.gmra.mxu0 %v2752
  %v2911 = vpop.f32.mrf.mxu0
  %v2912 = vadd.f32 0.0, %v2911
  %v2913 = vpop.f32.mrf.mxu0
  %v2914 = vpop.f32.mrf.mxu0
  %v2915 = vadd.f32 0.0, %v2914
  %v2916 = vpop.f32.mrf.mxu0
  %2917 = vmatprep.mubr.bf16.mxu0 0
  %2918 = vmatmul.mubr.bf16.gmra.mxu0 %v2755
  %v2919 = vpop.f32.mrf.mxu0
  %v2920 = vadd.f32 0.0, %v2919
  %v2921 = vpop.f32.mrf.mxu0
  %v2922 = vpop.f32.mrf.mxu0
  %v2923 = vadd.f32 0.0, %v2922
  %v2924 = vpop.f32.mrf.mxu0
  %2925 = vmatprep.mubr.bf16.mxu0 0
  %2926 = vmatmul.mubr.bf16.gmra.mxu0 %v2758
  %v2927 = vpop.f32.mrf.mxu0
  %v2928 = vadd.f32 0.0, %v2927
  %v2929 = vpop.f32.mrf.mxu0
  %v2930 = vpop.f32.mrf.mxu0
  %v2931 = vadd.f32 0.0, %v2930
  %v2932 = vpop.f32.mrf.mxu0
  %2933 = vmatprep.mubr.bf16.mxu0 0
  %2934 = vmatmul.mubr.bf16.gmra.mxu0 %v2761
  %v2935 = vpop.f32.mrf.mxu0
  %v2936 = vadd.f32 0.0, %v2935
  %v2937 = vpop.f32.mrf.mxu0
  %v2938 = vpop.f32.mrf.mxu0
  %v2939 = vadd.f32 0.0, %v2938
  %v2940 = vpop.f32.mrf.mxu0
  %2941 = vmatprep.mubr.bf16.mxu0 0
  %2942 = vmatmul.mubr.bf16.gmra.mxu0 %v2764
  %v2943 = vpop.f32.mrf.mxu0
  %v2944 = vadd.f32 0.0, %v2943
  %v2945 = vpop.f32.mrf.mxu0
  %v2946 = vpop.f32.mrf.mxu0
  %v2947 = vadd.f32 0.0, %v2946
  %v2948 = vpop.f32.mrf.mxu0
  %2949 = vmatprep.mubr.bf16.mxu0 0
  %2950 = vmatmul.mubr.bf16.gmra.mxu0 %v2767
  %v2951 = vpop.f32.mrf.mxu0
  %v2952 = vadd.f32 0.0, %v2951
  %v2953 = vpop.f32.mrf.mxu0
  %v2954 = vpop.f32.mrf.mxu0
  %v2955 = vadd.f32 0.0, %v2954
  %v2956 = vpop.f32.mrf.mxu0
  %2957 = vmatprep.mubr.bf16.mxu0 0
  %2958 = vmatmul.mubr.bf16.gmra.mxu0 %v2770
  %v2959 = vpop.f32.mrf.mxu0
  %v2960 = vadd.f32 0.0, %v2959
  %v2961 = vpop.f32.mrf.mxu0
  %v2962 = vpop.f32.mrf.mxu0
  %v2963 = vadd.f32 0.0, %v2962
  %v2964 = vpop.f32.mrf.mxu0
  %2965 = vmatprep.mubr.bf16.mxu0 0
  %2966 = vmatmul.mubr.bf16.gmra.mxu0 %v2773
  %v2967 = vpop.f32.mrf.mxu0
  %v2968 = vadd.f32 0.0, %v2967
  %v2969 = vpop.f32.mrf.mxu0
  %v2970 = vpop.f32.mrf.mxu0
  %v2971 = vadd.f32 0.0, %v2970
  %v2972 = vpop.f32.mrf.mxu0
  %2973 = vmatprep.mubr.bf16.mxu0 0
  %2974 = vmatmul.mubr.bf16.gmra.mxu0 %v2776
  %v2975 = vpop.f32.mrf.mxu0
  %v2976 = vadd.f32 0.0, %v2975
  %v2977 = vpop.f32.mrf.mxu0
  %v2978 = vpop.f32.mrf.mxu0
  %v2979 = vadd.f32 0.0, %v2978
  %v2980 = vpop.f32.mrf.mxu0
  %2981 = vmatprep.mubr.bf16.mxu0 0
  %2982 = vmatmul.mubr.bf16.gmra.mxu0 %v2779
  %v2983 = vpop.f32.mrf.mxu0
  %v2984 = vadd.f32 0.0, %v2983
  %v2985 = vpop.f32.mrf.mxu0
  %v2986 = vpop.f32.mrf.mxu0
  %v2987 = vadd.f32 0.0, %v2986
  %v2988 = vpop.f32.mrf.mxu0
  %2989 = vmatprep.mubr.bf16.mxu0 0
  %2990 = vmatmul.mubr.bf16.gmra.mxu0 %v2782
  %v2991 = vpop.f32.mrf.mxu0
  %v2992 = vadd.f32 0.0, %v2991
  %v2993 = vpop.f32.mrf.mxu0
  %v2994 = vpop.f32.mrf.mxu0
  %v2995 = vadd.f32 0.0, %v2994
  %v2996 = vpop.f32.mrf.mxu0
  %2997 = vmatprep.mubr.bf16.mxu0 0
  %2998 = vmatmul.mubr.bf16.gmra.mxu0 %v2785
  %v2999 = vpop.f32.mrf.mxu0
  %v3000 = vadd.f32 0.0, %v2999
  %v3001 = vpop.f32.mrf.mxu0
  %v3002 = vpop.f32.mrf.mxu0
  %v3003 = vadd.f32 0.0, %v3002
  %v3004 = vpop.f32.mrf.mxu0
  %3005 = vmatprep.mubr.bf16.mxu0 0
  %3006 = vmatmul.mubr.bf16.gmra.mxu0 %v2788
  %v3007 = vpop.f32.mrf.mxu0
  %v3008 = vadd.f32 0.0, %v3007
  %v3009 = vpop.f32.mrf.mxu0
  %v3010 = vpop.f32.mrf.mxu0
  %v3011 = vadd.f32 0.0, %v3010
  %v3012 = vpop.f32.mrf.mxu0
  %3013 = vmatprep.mubr.bf16.mxu0 0
  %3014 = vmatmul.mubr.bf16.gmra.mxu0 %v2791
  %v3015 = vpop.f32.mrf.mxu0
  %v3016 = vadd.f32 0.0, %v3015
  %v3017 = vpop.f32.mrf.mxu0
  %v3018 = vpop.f32.mrf.mxu0
  %v3019 = vadd.f32 0.0, %v3018
  %v3020 = vpop.f32.mrf.mxu0
  %3021 = vmatprep.mubr.bf16.mxu0 0
  %3022 = vmatmul.mubr.bf16.gmra.mxu0 %v2794
  %v3023 = vpop.f32.mrf.mxu0
  %v3024 = vadd.f32 0.0, %v3023
  %v3025 = vpop.f32.mrf.mxu0
  %v3026 = vpop.f32.mrf.mxu0
  %v3027 = vadd.f32 0.0, %v3026
  %v3028 = vpop.f32.mrf.mxu0
  %3029 = vmatprep.mubr.bf16.mxu0 0
  %3030 = vmatmul.mubr.bf16.gmra.mxu0 %v2797
  %v3031 = vpop.f32.mrf.mxu0
  %v3032 = vadd.f32 0.0, %v3031
  %v3033 = vpop.f32.mrf.mxu0
  %v3034 = vpop.f32.mrf.mxu0
  %v3035 = vadd.f32 0.0, %v3034
  %v3036 = vpop.f32.mrf.mxu0
  %3037 = vmatprep.mubr.bf16.mxu0 0
  %3038 = vmatmul.mubr.bf16.gmra.mxu0 %v2800
  %v3039 = vpop.f32.mrf.mxu0
  %v3040 = vadd.f32 0.0, %v3039
  %v3041 = vpop.f32.mrf.mxu0
  %v3042 = vpop.f32.mrf.mxu0
  %v3043 = vadd.f32 0.0, %v3042
  %v3044 = vpop.f32.mrf.mxu0
  %3045 = vmatprep.mubr.bf16.mxu0 0
  %3046 = vmatmul.mubr.bf16.gmra.mxu0 %v2803
  %v3047 = vpop.f32.mrf.mxu0
  %v3048 = vadd.f32 0.0, %v3047
  %v3049 = vpop.f32.mrf.mxu0
  %v3050 = vpop.f32.mrf.mxu0
  %v3051 = vadd.f32 0.0, %v3050
  %v3052 = vpop.f32.mrf.mxu0
  %3053 = vmatprep.mubr.bf16.mxu0 0
  %3054 = vmatmul.mubr.bf16.gmra.mxu0 %v2806
  %v3055 = vpop.f32.mrf.mxu0
  %v3056 = vadd.f32 0.0, %v3055
  %v3057 = vpop.f32.mrf.mxu0
  %v3058 = vpop.f32.mrf.mxu0
  %v3059 = vadd.f32 0.0, %v3058
  %v3060 = vpop.f32.mrf.mxu0
  %3061 = vmatprep.mubr.bf16.mxu0 0
  %3062 = vmatmul.mubr.bf16.gmra.mxu0 %v2809
  %v3063 = vpop.f32.mrf.mxu0
  %v3064 = vadd.f32 0.0, %v3063
  %v3065 = vpop.f32.mrf.mxu0
  %v3066 = vpop.f32.mrf.mxu0
  %v3067 = vadd.f32 0.0, %v3066
  %v3068 = vpop.f32.mrf.mxu0
  %3069 = vmatprep.mubr.bf16.mxu0 0
  %3070 = vmatmul.mubr.bf16.gmra.mxu0 %v2812
  %v3071 = vpop.f32.mrf.mxu0
  %v3072 = vadd.f32 0.0, %v3071
  %v3073 = vpop.f32.mrf.mxu0
  %v3074 = vpop.f32.mrf.mxu0
  %v3075 = vadd.f32 0.0, %v3074
  %v3076 = vpop.f32.mrf.mxu0
  %3077 = vmatprep.mubr.bf16.mxu0 0
  %3078 = vmatmul.mubr.bf16.gmra.mxu0 %v2815
  %v3079 = vpop.f32.mrf.mxu0
  %v3080 = vadd.f32 0.0, %v3079
  %v3081 = vpop.f32.mrf.mxu0
  %v3082 = vpop.f32.mrf.mxu0
  %v3083 = vadd.f32 0.0, %v3082
  %v3084 = vpop.f32.mrf.mxu0
  %3085 = vmatprep.mubr.bf16.mxu0 0
  %3086 = vmatmul.mubr.bf16.gmra.mxu0 %v2818
  %v3087 = vpop.f32.mrf.mxu0
  %v3088 = vadd.f32 0.0, %v3087
  %v3089 = vpop.f32.mrf.mxu0
  %v3090 = vpop.f32.mrf.mxu0
  %v3091 = vadd.f32 0.0, %v3090
  %v3092 = vpop.f32.mrf.mxu0
  %3093 = vmatprep.mubr.bf16.mxu0 0
  %3094 = vmatmul.mubr.bf16.gmra.mxu0 %v2821
  %v3095 = vpop.f32.mrf.mxu0
  %v3096 = vadd.f32 0.0, %v3095
  %v3097 = vpop.f32.mrf.mxu0
  %v3098 = vpop.f32.mrf.mxu0
  %v3099 = vadd.f32 0.0, %v3098
  %v3100 = vpop.f32.mrf.mxu0
  %3101 = vmatprep.mubr.bf16.mxu0 0
  %3102 = vmatmul.mubr.bf16.gmra.mxu0 %v2824
  %v3103 = vpop.f32.mrf.mxu0
  %v3104 = vadd.f32 0.0, %v3103
  %v3105 = vpop.f32.mrf.mxu0
  %v3106 = vpop.f32.mrf.mxu0
  %v3107 = vadd.f32 0.0, %v3106
  %v3108 = vpop.f32.mrf.mxu0
  %3109 = vmatprep.mubr.bf16.mxu0 0
  %3110 = vmatmul.mubr.bf16.gmra.mxu0 %v2827
  %v3111 = vpop.f32.mrf.mxu0
  %v3112 = vadd.f32 0.0, %v3111
  %v3113 = vpop.f32.mrf.mxu0
  %v3114 = vpop.f32.mrf.mxu0
  %v3115 = vadd.f32 0.0, %v3114
  %v3116 = vpop.f32.mrf.mxu0
  %3117 = vmatprep.mubr.bf16.mxu0 0
  %3118 = vmatmul.mubr.bf16.gmra.mxu0 %v2830
  %v3119 = vpop.f32.mrf.mxu0
  %v3120 = vadd.f32 0.0, %v3119
  %v3121 = vpop.f32.mrf.mxu0
  %v3122 = vpop.f32.mrf.mxu0
  %v3123 = vadd.f32 0.0, %v3122
  %v3124 = vpop.f32.mrf.mxu0
  %3125 = vmatprep.mubr.bf16.mxu0 0
  %3126 = vmatmul.mubr.bf16.gmra.mxu0 %v2833
  %v3127 = vpop.f32.mrf.mxu0
  %v3128 = vadd.f32 0.0, %v3127
  %v3129 = vpop.f32.mrf.mxu0
  %v3130 = vpop.f32.mrf.mxu0
  %v3131 = vadd.f32 0.0, %v3130
  %v3132 = vpop.f32.mrf.mxu0
  %3133 = vmatprep.mubr.bf16.mxu0 0
  %3134 = vmatmul.mubr.bf16.gmra.mxu0 %v2836
  %v3135 = vpop.f32.mrf.mxu0
  %v3136 = vadd.f32 0.0, %v3135
  %v3137 = vpop.f32.mrf.mxu0
  %v3138 = vpop.f32.mrf.mxu0
  %v3139 = vadd.f32 0.0, %v3138
  %v3140 = vpop.f32.mrf.mxu0
  %3141 = vmatprep.mubr.bf16.mxu0 0
  %3142 = vmatmul.mubr.bf16.gmra.mxu0 %v2839
  %v3143 = vpop.f32.mrf.mxu0
  %v3144 = vadd.f32 0.0, %v3143
  %v3145 = vpop.f32.mrf.mxu0
  %v3146 = vpop.f32.mrf.mxu0
  %v3147 = vadd.f32 0.0, %v3146
  %v3148 = vpop.f32.mrf.mxu0
  %3149 = vmatprep.mubr.bf16.mxu0 0
  %3150 = vmatmul.mubr.bf16.gmra.mxu0 %v2842
  %v3151 = vpop.f32.mrf.mxu0
  %v3152 = vadd.f32 0.0, %v3151
  %v3153 = vpop.f32.mrf.mxu0
  %v3154 = vpop.f32.mrf.mxu0
  %v3155 = vadd.f32 0.0, %v3154
  %v3156 = vpop.f32.mrf.mxu0
  %3157 = vmatprep.mubr.bf16.mxu0 0
  %3158 = vmatmul.mubr.bf16.gmra.mxu0 %v2845
  %v3159 = vpop.f32.mrf.mxu0
  %v3160 = vadd.f32 0.0, %v3159
  %v3161 = vpop.f32.mrf.mxu0
  %v3162 = vpop.f32.mrf.mxu0
  %v3163 = vadd.f32 0.0, %v3162
  %v3164 = vpop.f32.mrf.mxu0
  %3165 = vmatprep.mubr.bf16.mxu0 0
  %3166 = vmatmul.mubr.bf16.gmra.mxu0 %v2848
  %v3167 = vpop.f32.mrf.mxu0
  %v3168 = vadd.f32 0.0, %v3167
  %v3169 = vpop.f32.mrf.mxu0
  %v3170 = vpop.f32.mrf.mxu0
  %v3171 = vadd.f32 0.0, %v3170
  %v3172 = vpop.f32.mrf.mxu0
  %3173 = vmatprep.mubr.bf16.mxu0 0
  %3174 = vmatmul.mubr.bf16.gmra.mxu0 %v2851
  %v3175 = vpop.f32.mrf.mxu0
  %v3176 = vadd.f32 0.0, %v3175
  %v3177 = vpop.f32.mrf.mxu0
  %v3178 = vpop.f32.mrf.mxu0
  %v3179 = vadd.f32 0.0, %v3178
  %v3180 = vpop.f32.mrf.mxu0
  %3181 = vmatprep.mubr.bf16.mxu0 0
  %3182 = vmatmul.mubr.bf16.gmra.mxu0 %v2854
  %v3183 = vpop.f32.mrf.mxu0
  %v3184 = vadd.f32 0.0, %v3183
  %v3185 = vpop.f32.mrf.mxu0
  %v3186 = vpop.f32.mrf.mxu0
  %v3187 = vadd.f32 0.0, %v3186
  %v3188 = vpop.f32.mrf.mxu0
  %3189 = vmatprep.mubr.bf16.mxu0 0
  %3190 = vmatmul.mubr.bf16.gmra.mxu0 %v2857
  %v3191 = vpop.f32.mrf.mxu0
  %v3192 = vadd.f32 0.0, %v3191
  %v3193 = vpop.f32.mrf.mxu0
  %v3194 = vpop.f32.mrf.mxu0
  %v3195 = vadd.f32 0.0, %v3194
  %v3196 = vpop.f32.mrf.mxu0
  %3197 = vmatprep.mubr.bf16.mxu0 0
  %3198 = vmatmul.mubr.bf16.gmra.mxu0 %v2860
  %v3199 = vpop.f32.mrf.mxu0
  %v3200 = vadd.f32 0.0, %v3199
  %v3201 = vpop.f32.mrf.mxu0
  %v3202 = vpop.f32.mrf.mxu0
  %v3203 = vadd.f32 0.0, %v3202
  %v3204 = vpop.f32.mrf.mxu0
  %3205 = vmatprep.mubr.bf16.mxu0 0
  %3206 = vmatmul.mubr.bf16.gmra.mxu0 %v2863
  %v3207 = vpop.f32.mrf.mxu0
  %v3208 = vadd.f32 0.0, %v3207
  %v3209 = vpop.f32.mrf.mxu0
  %v3210 = vpop.f32.mrf.mxu0
  %v3211 = vadd.f32 0.0, %v3210
  %v3212 = vpop.f32.mrf.mxu0
  %3213 = vmatprep.mubr.bf16.mxu0 0
  %3214 = vmatmul.mubr.bf16.gmra.mxu0 %v2866
  %v3215 = vpop.f32.mrf.mxu0
  %v3216 = vadd.f32 0.0, %v3215
  %v3217 = vpop.f32.mrf.mxu0
  %v3218 = vpop.f32.mrf.mxu0
  %v3219 = vadd.f32 0.0, %v3218
  %v3220 = vpop.f32.mrf.mxu0
  %3221 = vmatprep.mubr.bf16.mxu0 0
  %3222 = vmatmul.mubr.bf16.gmra.mxu0 %v2869
  %v3223 = vpop.f32.mrf.mxu0
  %v3224 = vadd.f32 0.0, %v3223
  %v3225 = vpop.f32.mrf.mxu0
  %v3226 = vpop.f32.mrf.mxu0
  %v3227 = vadd.f32 0.0, %v3226
  %v3228 = vpop.f32.mrf.mxu0
  %3229 = vmatprep.mubr.bf16.mxu0 0
  %3230 = vmatmul.mubr.bf16.gmra.mxu0 %v2872
  %v3231 = vpop.f32.mrf.mxu0
  %v3232 = vadd.f32 0.0, %v3231
  %v3233 = vpop.f32.mrf.mxu0
  %v3234 = vpop.f32.mrf.mxu0
  %v3235 = vpop.f32.mrf.mxu0
  %3236 = vdwg.mxu0
  %v3237 = vadd.f32 %v2546, %v2912
  %v3238 = vadd.f32 %v2547, %v2915
  %v3239 = vadd.f32 %v2548, %v2920
  %v3240 = vadd.f32 %v2549, %v2923
  %v3241 = vadd.f32 %v2550, %v2928
  %v3242 = vadd.f32 %v2551, %v2931
  %v3243 = vadd.f32 %v2552, %v2936
  %v3244 = vadd.f32 %v2553, %v2939
  %v3245 = vadd.f32 %v2554, %v2944
  %v3246 = vadd.f32 %v2555, %v2947
  %v3247 = vadd.f32 %v2556, %v2952
  %v3248 = vadd.f32 %v2557, %v2955
  %v3249 = vadd.f32 %v2558, %v2960
  %v3250 = vadd.f32 %v2559, %v2963
  %v3251 = vadd.f32 %v2560, %v2968
  %v3252 = vadd.f32 %v2561, %v2971
  %v3253 = vadd.f32 %v2562, %v2976
  %v3254 = vadd.f32 %v2563, %v2979
  %v3255 = vadd.f32 %v2564, %v2984
  %v3256 = vadd.f32 %v2565, %v2987
  %v3257 = vadd.f32 %v2566, %v2992
  %v3258 = vadd.f32 %v2567, %v2995
  %v3259 = vadd.f32 %v2568, %v3000
  %v3260 = vadd.f32 %v2569, %v3003
  %v3261 = vadd.f32 %v2570, %v3008
  %v3262 = vadd.f32 %v2571, %v3011
  %v3263 = vadd.f32 %v2572, %v3016
  %v3264 = vadd.f32 %v2573, %v3019
  %v3265 = vadd.f32 %v2574, %v3024
  %v3266 = vadd.f32 %v2575, %v3027
  %v3267 = vadd.f32 %v2576, %v3032
  %v3268 = vadd.f32 %v2577, %v3035
  %v3269 = vadd.f32 %v2578, %v3040
  %v3270 = vadd.f32 %v2579, %v3043
  %v3271 = vadd.f32 %v2580, %v3048
  %v3272 = vadd.f32 %v2581, %v3051
  %v3273 = vadd.f32 %v2582, %v3056
  %v3274 = vadd.f32 %v2583, %v3059
  %v3275 = vadd.f32 %v2584, %v3064
  %v3276 = vadd.f32 %v2585, %v3067
  %v3277 = vadd.f32 %v2586, %v3072
  %v3278 = vadd.f32 %v2587, %v3075
  %v3279 = vadd.f32 %v2588, %v3080
  %v3280 = vadd.f32 %v2589, %v3083
  %v3281 = vadd.f32 %v2590, %v3088
  %v3282 = vadd.f32 %v2591, %v3091
  %v3283 = vadd.f32 %v2592, %v3096
  %v3284 = vadd.f32 %v2593, %v3099
  %v3285 = vadd.f32 %v2594, %v3104
  %v3286 = vadd.f32 %v2595, %v3107
  %v3287 = vadd.f32 %v2596, %v3112
  %v3288 = vadd.f32 %v2597, %v3115
  %v3289 = vadd.f32 %v2598, %v3120
  %v3290 = vadd.f32 %v2599, %v3123
  %v3291 = vadd.f32 %v2600, %v3128
  %v3292 = vadd.f32 %v2601, %v3131
  %v3293 = vadd.f32 %v2602, %v3136
  %v3294 = vadd.f32 %v2603, %v3139
  %v3295 = vadd.f32 %v2604, %v3144
  %v3296 = vadd.f32 %v2605, %v3147
  %v3297 = vadd.f32 %v2606, %v3152
  %v3298 = vadd.f32 %v2607, %v3155
  %v3299 = vadd.f32 %v2608, %v3160
  %v3300 = vadd.f32 %v2609, %v3163
  %v3301 = vadd.f32 %v2610, %v3168
  %v3302 = vadd.f32 %v2611, %v3171
  %v3303 = vadd.f32 %v2612, %v3176
  %v3304 = vadd.f32 %v2613, %v3179
  %v3305 = vadd.f32 %v2614, %v3184
  %v3306 = vadd.f32 %v2615, %v3187
  %v3307 = vadd.f32 %v2616, %v3192
  %v3308 = vadd.f32 %v2617, %v3195
  %v3309 = vadd.f32 %v2618, %v3200
  %v3310 = vadd.f32 %v2619, %v3203
  %v3311 = vadd.f32 %v2620, %v3208
  %v3312 = vadd.f32 %v2621, %v3211
  %v3313 = vadd.f32 %v2622, %v3216
  %v3314 = vadd.f32 %v2623, %v3219
  %v3315 = vadd.f32 %v2624, %v3224
  %v3316 = vadd.f32 %v2625, %v3227
  %v3317 = vadd.f32 %v2626, %v3232
  %v3318 = vld [vmem:[%s0 + $0x14] sm:$0xff]
  %v3319 = vld [vmem:[%s0 + $0x1c] sm:$0xff]
  %v3320 = vld [vmem:[%s0 + $0x24] sm:$0xff]
  %v3321 = vld [vmem:[%s0 + $0x2c] sm:$0xff]
  %v3322 = vld [vmem:[%s0 + $0x34] sm:$0xff]
  %v3323 = vld [vmem:[%s0 + $0x3c] sm:$0xff]
  %v3324 = vld [vmem:[%s0 + $0x44] sm:$0xff]
  %v3325 = vld [vmem:[%s0 + $0x4c] sm:$0xff]
  %v3326 = vld [vmem:[%s0 + $0x54] sm:$0xff]
  %v3327 = vld [vmem:[%s0 + $0x5c] sm:$0xff]
  %v3328 = vld [vmem:[%s0 + $0x64] sm:$0xff]
  %v3329 = vld [vmem:[%s0 + $0x6c] sm:$0xff]
  %v3330 = vld [vmem:[%s0 + $0x74] sm:$0xff]
  %v3331 = vld [vmem:[%s0 + $0x7c] sm:$0xff]
  %v3332 = vld [vmem:[%s0 + $0x84] sm:$0xff]
  %v3333 = vld [vmem:[%s0 + $0x8c] sm:$0xff]
  %v3334 = vld [vmem:[%s0 + $0x94] sm:$0xff]
  %v3335 = vld [vmem:[%s0 + $0x9c] sm:$0xff]
  %v3336 = vld [vmem:[%s0 + $0xa4] sm:$0xff]
  %v3337 = vld [vmem:[%s0 + $0xac] sm:$0xff]
  %v3338 = vld [vmem:[%s0 + $0xb4] sm:$0xff]
  %v3339 = vld [vmem:[%s0 + $0xbc] sm:$0xff]
  %v3340 = vld [vmem:[%s0 + $0xc4] sm:$0xff]
  %v3341 = vld [vmem:[%s0 + $0xcc] sm:$0xff]
  %v3342 = vld [vmem:[%s0 + $0xd4] sm:$0xff]
  %v3343 = vld [vmem:[%s0 + $0xdc] sm:$0xff]
  %v3344 = vld [vmem:[%s0 + $0xe4] sm:$0xff]
  %v3345 = vld [vmem:[%s0 + $0xec] sm:$0xff]
  %v3346 = vld [vmem:[%s0 + $0xf4] sm:$0xff]
  %v3347 = vld [vmem:[%s0 + $0xfc] sm:$0xff]
  %v3348 = vld [vmem:[%s0 + $0x104] sm:$0xff]
  %v3349 = vld [vmem:[%s0 + $0x10c] sm:$0xff]
  %v3350 = vld [vmem:[%s0 + $0x114] sm:$0xff]
  %v3351 = vld [vmem:[%s0 + $0x11c] sm:$0xff]
  %v3352 = vld [vmem:[%s0 + $0x124] sm:$0xff]
  %v3353 = vld [vmem:[%s0 + $0x12c] sm:$0xff]
  %v3354 = vld [vmem:[%s0 + $0x134] sm:$0xff]
  %v3355 = vld [vmem:[%s0 + $0x13c] sm:$0xff]
  %v3356 = vld [vmem:[%s0 + $0x144] sm:$0xff]
  %v3357 = vld [vmem:[%s0 + $0x14c] sm:$0xff]
  %v3358 = vld [vmem:[%s0 + $0x154] sm:$0xff]
  %v3359 = vld [vmem:[%s0 + $0x15c] sm:$0xff]
  %v3360 = vld [vmem:[%s0 + $0x164] sm:$0xff]
  %v3361 = vld [vmem:[%s0 + $0x16c] sm:$0xff]
  %v3362 = vld [vmem:[%s0 + $0x174] sm:$0xff]
  %v3363 = vld [vmem:[%s0 + $0x17c] sm:$0xff]
  %v3364 = vld [vmem:[%s0 + $0x184] sm:$0xff]
  %v3365 = vld [vmem:[%s0 + $0x18c] sm:$0xff]
  %v3366 = vld [vmem:[%s0 + $0x194] sm:$0xff]
  %v3367 = vld [vmem:[%s0 + $0x19c] sm:$0xff]
  %v3368 = vld [vmem:[%s0 + $0x1a4] sm:$0xff]
  %v3369 = vld [vmem:[%s0 + $0x1ac] sm:$0xff]
  %v3370 = vld [vmem:[%s0 + $0x1b4] sm:$0xff]
  %v3371 = vld [vmem:[%s0 + $0x1bc] sm:$0xff]
  %v3372 = vld [vmem:[%s0 + $0x1c4] sm:$0xff]
  %v3373 = vld [vmem:[%s0 + $0x1cc] sm:$0xff]
  %v3374 = vld [vmem:[%s0 + $0x1d4] sm:$0xff]
  %v3375 = vld [vmem:[%s0 + $0x1dc] sm:$0xff]
  %v3376 = vld [vmem:[%s0 + $0x1e4] sm:$0xff]
  %v3377 = vld [vmem:[%s0 + $0x1ec] sm:$0xff]
  %v3378 = vld [vmem:[%s0 + $0x1f4] sm:$0xff]
  %v3379 = vld [vmem:[%s0 + $0x1fc] sm:$0xff]
  %v3380 = vld [vmem:[%s0 + $0x204] sm:$0xff]
  %v3381 = vld [vmem:[%s0 + $0x20c] sm:$0xff]
  %v3382 = vld [vmem:[%s0 + $0x214] sm:$0xff]
  %v3383 = vld [vmem:[%s0 + $0x21c] sm:$0xff]
  %v3384 = vld [vmem:[%s0 + $0x224] sm:$0xff]
  %v3385 = vld [vmem:[%s0 + $0x22c] sm:$0xff]
  %v3386 = vld [vmem:[%s0 + $0x234] sm:$0xff]
  %v3387 = vld [vmem:[%s0 + $0x23c] sm:$0xff]
  %v3388 = vld [vmem:[%s0 + $0x244] sm:$0xff]
  %v3389 = vld [vmem:[%s0 + $0x24c] sm:$0xff]
  %v3390 = vld [vmem:[%s0 + $0x254] sm:$0xff]
  %v3391 = vld [vmem:[%s0 + $0x25c] sm:$0xff]
  %v3392 = vld [vmem:[%s0 + $0x264] sm:$0xff]
  %v3393 = vld [vmem:[%s0 + $0x26c] sm:$0xff]
  %v3394 = vld [vmem:[%s0 + $0x274] sm:$0xff]
  %v3395 = vld [vmem:[%s0 + $0x27c] sm:$0xff]
  %v3396 = vld [vmem:[%s0 + $0x284] sm:$0xff]
  %v3397 = vld [vmem:[%s0 + $0x28c] sm:$0xff]
  %v3398 = vld [vmem:[%s0 + $0x294] sm:$0xff]
  %v3399 = vpack.c.bf16 %v3319, %v3318
  %v3400 = vpack.c.bf16 %v3321, %v3320
  %v3401 = vpack.c.bf16 %v3323, %v3322
  %v3402 = vpack.c.bf16 %v3325, %v3324
  %v3403 = vpack.c.bf16 %v3327, %v3326
  %v3404 = vpack.c.bf16 %v3329, %v3328
  %v3405 = vpack.c.bf16 %v3331, %v3330
  %v3406 = vpack.c.bf16 %v3333, %v3332
  %v3407 = vpack.c.bf16 %v3335, %v3334
  %v3408 = vpack.c.bf16 %v3337, %v3336
  %v3409 = vpack.c.bf16 %v3339, %v3338
  %v3410 = vpack.c.bf16 %v3341, %v3340
  %v3411 = vpack.c.bf16 %v3343, %v3342
  %v3412 = vpack.c.bf16 %v3345, %v3344
  %v3413 = vpack.c.bf16 %v3347, %v3346
  %v3414 = vpack.c.bf16 %v3349, %v3348
  %v3415 = vpack.c.bf16 %v3351, %v3350
  %v3416 = vpack.c.bf16 %v3353, %v3352
  %v3417 = vpack.c.bf16 %v3355, %v3354
  %v3418 = vpack.c.bf16 %v3357, %v3356
  %v3419 = vpack.c.bf16 %v3359, %v3358
  %v3420 = vpack.c.bf16 %v3361, %v3360
  %v3421 = vpack.c.bf16 %v3363, %v3362
  %v3422 = vpack.c.bf16 %v3365, %v3364
  %v3423 = vpack.c.bf16 %v3367, %v3366
  %v3424 = vpack.c.bf16 %v3369, %v3368
  %v3425 = vpack.c.bf16 %v3371, %v3370
  %v3426 = vpack.c.bf16 %v3373, %v3372
  %v3427 = vpack.c.bf16 %v3375, %v3374
  %v3428 = vpack.c.bf16 %v3377, %v3376
  %v3429 = vpack.c.bf16 %v3379, %v3378
  %v3430 = vpack.c.bf16 %v3381, %v3380
  %v3431 = vpack.c.bf16 %v3383, %v3382
  %v3432 = vpack.c.bf16 %v3385, %v3384
  %v3433 = vpack.c.bf16 %v3387, %v3386
  %v3434 = vpack.c.bf16 %v3389, %v3388
  %v3435 = vpack.c.bf16 %v3391, %v3390
  %v3436 = vpack.c.bf16 %v3393, %v3392
  %v3437 = vpack.c.bf16 %v3395, %v3394
  %v3438 = vpack.c.bf16 %v3397, %v3396
  %v3439 = vpack.c.bf16 %v3398, %v3398
  %s3440 = scalar_lea.vmem %s1, 10
  %v3441 = vld [vmem:[%s3440] sm:$0x3]
  %v3443 = vsel %vm271, %v3399, 0
  %v3446 = vsel %vm271, %v3400, 0
  %v3449 = vsel %vm271, %v3401, 0
  %v3452 = vsel %vm271, %v3402, 0
  %v3455 = vsel %vm271, %v3403, 0
  %v3458 = vsel %vm271, %v3404, 0
  %v3461 = vsel %vm271, %v3405, 0
  %v3464 = vsel %vm271, %v3406, 0
  %v3467 = vsel %vm271, %v3407, 0
  %v3470 = vsel %vm271, %v3408, 0
  %v3473 = vsel %vm271, %v3409, 0
  %v3476 = vsel %vm271, %v3410, 0
  %v3479 = vsel %vm271, %v3411, 0
  %v3482 = vsel %vm271, %v3412, 0
  %v3485 = vsel %vm271, %v3413, 0
  %v3488 = vsel %vm271, %v3414, 0
  %v3491 = vsel %vm271, %v3415, 0
  %v3494 = vsel %vm271, %v3416, 0
  %v3497 = vsel %vm271, %v3417, 0
  %v3500 = vsel %vm271, %v3418, 0
  %v3503 = vsel %vm271, %v3419, 0
  %v3506 = vsel %vm271, %v3420, 0
  %v3509 = vsel %vm271, %v3421, 0
  %v3512 = vsel %vm271, %v3422, 0
  %v3515 = vsel %vm271, %v3423, 0
  %v3518 = vsel %vm271, %v3424, 0
  %v3521 = vsel %vm271, %v3425, 0
  %v3524 = vsel %vm271, %v3426, 0
  %v3527 = vsel %vm271, %v3427, 0
  %v3530 = vsel %vm271, %v3428, 0
  %v3533 = vsel %vm271, %v3429, 0
  %v3536 = vsel %vm271, %v3430, 0
  %v3539 = vsel %vm271, %v3431, 0
  %v3542 = vsel %vm271, %v3432, 0
  %v3545 = vsel %vm271, %v3433, 0
  %v3548 = vsel %vm271, %v3434, 0
  %v3551 = vsel %vm271, %v3435, 0
  %v3554 = vsel %vm271, %v3436, 0
  %v3557 = vsel %vm271, %v3437, 0
  %v3560 = vsel %vm271, %v3438, 0
  %v3563 = vsel %vm271, %v3439, 0
  %v3566 = vsel %vm395, %v3441, 0
  %3568 = vmatprep.subr.bf16.mxu0 0
  %3569 = vmatpush1.bf16.msra.mxu0 0
  %3570 = vmatprep.subr.bf16.mxu0 0
  %3571 = vmatpush1.bf16.msra.mxu0 0
  %3572 = vmatprep.subr.bf16.mxu0 0
  %3573 = vmatpush1.bf16.msra.mxu0 0
  %3574 = vmatprep.subr.bf16.mxu0 0
  %3575 = vmatpush1.bf16.msra.mxu0 0
  %3576 = vmatprep.subr.bf16.mxu0 0
  %3577 = vmatpush1.bf16.msra.mxu0 0
  %3578 = vmatprep.subr.bf16.mxu0 0
  %3579 = vmatpush1.bf16.msra.mxu0 0
  %3580 = vmatprep.subr.bf16.mxu0 0
  %3581 = vmatpush1.bf16.msra.mxu0 0
  %3582 = vmatprep.subr.bf16.mxu0 0
  %3583 = vmatpush1.bf16.msra.mxu0 %v3566
  %3584 = vmatprep.subr.bf16.mxu0 0
  %3585 = vmatpush2.bf16.msra.mxu0 0
  %3586 = vmatprep.subr.bf16.mxu0 0
  %3587 = vmatpush2.bf16.msra.mxu0 0
  %3588 = vmatprep.subr.bf16.mxu0 0
  %3589 = vmatpush2.bf16.msra.mxu0 0
  %3590 = vmatprep.subr.bf16.mxu0 0
  %3591 = vmatpush2.bf16.msra.mxu0 0
  %3592 = vmatprep.subr.bf16.mxu0 0
  %3593 = vmatpush2.bf16.msra.mxu0 0
  %3594 = vmatprep.subr.bf16.mxu0 0
  %3595 = vmatpush2.bf16.msra.mxu0 0
  %3596 = vmatprep.subr.bf16.mxu0 0
  %3597 = vmatpush2.bf16.msra.mxu0 0
  %3598 = vmatprep.subr.bf16.mxu0 0
  %3599 = vmatpush2.bf16.msra.mxu0 0
  %3600 = vmatprep.mubr.bf16.mxu0 0
  %3601 = vmatmul.mubr.bf16.gmra.mxu0 %v3443
  %v3602 = vpop.f32.mrf.mxu0
  %v3603 = vadd.f32 0.0, %v3602
  %v3604 = vpop.f32.mrf.mxu0
  %v3605 = vpop.f32.mrf.mxu0
  %v3606 = vadd.f32 0.0, %v3605
  %v3607 = vpop.f32.mrf.mxu0
  %3608 = vmatprep.mubr.bf16.mxu0 0
  %3609 = vmatmul.mubr.bf16.gmra.mxu0 %v3446
  %v3610 = vpop.f32.mrf.mxu0
  %v3611 = vadd.f32 0.0, %v3610
  %v3612 = vpop.f32.mrf.mxu0
  %v3613 = vpop.f32.mrf.mxu0
  %v3614 = vadd.f32 0.0, %v3613
  %v3615 = vpop.f32.mrf.mxu0
  %3616 = vmatprep.mubr.bf16.mxu0 0
  %3617 = vmatmul.mubr.bf16.gmra.mxu0 %v3449
  %v3618 = vpop.f32.mrf.mxu0
  %v3619 = vadd.f32 0.0, %v3618
  %v3620 = vpop.f32.mrf.mxu0
  %v3621 = vpop.f32.mrf.mxu0
  %v3622 = vadd.f32 0.0, %v3621
  %v3623 = vpop.f32.mrf.mxu0
  %3624 = vmatprep.mubr.bf16.mxu0 0
  %3625 = vmatmul.mubr.bf16.gmra.mxu0 %v3452
  %v3626 = vpop.f32.mrf.mxu0
  %v3627 = vadd.f32 0.0, %v3626
  %v3628 = vpop.f32.mrf.mxu0
  %v3629 = vpop.f32.mrf.mxu0
  %v3630 = vadd.f32 0.0, %v3629
  %v3631 = vpop.f32.mrf.mxu0
  %3632 = vmatprep.mubr.bf16.mxu0 0
  %3633 = vmatmul.mubr.bf16.gmra.mxu0 %v3455
  %v3634 = vpop.f32.mrf.mxu0
  %v3635 = vadd.f32 0.0, %v3634
  %v3636 = vpop.f32.mrf.mxu0
  %v3637 = vpop.f32.mrf.mxu0
  %v3638 = vadd.f32 0.0, %v3637
  %v3639 = vpop.f32.mrf.mxu0
  %3640 = vmatprep.mubr.bf16.mxu0 0
  %3641 = vmatmul.mubr.bf16.gmra.mxu0 %v3458
  %v3642 = vpop.f32.mrf.mxu0
  %v3643 = vadd.f32 0.0, %v3642
  %v3644 = vpop.f32.mrf.mxu0
  %v3645 = vpop.f32.mrf.mxu0
  %v3646 = vadd.f32 0.0, %v3645
  %v3647 = vpop.f32.mrf.mxu0
  %3648 = vmatprep.mubr.bf16.mxu0 0
  %3649 = vmatmul.mubr.bf16.gmra.mxu0 %v3461
  %v3650 = vpop.f32.mrf.mxu0
  %v3651 = vadd.f32 0.0, %v3650
  %v3652 = vpop.f32.mrf.mxu0
  %v3653 = vpop.f32.mrf.mxu0
  %v3654 = vadd.f32 0.0, %v3653
  %v3655 = vpop.f32.mrf.mxu0
  %3656 = vmatprep.mubr.bf16.mxu0 0
  %3657 = vmatmul.mubr.bf16.gmra.mxu0 %v3464
  %v3658 = vpop.f32.mrf.mxu0
  %v3659 = vadd.f32 0.0, %v3658
  %v3660 = vpop.f32.mrf.mxu0
  %v3661 = vpop.f32.mrf.mxu0
  %v3662 = vadd.f32 0.0, %v3661
  %v3663 = vpop.f32.mrf.mxu0
  %3664 = vmatprep.mubr.bf16.mxu0 0
  %3665 = vmatmul.mubr.bf16.gmra.mxu0 %v3467
  %v3666 = vpop.f32.mrf.mxu0
  %v3667 = vadd.f32 0.0, %v3666
  %v3668 = vpop.f32.mrf.mxu0
  %v3669 = vpop.f32.mrf.mxu0
  %v3670 = vadd.f32 0.0, %v3669
  %v3671 = vpop.f32.mrf.mxu0
  %3672 = vmatprep.mubr.bf16.mxu0 0
  %3673 = vmatmul.mubr.bf16.gmra.mxu0 %v3470
  %v3674 = vpop.f32.mrf.mxu0
  %v3675 = vadd.f32 0.0, %v3674
  %v3676 = vpop.f32.mrf.mxu0
  %v3677 = vpop.f32.mrf.mxu0
  %v3678 = vadd.f32 0.0, %v3677
  %v3679 = vpop.f32.mrf.mxu0
  %3680 = vmatprep.mubr.bf16.mxu0 0
  %3681 = vmatmul.mubr.bf16.gmra.mxu0 %v3473
  %v3682 = vpop.f32.mrf.mxu0
  %v3683 = vadd.f32 0.0, %v3682
  %v3684 = vpop.f32.mrf.mxu0
  %v3685 = vpop.f32.mrf.mxu0
  %v3686 = vadd.f32 0.0, %v3685
  %v3687 = vpop.f32.mrf.mxu0
  %3688 = vmatprep.mubr.bf16.mxu0 0
  %3689 = vmatmul.mubr.bf16.gmra.mxu0 %v3476
  %v3690 = vpop.f32.mrf.mxu0
  %v3691 = vadd.f32 0.0, %v3690
  %v3692 = vpop.f32.mrf.mxu0
  %v3693 = vpop.f32.mrf.mxu0
  %v3694 = vadd.f32 0.0, %v3693
  %v3695 = vpop.f32.mrf.mxu0
  %3696 = vmatprep.mubr.bf16.mxu0 0
  %3697 = vmatmul.mubr.bf16.gmra.mxu0 %v3479
  %v3698 = vpop.f32.mrf.mxu0
  %v3699 = vadd.f32 0.0, %v3698
  %v3700 = vpop.f32.mrf.mxu0
  %v3701 = vpop.f32.mrf.mxu0
  %v3702 = vadd.f32 0.0, %v3701
  %v3703 = vpop.f32.mrf.mxu0
  %3704 = vmatprep.mubr.bf16.mxu0 0
  %3705 = vmatmul.mubr.bf16.gmra.mxu0 %v3482
  %v3706 = vpop.f32.mrf.mxu0
  %v3707 = vadd.f32 0.0, %v3706
  %v3708 = vpop.f32.mrf.mxu0
  %v3709 = vpop.f32.mrf.mxu0
  %v3710 = vadd.f32 0.0, %v3709
  %v3711 = vpop.f32.mrf.mxu0
  %3712 = vmatprep.mubr.bf16.mxu0 0
  %3713 = vmatmul.mubr.bf16.gmra.mxu0 %v3485
  %v3714 = vpop.f32.mrf.mxu0
  %v3715 = vadd.f32 0.0, %v3714
  %v3716 = vpop.f32.mrf.mxu0
  %v3717 = vpop.f32.mrf.mxu0
  %v3718 = vadd.f32 0.0, %v3717
  %v3719 = vpop.f32.mrf.mxu0
  %3720 = vmatprep.mubr.bf16.mxu0 0
  %3721 = vmatmul.mubr.bf16.gmra.mxu0 %v3488
  %v3722 = vpop.f32.mrf.mxu0
  %v3723 = vadd.f32 0.0, %v3722
  %v3724 = vpop.f32.mrf.mxu0
  %v3725 = vpop.f32.mrf.mxu0
  %v3726 = vadd.f32 0.0, %v3725
  %v3727 = vpop.f32.mrf.mxu0
  %3728 = vmatprep.mubr.bf16.mxu0 0
  %3729 = vmatmul.mubr.bf16.gmra.mxu0 %v3491
  %v3730 = vpop.f32.mrf.mxu0
  %v3731 = vadd.f32 0.0, %v3730
  %v3732 = vpop.f32.mrf.mxu0
  %v3733 = vpop.f32.mrf.mxu0
  %v3734 = vadd.f32 0.0, %v3733
  %v3735 = vpop.f32.mrf.mxu0
  %3736 = vmatprep.mubr.bf16.mxu0 0
  %3737 = vmatmul.mubr.bf16.gmra.mxu0 %v3494
  %v3738 = vpop.f32.mrf.mxu0
  %v3739 = vadd.f32 0.0, %v3738
  %v3740 = vpop.f32.mrf.mxu0
  %v3741 = vpop.f32.mrf.mxu0
  %v3742 = vadd.f32 0.0, %v3741
  %v3743 = vpop.f32.mrf.mxu0
  %3744 = vmatprep.mubr.bf16.mxu0 0
  %3745 = vmatmul.mubr.bf16.gmra.mxu0 %v3497
  %v3746 = vpop.f32.mrf.mxu0
  %v3747 = vadd.f32 0.0, %v3746
  %v3748 = vpop.f32.mrf.mxu0
  %v3749 = vpop.f32.mrf.mxu0
  %v3750 = vadd.f32 0.0, %v3749
  %v3751 = vpop.f32.mrf.mxu0
  %3752 = vmatprep.mubr.bf16.mxu0 0
  %3753 = vmatmul.mubr.bf16.gmra.mxu0 %v3500
  %v3754 = vpop.f32.mrf.mxu0
  %v3755 = vadd.f32 0.0, %v3754
  %v3756 = vpop.f32.mrf.mxu0
  %v3757 = vpop.f32.mrf.mxu0
  %v3758 = vadd.f32 0.0, %v3757
  %v3759 = vpop.f32.mrf.mxu0
  %3760 = vmatprep.mubr.bf16.mxu0 0
  %3761 = vmatmul.mubr.bf16.gmra.mxu0 %v3503
  %v3762 = vpop.f32.mrf.mxu0
  %v3763 = vadd.f32 0.0, %v3762
  %v3764 = vpop.f32.mrf.mxu0
  %v3765 = vpop.f32.mrf.mxu0
  %v3766 = vadd.f32 0.0, %v3765
  %v3767 = vpop.f32.mrf.mxu0
  %3768 = vmatprep.mubr.bf16.mxu0 0
  %3769 = vmatmul.mubr.bf16.gmra.mxu0 %v3506
  %v3770 = vpop.f32.mrf.mxu0
  %v3771 = vadd.f32 0.0, %v3770
  %v3772 = vpop.f32.mrf.mxu0
  %v3773 = vpop.f32.mrf.mxu0
  %v3774 = vadd.f32 0.0, %v3773
  %v3775 = vpop.f32.mrf.mxu0
  %3776 = vmatprep.mubr.bf16.mxu0 0
  %3777 = vmatmul.mubr.bf16.gmra.mxu0 %v3509
  %v3778 = vpop.f32.mrf.mxu0
  %v3779 = vadd.f32 0.0, %v3778
  %v3780 = vpop.f32.mrf.mxu0
  %v3781 = vpop.f32.mrf.mxu0
  %v3782 = vadd.f32 0.0, %v3781
  %v3783 = vpop.f32.mrf.mxu0
  %3784 = vmatprep.mubr.bf16.mxu0 0
  %3785 = vmatmul.mubr.bf16.gmra.mxu0 %v3512
  %v3786 = vpop.f32.mrf.mxu0
  %v3787 = vadd.f32 0.0, %v3786
  %v3788 = vpop.f32.mrf.mxu0
  %v3789 = vpop.f32.mrf.mxu0
  %v3790 = vadd.f32 0.0, %v3789
  %v3791 = vpop.f32.mrf.mxu0
  %3792 = vmatprep.mubr.bf16.mxu0 0
  %3793 = vmatmul.mubr.bf16.gmra.mxu0 %v3515
  %v3794 = vpop.f32.mrf.mxu0
  %v3795 = vadd.f32 0.0, %v3794
  %v3796 = vpop.f32.mrf.mxu0
  %v3797 = vpop.f32.mrf.mxu0
  %v3798 = vadd.f32 0.0, %v3797
  %v3799 = vpop.f32.mrf.mxu0
  %3800 = vmatprep.mubr.bf16.mxu0 0
  %3801 = vmatmul.mubr.bf16.gmra.mxu0 %v3518
  %v3802 = vpop.f32.mrf.mxu0
  %v3803 = vadd.f32 0.0, %v3802
  %v3804 = vpop.f32.mrf.mxu0
  %v3805 = vpop.f32.mrf.mxu0
  %v3806 = vadd.f32 0.0, %v3805
  %v3807 = vpop.f32.mrf.mxu0
  %3808 = vmatprep.mubr.bf16.mxu0 0
  %3809 = vmatmul.mubr.bf16.gmra.mxu0 %v3521
  %v3810 = vpop.f32.mrf.mxu0
  %v3811 = vadd.f32 0.0, %v3810
  %v3812 = vpop.f32.mrf.mxu0
  %v3813 = vpop.f32.mrf.mxu0
  %v3814 = vadd.f32 0.0, %v3813
  %v3815 = vpop.f32.mrf.mxu0
  %3816 = vmatprep.mubr.bf16.mxu0 0
  %3817 = vmatmul.mubr.bf16.gmra.mxu0 %v3524
  %v3818 = vpop.f32.mrf.mxu0
  %v3819 = vadd.f32 0.0, %v3818
  %v3820 = vpop.f32.mrf.mxu0
  %v3821 = vpop.f32.mrf.mxu0
  %v3822 = vadd.f32 0.0, %v3821
  %v3823 = vpop.f32.mrf.mxu0
  %3824 = vmatprep.mubr.bf16.mxu0 0
  %3825 = vmatmul.mubr.bf16.gmra.mxu0 %v3527
  %v3826 = vpop.f32.mrf.mxu0
  %v3827 = vadd.f32 0.0, %v3826
  %v3828 = vpop.f32.mrf.mxu0
  %v3829 = vpop.f32.mrf.mxu0
  %v3830 = vadd.f32 0.0, %v3829
  %v3831 = vpop.f32.mrf.mxu0
  %3832 = vmatprep.mubr.bf16.mxu0 0
  %3833 = vmatmul.mubr.bf16.gmra.mxu0 %v3530
  %v3834 = vpop.f32.mrf.mxu0
  %v3835 = vadd.f32 0.0, %v3834
  %v3836 = vpop.f32.mrf.mxu0
  %v3837 = vpop.f32.mrf.mxu0
  %v3838 = vadd.f32 0.0, %v3837
  %v3839 = vpop.f32.mrf.mxu0
  %3840 = vmatprep.mubr.bf16.mxu0 0
  %3841 = vmatmul.mubr.bf16.gmra.mxu0 %v3533
  %v3842 = vpop.f32.mrf.mxu0
  %v3843 = vadd.f32 0.0, %v3842
  %v3844 = vpop.f32.mrf.mxu0
  %v3845 = vpop.f32.mrf.mxu0
  %v3846 = vadd.f32 0.0, %v3845
  %v3847 = vpop.f32.mrf.mxu0
  %3848 = vmatprep.mubr.bf16.mxu0 0
  %3849 = vmatmul.mubr.bf16.gmra.mxu0 %v3536
  %v3850 = vpop.f32.mrf.mxu0
  %v3851 = vadd.f32 0.0, %v3850
  %v3852 = vpop.f32.mrf.mxu0
  %v3853 = vpop.f32.mrf.mxu0
  %v3854 = vadd.f32 0.0, %v3853
  %v3855 = vpop.f32.mrf.mxu0
  %3856 = vmatprep.mubr.bf16.mxu0 0
  %3857 = vmatmul.mubr.bf16.gmra.mxu0 %v3539
  %v3858 = vpop.f32.mrf.mxu0
  %v3859 = vadd.f32 0.0, %v3858
  %v3860 = vpop.f32.mrf.mxu0
  %v3861 = vpop.f32.mrf.mxu0
  %v3862 = vadd.f32 0.0, %v3861
  %v3863 = vpop.f32.mrf.mxu0
  %3864 = vmatprep.mubr.bf16.mxu0 0
  %3865 = vmatmul.mubr.bf16.gmra.mxu0 %v3542
  %v3866 = vpop.f32.mrf.mxu0
  %v3867 = vadd.f32 0.0, %v3866
  %v3868 = vpop.f32.mrf.mxu0
  %v3869 = vpop.f32.mrf.mxu0
  %v3870 = vadd.f32 0.0, %v3869
  %v3871 = vpop.f32.mrf.mxu0
  %3872 = vmatprep.mubr.bf16.mxu0 0
  %3873 = vmatmul.mubr.bf16.gmra.mxu0 %v3545
  %v3874 = vpop.f32.mrf.mxu0
  %v3875 = vadd.f32 0.0, %v3874
  %v3876 = vpop.f32.mrf.mxu0
  %v3877 = vpop.f32.mrf.mxu0
  %v3878 = vadd.f32 0.0, %v3877
  %v3879 = vpop.f32.mrf.mxu0
  %3880 = vmatprep.mubr.bf16.mxu0 0
  %3881 = vmatmul.mubr.bf16.gmra.mxu0 %v3548
  %v3882 = vpop.f32.mrf.mxu0
  %v3883 = vadd.f32 0.0, %v3882
  %v3884 = vpop.f32.mrf.mxu0
  %v3885 = vpop.f32.mrf.mxu0
  %v3886 = vadd.f32 0.0, %v3885
  %v3887 = vpop.f32.mrf.mxu0
  %3888 = vmatprep.mubr.bf16.mxu0 0
  %3889 = vmatmul.mubr.bf16.gmra.mxu0 %v3551
  %v3890 = vpop.f32.mrf.mxu0
  %v3891 = vadd.f32 0.0, %v3890
  %v3892 = vpop.f32.mrf.mxu0
  %v3893 = vpop.f32.mrf.mxu0
  %v3894 = vadd.f32 0.0, %v3893
  %v3895 = vpop.f32.mrf.mxu0
  %3896 = vmatprep.mubr.bf16.mxu0 0
  %3897 = vmatmul.mubr.bf16.gmra.mxu0 %v3554
  %v3898 = vpop.f32.mrf.mxu0
  %v3899 = vadd.f32 0.0, %v3898
  %v3900 = vpop.f32.mrf.mxu0
  %v3901 = vpop.f32.mrf.mxu0
  %v3902 = vadd.f32 0.0, %v3901
  %v3903 = vpop.f32.mrf.mxu0
  %3904 = vmatprep.mubr.bf16.mxu0 0
  %3905 = vmatmul.mubr.bf16.gmra.mxu0 %v3557
  %v3906 = vpop.f32.mrf.mxu0
  %v3907 = vadd.f32 0.0, %v3906
  %v3908 = vpop.f32.mrf.mxu0
  %v3909 = vpop.f32.mrf.mxu0
  %v3910 = vadd.f32 0.0, %v3909
  %v3911 = vpop.f32.mrf.mxu0
  %3912 = vmatprep.mubr.bf16.mxu0 0
  %3913 = vmatmul.mubr.bf16.gmra.mxu0 %v3560
  %v3914 = vpop.f32.mrf.mxu0
  %v3915 = vadd.f32 0.0, %v3914
  %v3916 = vpop.f32.mrf.mxu0
  %v3917 = vpop.f32.mrf.mxu0
  %v3918 = vadd.f32 0.0, %v3917
  %v3919 = vpop.f32.mrf.mxu0
  %3920 = vmatprep.mubr.bf16.mxu0 0
  %3921 = vmatmul.mubr.bf16.gmra.mxu0 %v3563
  %v3922 = vpop.f32.mrf.mxu0
  %v3923 = vadd.f32 0.0, %v3922
  %v3924 = vpop.f32.mrf.mxu0
  %v3925 = vpop.f32.mrf.mxu0
  %v3926 = vpop.f32.mrf.mxu0
  %3927 = vdwg.mxu0
  %v3928 = vadd.f32 %v3237, %v3603
  %v3929 = vadd.f32 %v3238, %v3606
  %v3930 = vadd.f32 %v3239, %v3611
  %v3931 = vadd.f32 %v3240, %v3614
  %v3932 = vadd.f32 %v3241, %v3619
  %v3933 = vadd.f32 %v3242, %v3622
  %v3934 = vadd.f32 %v3243, %v3627
  %v3935 = vadd.f32 %v3244, %v3630
  %v3936 = vadd.f32 %v3245, %v3635
  %v3937 = vadd.f32 %v3246, %v3638
  %v3938 = vadd.f32 %v3247, %v3643
  %v3939 = vadd.f32 %v3248, %v3646
  %v3940 = vadd.f32 %v3249, %v3651
  %v3941 = vadd.f32 %v3250, %v3654
  %v3942 = vadd.f32 %v3251, %v3659
  %v3943 = vadd.f32 %v3252, %v3662
  %v3944 = vadd.f32 %v3253, %v3667
  %v3945 = vadd.f32 %v3254, %v3670
  %v3946 = vadd.f32 %v3255, %v3675
  %v3947 = vadd.f32 %v3256, %v3678
  %v3948 = vadd.f32 %v3257, %v3683
  %v3949 = vadd.f32 %v3258, %v3686
  %v3950 = vadd.f32 %v3259, %v3691
  %v3951 = vadd.f32 %v3260, %v3694
  %v3952 = vadd.f32 %v3261, %v3699
  %v3953 = vadd.f32 %v3262, %v3702
  %v3954 = vadd.f32 %v3263, %v3707
  %v3955 = vadd.f32 %v3264, %v3710
  %v3956 = vadd.f32 %v3265, %v3715
  %v3957 = vadd.f32 %v3266, %v3718
  %v3958 = vadd.f32 %v3267, %v3723
  %v3959 = vadd.f32 %v3268, %v3726
  %v3960 = vadd.f32 %v3269, %v3731
  %v3961 = vadd.f32 %v3270, %v3734
  %v3962 = vadd.f32 %v3271, %v3739
  %v3963 = vadd.f32 %v3272, %v3742
  %v3964 = vadd.f32 %v3273, %v3747
  %v3965 = vadd.f32 %v3274, %v3750
  %v3966 = vadd.f32 %v3275, %v3755
  %v3967 = vadd.f32 %v3276, %v3758
  %v3968 = vadd.f32 %v3277, %v3763
  %v3969 = vadd.f32 %v3278, %v3766
  %v3970 = vadd.f32 %v3279, %v3771
  %v3971 = vadd.f32 %v3280, %v3774
  %v3972 = vadd.f32 %v3281, %v3779
  %v3973 = vadd.f32 %v3282, %v3782
  %v3974 = vadd.f32 %v3283, %v3787
  %v3975 = vadd.f32 %v3284, %v3790
  %v3976 = vadd.f32 %v3285, %v3795
  %v3977 = vadd.f32 %v3286, %v3798
  %v3978 = vadd.f32 %v3287, %v3803
  %v3979 = vadd.f32 %v3288, %v3806
  %v3980 = vadd.f32 %v3289, %v3811
  %v3981 = vadd.f32 %v3290, %v3814
  %v3982 = vadd.f32 %v3291, %v3819
  %v3983 = vadd.f32 %v3292, %v3822
  %v3984 = vadd.f32 %v3293, %v3827
  %v3985 = vadd.f32 %v3294, %v3830
  %v3986 = vadd.f32 %v3295, %v3835
  %v3987 = vadd.f32 %v3296, %v3838
  %v3988 = vadd.f32 %v3297, %v3843
  %v3989 = vadd.f32 %v3298, %v3846
  %v3990 = vadd.f32 %v3299, %v3851
  %v3991 = vadd.f32 %v3300, %v3854
  %v3992 = vadd.f32 %v3301, %v3859
  %v3993 = vadd.f32 %v3302, %v3862
  %v3994 = vadd.f32 %v3303, %v3867
  %v3995 = vadd.f32 %v3304, %v3870
  %v3996 = vadd.f32 %v3305, %v3875
  %v3997 = vadd.f32 %v3306, %v3878
  %v3998 = vadd.f32 %v3307, %v3883
  %v3999 = vadd.f32 %v3308, %v3886
  %v4000 = vadd.f32 %v3309, %v3891
  %v4001 = vadd.f32 %v3310, %v3894
  %v4002 = vadd.f32 %v3311, %v3899
  %v4003 = vadd.f32 %v3312, %v3902
  %v4004 = vadd.f32 %v3313, %v3907
  %v4005 = vadd.f32 %v3314, %v3910
  %v4006 = vadd.f32 %v3315, %v3915
  %v4007 = vadd.f32 %v3316, %v3918
  %v4008 = vadd.f32 %v3317, %v3923
  %v4009 = vld [vmem:[%s0 + $0x24] sm:$0xff]
  %v4010 = vld [vmem:[%s0 + $0x2c] sm:$0xff]
  %v4011 = vld [vmem:[%s0 + $0x34] sm:$0xff]
  %v4012 = vld [vmem:[%s0 + $0x3c] sm:$0xff]
  %v4013 = vld [vmem:[%s0 + $0x44] sm:$0xff]
  %v4014 = vld [vmem:[%s0 + $0x4c] sm:$0xff]
  %v4015 = vld [vmem:[%s0 + $0x54] sm:$0xff]
  %v4016 = vld [vmem:[%s0 + $0x5c] sm:$0xff]
  %v4017 = vld [vmem:[%s0 + $0x64] sm:$0xff]
  %v4018 = vld [vmem:[%s0 + $0x6c] sm:$0xff]
  %v4019 = vld [vmem:[%s0 + $0x74] sm:$0xff]
  %v4020 = vld [vmem:[%s0 + $0x7c] sm:$0xff]
  %v4021 = vld [vmem:[%s0 + $0x84] sm:$0xff]
  %v4022 = vld [vmem:[%s0 + $0x8c] sm:$0xff]
  %v4023 = vld [vmem:[%s0 + $0x94] sm:$0xff]
  %v4024 = vld [vmem:[%s0 + $0x9c] sm:$0xff]
  %v4025 = vld [vmem:[%s0 + $0xa4] sm:$0xff]
  %v4026 = vld [vmem:[%s0 + $0xac] sm:$0xff]
  %v4027 = vld [vmem:[%s0 + $0xb4] sm:$0xff]
  %v4028 = vld [vmem:[%s0 + $0xbc] sm:$0xff]
  %v4029 = vld [vmem:[%s0 + $0xc4] sm:$0xff]
  %v4030 = vld [vmem:[%s0 + $0xcc] sm:$0xff]
  %v4031 = vld [vmem:[%s0 + $0xd4] sm:$0xff]
  %v4032 = vld [vmem:[%s0 + $0xdc] sm:$0xff]
  %v4033 = vld [vmem:[%s0 + $0xe4] sm:$0xff]
  %v4034 = vld [vmem:[%s0 + $0xec] sm:$0xff]
  %v4035 = vld [vmem:[%s0 + $0xf4] sm:$0xff]
  %v4036 = vld [vmem:[%s0 + $0xfc] sm:$0xff]
  %v4037 = vld [vmem:[%s0 + $0x104] sm:$0xff]
  %v4038 = vld [vmem:[%s0 + $0x10c] sm:$0xff]
  %v4039 = vld [vmem:[%s0 + $0x114] sm:$0xff]
  %v4040 = vld [vmem:[%s0 + $0x11c] sm:$0xff]
  %v4041 = vld [vmem:[%s0 + $0x124] sm:$0xff]
  %v4042 = vld [vmem:[%s0 + $0x12c] sm:$0xff]
  %v4043 = vld [vmem:[%s0 + $0x134] sm:$0xff]
  %v4044 = vld [vmem:[%s0 + $0x13c] sm:$0xff]
  %v4045 = vld [vmem:[%s0 + $0x144] sm:$0xff]
  %v4046 = vld [vmem:[%s0 + $0x14c] sm:$0xff]
  %v4047 = vld [vmem:[%s0 + $0x154] sm:$0xff]
  %v4048 = vld [vmem:[%s0 + $0x15c] sm:$0xff]
  %v4049 = vld [vmem:[%s0 + $0x164] sm:$0xff]
  %v4050 = vld [vmem:[%s0 + $0x16c] sm:$0xff]
  %v4051 = vld [vmem:[%s0 + $0x174] sm:$0xff]
  %v4052 = vld [vmem:[%s0 + $0x17c] sm:$0xff]
  %v4053 = vld [vmem:[%s0 + $0x184] sm:$0xff]
  %v4054 = vld [vmem:[%s0 + $0x18c] sm:$0xff]
  %v4055 = vld [vmem:[%s0 + $0x194] sm:$0xff]
  %v4056 = vld [vmem:[%s0 + $0x19c] sm:$0xff]
  %v4057 = vld [vmem:[%s0 + $0x1a4] sm:$0xff]
  %v4058 = vld [vmem:[%s0 + $0x1ac] sm:$0xff]
  %v4059 = vld [vmem:[%s0 + $0x1b4] sm:$0xff]
  %v4060 = vld [vmem:[%s0 + $0x1bc] sm:$0xff]
  %v4061 = vld [vmem:[%s0 + $0x1c4] sm:$0xff]
  %v4062 = vld [vmem:[%s0 + $0x1cc] sm:$0xff]
  %v4063 = vld [vmem:[%s0 + $0x1d4] sm:$0xff]
  %v4064 = vld [vmem:[%s0 + $0x1dc] sm:$0xff]
  %v4065 = vld [vmem:[%s0 + $0x1e4] sm:$0xff]
  %v4066 = vld [vmem:[%s0 + $0x1ec] sm:$0xff]
  %v4067 = vld [vmem:[%s0 + $0x1f4] sm:$0xff]
  %v4068 = vld [vmem:[%s0 + $0x1fc] sm:$0xff]
  %v4069 = vld [vmem:[%s0 + $0x204] sm:$0xff]
  %v4070 = vld [vmem:[%s0 + $0x20c] sm:$0xff]
  %v4071 = vld [vmem:[%s0 + $0x214] sm:$0xff]
  %v4072 = vld [vmem:[%s0 + $0x21c] sm:$0xff]
  %v4073 = vld [vmem:[%s0 + $0x224] sm:$0xff]
  %v4074 = vld [vmem:[%s0 + $0x22c] sm:$0xff]
  %v4075 = vld [vmem:[%s0 + $0x234] sm:$0xff]
  %v4076 = vld [vmem:[%s0 + $0x23c] sm:$0xff]
  %v4077 = vld [vmem:[%s0 + $0x244] sm:$0xff]
  %v4078 = vld [vmem:[%s0 + $0x24c] sm:$0xff]
  %v4079 = vld [vmem:[%s0 + $0x254] sm:$0xff]
  %v4080 = vld [vmem:[%s0 + $0x25c] sm:$0xff]
  %v4081 = vld [vmem:[%s0 + $0x264] sm:$0xff]
  %v4082 = vld [vmem:[%s0 + $0x26c] sm:$0xff]
  %v4083 = vld [vmem:[%s0 + $0x274] sm:$0xff]
  %v4084 = vld [vmem:[%s0 + $0x27c] sm:$0xff]
  %v4085 = vld [vmem:[%s0 + $0x284] sm:$0xff]
  %v4086 = vld [vmem:[%s0 + $0x28c] sm:$0xff]
  %v4087 = vld [vmem:[%s0 + $0x294] sm:$0xff]
  %v4088 = vld [vmem:[%s0 + $0x29c] sm:$0xff]
  %v4089 = vld [vmem:[%s0 + $0x2a4] sm:$0xff]
  %v4090 = vpack.c.bf16 %v4010, %v4009
  %v4091 = vpack.c.bf16 %v4012, %v4011
  %v4092 = vpack.c.bf16 %v4014, %v4013
  %v4093 = vpack.c.bf16 %v4016, %v4015
  %v4094 = vpack.c.bf16 %v4018, %v4017
  %v4095 = vpack.c.bf16 %v4020, %v4019
  %v4096 = vpack.c.bf16 %v4022, %v4021
  %v4097 = vpack.c.bf16 %v4024, %v4023
  %v4098 = vpack.c.bf16 %v4026, %v4025
  %v4099 = vpack.c.bf16 %v4028, %v4027
  %v4100 = vpack.c.bf16 %v4030, %v4029
  %v4101 = vpack.c.bf16 %v4032, %v4031
  %v4102 = vpack.c.bf16 %v4034, %v4033
  %v4103 = vpack.c.bf16 %v4036, %v4035
  %v4104 = vpack.c.bf16 %v4038, %v4037
  %v4105 = vpack.c.bf16 %v4040, %v4039
  %v4106 = vpack.c.bf16 %v4042, %v4041
  %v4107 = vpack.c.bf16 %v4044, %v4043
  %v4108 = vpack.c.bf16 %v4046, %v4045
  %v4109 = vpack.c.bf16 %v4048, %v4047
  %v4110 = vpack.c.bf16 %v4050, %v4049
  %v4111 = vpack.c.bf16 %v4052, %v4051
  %v4112 = vpack.c.bf16 %v4054, %v4053
  %v4113 = vpack.c.bf16 %v4056, %v4055
  %v4114 = vpack.c.bf16 %v4058, %v4057
  %v4115 = vpack.c.bf16 %v4060, %v4059
  %v4116 = vpack.c.bf16 %v4062, %v4061
  %v4117 = vpack.c.bf16 %v4064, %v4063
  %v4118 = vpack.c.bf16 %v4066, %v4065
  %v4119 = vpack.c.bf16 %v4068, %v4067
  %v4120 = vpack.c.bf16 %v4070, %v4069
  %v4121 = vpack.c.bf16 %v4072, %v4071
  %v4122 = vpack.c.bf16 %v4074, %v4073
  %v4123 = vpack.c.bf16 %v4076, %v4075
  %v4124 = vpack.c.bf16 %v4078, %v4077
  %v4125 = vpack.c.bf16 %v4080, %v4079
  %v4126 = vpack.c.bf16 %v4082, %v4081
  %v4127 = vpack.c.bf16 %v4084, %v4083
  %v4128 = vpack.c.bf16 %v4086, %v4085
  %v4129 = vpack.c.bf16 %v4088, %v4087
  %v4130 = vpack.c.bf16 %v4089, %v4089
  %s4131 = scalar_lea.vmem %s1, 12
  %v4132 = vld [vmem:[%s4131] sm:$0x3]
  %v4134 = vsel %vm271, %v4090, 0
  %v4137 = vsel %vm271, %v4091, 0
  %v4140 = vsel %vm271, %v4092, 0
  %v4143 = vsel %vm271, %v4093, 0
  %v4146 = vsel %vm271, %v4094, 0
  %v4149 = vsel %vm271, %v4095, 0
  %v4152 = vsel %vm271, %v4096, 0
  %v4155 = vsel %vm271, %v4097, 0
  %v4158 = vsel %vm271, %v4098, 0
  %v4161 = vsel %vm271, %v4099, 0
  %v4164 = vsel %vm271, %v4100, 0
  %v4167 = vsel %vm271, %v4101, 0
  %v4170 = vsel %vm271, %v4102, 0
  %v4173 = vsel %vm271, %v4103, 0
  %v4176 = vsel %vm271, %v4104, 0
  %v4179 = vsel %vm271, %v4105, 0
  %v4182 = vsel %vm271, %v4106, 0
  %v4185 = vsel %vm271, %v4107, 0
  %v4188 = vsel %vm271, %v4108, 0
  %v4191 = vsel %vm271, %v4109, 0
  %v4194 = vsel %vm271, %v4110, 0
  %v4197 = vsel %vm271, %v4111, 0
  %v4200 = vsel %vm271, %v4112, 0
  %v4203 = vsel %vm271, %v4113, 0
  %v4206 = vsel %vm271, %v4114, 0
  %v4209 = vsel %vm271, %v4115, 0
  %v4212 = vsel %vm271, %v4116, 0
  %v4215 = vsel %vm271, %v4117, 0
  %v4218 = vsel %vm271, %v4118, 0
  %v4221 = vsel %vm271, %v4119, 0
  %v4224 = vsel %vm271, %v4120, 0
  %v4227 = vsel %vm271, %v4121, 0
  %v4230 = vsel %vm271, %v4122, 0
  %v4233 = vsel %vm271, %v4123, 0
  %v4236 = vsel %vm271, %v4124, 0
  %v4239 = vsel %vm271, %v4125, 0
  %v4242 = vsel %vm271, %v4126, 0
  %v4245 = vsel %vm271, %v4127, 0
  %v4248 = vsel %vm271, %v4128, 0
  %v4251 = vsel %vm271, %v4129, 0
  %v4254 = vsel %vm271, %v4130, 0
  %v4257 = vsel %vm395, %v4132, 0
  %4259 = vmatprep.subr.bf16.mxu0 0
  %4260 = vmatpush1.bf16.msra.mxu0 0
  %4261 = vmatprep.subr.bf16.mxu0 0
  %4262 = vmatpush1.bf16.msra.mxu0 0
  %4263 = vmatprep.subr.bf16.mxu0 0
  %4264 = vmatpush1.bf16.msra.mxu0 0
  %4265 = vmatprep.subr.bf16.mxu0 0
  %4266 = vmatpush1.bf16.msra.mxu0 0
  %4267 = vmatprep.subr.bf16.mxu0 0
  %4268 = vmatpush1.bf16.msra.mxu0 0
  %4269 = vmatprep.subr.bf16.mxu0 0
  %4270 = vmatpush1.bf16.msra.mxu0 0
  %4271 = vmatprep.subr.bf16.mxu0 0
  %4272 = vmatpush1.bf16.msra.mxu0 0
  %4273 = vmatprep.subr.bf16.mxu0 0
  %4274 = vmatpush1.bf16.msra.mxu0 %v4257
  %4275 = vmatprep.subr.bf16.mxu0 0
  %4276 = vmatpush2.bf16.msra.mxu0 0
  %4277 = vmatprep.subr.bf16.mxu0 0
  %4278 = vmatpush2.bf16.msra.mxu0 0
  %4279 = vmatprep.subr.bf16.mxu0 0
  %4280 = vmatpush2.bf16.msra.mxu0 0
  %4281 = vmatprep.subr.bf16.mxu0 0
  %4282 = vmatpush2.bf16.msra.mxu0 0
  %4283 = vmatprep.subr.bf16.mxu0 0
  %4284 = vmatpush2.bf16.msra.mxu0 0
  %4285 = vmatprep.subr.bf16.mxu0 0
  %4286 = vmatpush2.bf16.msra.mxu0 0
  %4287 = vmatprep.subr.bf16.mxu0 0
  %4288 = vmatpush2.bf16.msra.mxu0 0
  %4289 = vmatprep.subr.bf16.mxu0 0
  %4290 = vmatpush2.bf16.msra.mxu0 0
  %4291 = vmatprep.mubr.bf16.mxu0 0
  %4292 = vmatmul.mubr.bf16.gmra.mxu0 %v4134
  %v4293 = vpop.f32.mrf.mxu0
  %v4294 = vadd.f32 0.0, %v4293
  %v4295 = vpop.f32.mrf.mxu0
  %v4296 = vpop.f32.mrf.mxu0
  %v4297 = vadd.f32 0.0, %v4296
  %v4298 = vpop.f32.mrf.mxu0
  %4299 = vmatprep.mubr.bf16.mxu0 0
  %4300 = vmatmul.mubr.bf16.gmra.mxu0 %v4137
  %v4301 = vpop.f32.mrf.mxu0
  %v4302 = vadd.f32 0.0, %v4301
  %v4303 = vpop.f32.mrf.mxu0
  %v4304 = vpop.f32.mrf.mxu0
  %v4305 = vadd.f32 0.0, %v4304
  %v4306 = vpop.f32.mrf.mxu0
  %4307 = vmatprep.mubr.bf16.mxu0 0
  %4308 = vmatmul.mubr.bf16.gmra.mxu0 %v4140
  %v4309 = vpop.f32.mrf.mxu0
  %v4310 = vadd.f32 0.0, %v4309
  %v4311 = vpop.f32.mrf.mxu0
  %v4312 = vpop.f32.mrf.mxu0
  %v4313 = vadd.f32 0.0, %v4312
  %v4314 = vpop.f32.mrf.mxu0
  %4315 = vmatprep.mubr.bf16.mxu0 0
  %4316 = vmatmul.mubr.bf16.gmra.mxu0 %v4143
  %v4317 = vpop.f32.mrf.mxu0
  %v4318 = vadd.f32 0.0, %v4317
  %v4319 = vpop.f32.mrf.mxu0
  %v4320 = vpop.f32.mrf.mxu0
  %v4321 = vadd.f32 0.0, %v4320
  %v4322 = vpop.f32.mrf.mxu0
  %4323 = vmatprep.mubr.bf16.mxu0 0
  %4324 = vmatmul.mubr.bf16.gmra.mxu0 %v4146
  %v4325 = vpop.f32.mrf.mxu0
  %v4326 = vadd.f32 0.0, %v4325
  %v4327 = vpop.f32.mrf.mxu0
  %v4328 = vpop.f32.mrf.mxu0
  %v4329 = vadd.f32 0.0, %v4328
  %v4330 = vpop.f32.mrf.mxu0
  %4331 = vmatprep.mubr.bf16.mxu0 0
  %4332 = vmatmul.mubr.bf16.gmra.mxu0 %v4149
  %v4333 = vpop.f32.mrf.mxu0
  %v4334 = vadd.f32 0.0, %v4333
  %v4335 = vpop.f32.mrf.mxu0
  %v4336 = vpop.f32.mrf.mxu0
  %v4337 = vadd.f32 0.0, %v4336
  %v4338 = vpop.f32.mrf.mxu0
  %4339 = vmatprep.mubr.bf16.mxu0 0
  %4340 = vmatmul.mubr.bf16.gmra.mxu0 %v4152
  %v4341 = vpop.f32.mrf.mxu0
  %v4342 = vadd.f32 0.0, %v4341
  %v4343 = vpop.f32.mrf.mxu0
  %v4344 = vpop.f32.mrf.mxu0
  %v4345 = vadd.f32 0.0, %v4344
  %v4346 = vpop.f32.mrf.mxu0
  %4347 = vmatprep.mubr.bf16.mxu0 0
  %4348 = vmatmul.mubr.bf16.gmra.mxu0 %v4155
  %v4349 = vpop.f32.mrf.mxu0
  %v4350 = vadd.f32 0.0, %v4349
  %v4351 = vpop.f32.mrf.mxu0
  %v4352 = vpop.f32.mrf.mxu0
  %v4353 = vadd.f32 0.0, %v4352
  %v4354 = vpop.f32.mrf.mxu0
  %4355 = vmatprep.mubr.bf16.mxu0 0
  %4356 = vmatmul.mubr.bf16.gmra.mxu0 %v4158
  %v4357 = vpop.f32.mrf.mxu0
  %v4358 = vadd.f32 0.0, %v4357
  %v4359 = vpop.f32.mrf.mxu0
  %v4360 = vpop.f32.mrf.mxu0
  %v4361 = vadd.f32 0.0, %v4360
  %v4362 = vpop.f32.mrf.mxu0
  %4363 = vmatprep.mubr.bf16.mxu0 0
  %4364 = vmatmul.mubr.bf16.gmra.mxu0 %v4161
  %v4365 = vpop.f32.mrf.mxu0
  %v4366 = vadd.f32 0.0, %v4365
  %v4367 = vpop.f32.mrf.mxu0
  %v4368 = vpop.f32.mrf.mxu0
  %v4369 = vadd.f32 0.0, %v4368
  %v4370 = vpop.f32.mrf.mxu0
  %4371 = vmatprep.mubr.bf16.mxu0 0
  %4372 = vmatmul.mubr.bf16.gmra.mxu0 %v4164
  %v4373 = vpop.f32.mrf.mxu0
  %v4374 = vadd.f32 0.0, %v4373
  %v4375 = vpop.f32.mrf.mxu0
  %v4376 = vpop.f32.mrf.mxu0
  %v4377 = vadd.f32 0.0, %v4376
  %v4378 = vpop.f32.mrf.mxu0
  %4379 = vmatprep.mubr.bf16.mxu0 0
  %4380 = vmatmul.mubr.bf16.gmra.mxu0 %v4167
  %v4381 = vpop.f32.mrf.mxu0
  %v4382 = vadd.f32 0.0, %v4381
  %v4383 = vpop.f32.mrf.mxu0
  %v4384 = vpop.f32.mrf.mxu0
  %v4385 = vadd.f32 0.0, %v4384
  %v4386 = vpop.f32.mrf.mxu0
  %4387 = vmatprep.mubr.bf16.mxu0 0
  %4388 = vmatmul.mubr.bf16.gmra.mxu0 %v4170
  %v4389 = vpop.f32.mrf.mxu0
  %v4390 = vadd.f32 0.0, %v4389
  %v4391 = vpop.f32.mrf.mxu0
  %v4392 = vpop.f32.mrf.mxu0
  %v4393 = vadd.f32 0.0, %v4392
  %v4394 = vpop.f32.mrf.mxu0
  %4395 = vmatprep.mubr.bf16.mxu0 0
  %4396 = vmatmul.mubr.bf16.gmra.mxu0 %v4173
  %v4397 = vpop.f32.mrf.mxu0
  %v4398 = vadd.f32 0.0, %v4397
  %v4399 = vpop.f32.mrf.mxu0
  %v4400 = vpop.f32.mrf.mxu0
  %v4401 = vadd.f32 0.0, %v4400
  %v4402 = vpop.f32.mrf.mxu0
  %4403 = vmatprep.mubr.bf16.mxu0 0
  %4404 = vmatmul.mubr.bf16.gmra.mxu0 %v4176
  %v4405 = vpop.f32.mrf.mxu0
  %v4406 = vadd.f32 0.0, %v4405
  %v4407 = vpop.f32.mrf.mxu0
  %v4408 = vpop.f32.mrf.mxu0
  %v4409 = vadd.f32 0.0, %v4408
  %v4410 = vpop.f32.mrf.mxu0
  %4411 = vmatprep.mubr.bf16.mxu0 0
  %4412 = vmatmul.mubr.bf16.gmra.mxu0 %v4179
  %v4413 = vpop.f32.mrf.mxu0
  %v4414 = vadd.f32 0.0, %v4413
  %v4415 = vpop.f32.mrf.mxu0
  %v4416 = vpop.f32.mrf.mxu0
  %v4417 = vadd.f32 0.0, %v4416
  %v4418 = vpop.f32.mrf.mxu0
  %4419 = vmatprep.mubr.bf16.mxu0 0
  %4420 = vmatmul.mubr.bf16.gmra.mxu0 %v4182
  %v4421 = vpop.f32.mrf.mxu0
  %v4422 = vadd.f32 0.0, %v4421
  %v4423 = vpop.f32.mrf.mxu0
  %v4424 = vpop.f32.mrf.mxu0
  %v4425 = vadd.f32 0.0, %v4424
  %v4426 = vpop.f32.mrf.mxu0
  %4427 = vmatprep.mubr.bf16.mxu0 0
  %4428 = vmatmul.mubr.bf16.gmra.mxu0 %v4185
  %v4429 = vpop.f32.mrf.mxu0
  %v4430 = vadd.f32 0.0, %v4429
  %v4431 = vpop.f32.mrf.mxu0
  %v4432 = vpop.f32.mrf.mxu0
  %v4433 = vadd.f32 0.0, %v4432
  %v4434 = vpop.f32.mrf.mxu0
  %4435 = vmatprep.mubr.bf16.mxu0 0
  %4436 = vmatmul.mubr.bf16.gmra.mxu0 %v4188
  %v4437 = vpop.f32.mrf.mxu0
  %v4438 = vadd.f32 0.0, %v4437
  %v4439 = vpop.f32.mrf.mxu0
  %v4440 = vpop.f32.mrf.mxu0
  %v4441 = vadd.f32 0.0, %v4440
  %v4442 = vpop.f32.mrf.mxu0
  %4443 = vmatprep.mubr.bf16.mxu0 0
  %4444 = vmatmul.mubr.bf16.gmra.mxu0 %v4191
  %v4445 = vpop.f32.mrf.mxu0
  %v4446 = vadd.f32 0.0, %v4445
  %v4447 = vpop.f32.mrf.mxu0
  %v4448 = vpop.f32.mrf.mxu0
  %v4449 = vadd.f32 0.0, %v4448
  %v4450 = vpop.f32.mrf.mxu0
  %4451 = vmatprep.mubr.bf16.mxu0 0
  %4452 = vmatmul.mubr.bf16.gmra.mxu0 %v4194
  %v4453 = vpop.f32.mrf.mxu0
  %v4454 = vadd.f32 0.0, %v4453
  %v4455 = vpop.f32.mrf.mxu0
  %v4456 = vpop.f32.mrf.mxu0
  %v4457 = vadd.f32 0.0, %v4456
  %v4458 = vpop.f32.mrf.mxu0
  %4459 = vmatprep.mubr.bf16.mxu0 0
  %4460 = vmatmul.mubr.bf16.gmra.mxu0 %v4197
  %v4461 = vpop.f32.mrf.mxu0
  %v4462 = vadd.f32 0.0, %v4461
  %v4463 = vpop.f32.mrf.mxu0
  %v4464 = vpop.f32.mrf.mxu0
  %v4465 = vadd.f32 0.0, %v4464
  %v4466 = vpop.f32.mrf.mxu0
  %4467 = vmatprep.mubr.bf16.mxu0 0
  %4468 = vmatmul.mubr.bf16.gmra.mxu0 %v4200
  %v4469 = vpop.f32.mrf.mxu0
  %v4470 = vadd.f32 0.0, %v4469
  %v4471 = vpop.f32.mrf.mxu0
  %v4472 = vpop.f32.mrf.mxu0
  %v4473 = vadd.f32 0.0, %v4472
  %v4474 = vpop.f32.mrf.mxu0
  %4475 = vmatprep.mubr.bf16.mxu0 0
  %4476 = vmatmul.mubr.bf16.gmra.mxu0 %v4203
  %v4477 = vpop.f32.mrf.mxu0
  %v4478 = vadd.f32 0.0, %v4477
  %v4479 = vpop.f32.mrf.mxu0
  %v4480 = vpop.f32.mrf.mxu0
  %v4481 = vadd.f32 0.0, %v4480
  %v4482 = vpop.f32.mrf.mxu0
  %4483 = vmatprep.mubr.bf16.mxu0 0
  %4484 = vmatmul.mubr.bf16.gmra.mxu0 %v4206
  %v4485 = vpop.f32.mrf.mxu0
  %v4486 = vadd.f32 0.0, %v4485
  %v4487 = vpop.f32.mrf.mxu0
  %v4488 = vpop.f32.mrf.mxu0
  %v4489 = vadd.f32 0.0, %v4488
  %v4490 = vpop.f32.mrf.mxu0
  %4491 = vmatprep.mubr.bf16.mxu0 0
  %4492 = vmatmul.mubr.bf16.gmra.mxu0 %v4209
  %v4493 = vpop.f32.mrf.mxu0
  %v4494 = vadd.f32 0.0, %v4493
  %v4495 = vpop.f32.mrf.mxu0
  %v4496 = vpop.f32.mrf.mxu0
  %v4497 = vadd.f32 0.0, %v4496
  %v4498 = vpop.f32.mrf.mxu0
  %4499 = vmatprep.mubr.bf16.mxu0 0
  %4500 = vmatmul.mubr.bf16.gmra.mxu0 %v4212
  %v4501 = vpop.f32.mrf.mxu0
  %v4502 = vadd.f32 0.0, %v4501
  %v4503 = vpop.f32.mrf.mxu0
  %v4504 = vpop.f32.mrf.mxu0
  %v4505 = vadd.f32 0.0, %v4504
  %v4506 = vpop.f32.mrf.mxu0
  %4507 = vmatprep.mubr.bf16.mxu0 0
  %4508 = vmatmul.mubr.bf16.gmra.mxu0 %v4215
  %v4509 = vpop.f32.mrf.mxu0
  %v4510 = vadd.f32 0.0, %v4509
  %v4511 = vpop.f32.mrf.mxu0
  %v4512 = vpop.f32.mrf.mxu0
  %v4513 = vadd.f32 0.0, %v4512
  %v4514 = vpop.f32.mrf.mxu0
  %4515 = vmatprep.mubr.bf16.mxu0 0
  %4516 = vmatmul.mubr.bf16.gmra.mxu0 %v4218
  %v4517 = vpop.f32.mrf.mxu0
  %v4518 = vadd.f32 0.0, %v4517
  %v4519 = vpop.f32.mrf.mxu0
  %v4520 = vpop.f32.mrf.mxu0
  %v4521 = vadd.f32 0.0, %v4520
  %v4522 = vpop.f32.mrf.mxu0
  %4523 = vmatprep.mubr.bf16.mxu0 0
  %4524 = vmatmul.mubr.bf16.gmra.mxu0 %v4221
  %v4525 = vpop.f32.mrf.mxu0
  %v4526 = vadd.f32 0.0, %v4525
  %v4527 = vpop.f32.mrf.mxu0
  %v4528 = vpop.f32.mrf.mxu0
  %v4529 = vadd.f32 0.0, %v4528
  %v4530 = vpop.f32.mrf.mxu0
  %4531 = vmatprep.mubr.bf16.mxu0 0
  %4532 = vmatmul.mubr.bf16.gmra.mxu0 %v4224
  %v4533 = vpop.f32.mrf.mxu0
  %v4534 = vadd.f32 0.0, %v4533
  %v4535 = vpop.f32.mrf.mxu0
  %v4536 = vpop.f32.mrf.mxu0
  %v4537 = vadd.f32 0.0, %v4536
  %v4538 = vpop.f32.mrf.mxu0
  %4539 = vmatprep.mubr.bf16.mxu0 0
  %4540 = vmatmul.mubr.bf16.gmra.mxu0 %v4227
  %v4541 = vpop.f32.mrf.mxu0
  %v4542 = vadd.f32 0.0, %v4541
  %v4543 = vpop.f32.mrf.mxu0
  %v4544 = vpop.f32.mrf.mxu0
  %v4545 = vadd.f32 0.0, %v4544
  %v4546 = vpop.f32.mrf.mxu0
  %4547 = vmatprep.mubr.bf16.mxu0 0
  %4548 = vmatmul.mubr.bf16.gmra.mxu0 %v4230
  %v4549 = vpop.f32.mrf.mxu0
  %v4550 = vadd.f32 0.0, %v4549
  %v4551 = vpop.f32.mrf.mxu0
  %v4552 = vpop.f32.mrf.mxu0
  %v4553 = vadd.f32 0.0, %v4552
  %v4554 = vpop.f32.mrf.mxu0
  %4555 = vmatprep.mubr.bf16.mxu0 0
  %4556 = vmatmul.mubr.bf16.gmra.mxu0 %v4233
  %v4557 = vpop.f32.mrf.mxu0
  %v4558 = vadd.f32 0.0, %v4557
  %v4559 = vpop.f32.mrf.mxu0
  %v4560 = vpop.f32.mrf.mxu0
  %v4561 = vadd.f32 0.0, %v4560
  %v4562 = vpop.f32.mrf.mxu0
  %4563 = vmatprep.mubr.bf16.mxu0 0
  %4564 = vmatmul.mubr.bf16.gmra.mxu0 %v4236
  %v4565 = vpop.f32.mrf.mxu0
  %v4566 = vadd.f32 0.0, %v4565
  %v4567 = vpop.f32.mrf.mxu0
  %v4568 = vpop.f32.mrf.mxu0
  %v4569 = vadd.f32 0.0, %v4568
  %v4570 = vpop.f32.mrf.mxu0
  %4571 = vmatprep.mubr.bf16.mxu0 0
  %4572 = vmatmul.mubr.bf16.gmra.mxu0 %v4239
  %v4573 = vpop.f32.mrf.mxu0
  %v4574 = vadd.f32 0.0, %v4573
  %v4575 = vpop.f32.mrf.mxu0
  %v4576 = vpop.f32.mrf.mxu0
  %v4577 = vadd.f32 0.0, %v4576
  %v4578 = vpop.f32.mrf.mxu0
  %4579 = vmatprep.mubr.bf16.mxu0 0
  %4580 = vmatmul.mubr.bf16.gmra.mxu0 %v4242
  %v4581 = vpop.f32.mrf.mxu0
  %v4582 = vadd.f32 0.0, %v4581
  %v4583 = vpop.f32.mrf.mxu0
  %v4584 = vpop.f32.mrf.mxu0
  %v4585 = vadd.f32 0.0, %v4584
  %v4586 = vpop.f32.mrf.mxu0
  %4587 = vmatprep.mubr.bf16.mxu0 0
  %4588 = vmatmul.mubr.bf16.gmra.mxu0 %v4245
  %v4589 = vpop.f32.mrf.mxu0
  %v4590 = vadd.f32 0.0, %v4589
  %v4591 = vpop.f32.mrf.mxu0
  %v4592 = vpop.f32.mrf.mxu0
  %v4593 = vadd.f32 0.0, %v4592
  %v4594 = vpop.f32.mrf.mxu0
  %4595 = vmatprep.mubr.bf16.mxu0 0
  %4596 = vmatmul.mubr.bf16.gmra.mxu0 %v4248
  %v4597 = vpop.f32.mrf.mxu0
  %v4598 = vadd.f32 0.0, %v4597
  %v4599 = vpop.f32.mrf.mxu0
  %v4600 = vpop.f32.mrf.mxu0
  %v4601 = vadd.f32 0.0, %v4600
  %v4602 = vpop.f32.mrf.mxu0
  %4603 = vmatprep.mubr.bf16.mxu0 0
  %4604 = vmatmul.mubr.bf16.gmra.mxu0 %v4251
  %v4605 = vpop.f32.mrf.mxu0
  %v4606 = vadd.f32 0.0, %v4605
  %v4607 = vpop.f32.mrf.mxu0
  %v4608 = vpop.f32.mrf.mxu0
  %v4609 = vadd.f32 0.0, %v4608
  %v4610 = vpop.f32.mrf.mxu0
  %4611 = vmatprep.mubr.bf16.mxu0 0
  %4612 = vmatmul.mubr.bf16.gmra.mxu0 %v4254
  %v4613 = vpop.f32.mrf.mxu0
  %v4614 = vadd.f32 0.0, %v4613
  %v4615 = vpop.f32.mrf.mxu0
  %v4616 = vpop.f32.mrf.mxu0
  %v4617 = vpop.f32.mrf.mxu0
  %4618 = vdwg.mxu0
  %v4619 = vadd.f32 %v3928, %v4294
  %v4620 = vadd.f32 %v3929, %v4297
  %v4621 = vadd.f32 %v3930, %v4302
  %v4622 = vadd.f32 %v3931, %v4305
  %v4623 = vadd.f32 %v3932, %v4310
  %v4624 = vadd.f32 %v3933, %v4313
  %v4625 = vadd.f32 %v3934, %v4318
  %v4626 = vadd.f32 %v3935, %v4321
  %v4627 = vadd.f32 %v3936, %v4326
  %v4628 = vadd.f32 %v3937, %v4329
  %v4629 = vadd.f32 %v3938, %v4334
  %v4630 = vadd.f32 %v3939, %v4337
  %v4631 = vadd.f32 %v3940, %v4342
  %v4632 = vadd.f32 %v3941, %v4345
  %v4633 = vadd.f32 %v3942, %v4350
  %v4634 = vadd.f32 %v3943, %v4353
  %v4635 = vadd.f32 %v3944, %v4358
  %v4636 = vadd.f32 %v3945, %v4361
  %v4637 = vadd.f32 %v3946, %v4366
  %v4638 = vadd.f32 %v3947, %v4369
  %v4639 = vadd.f32 %v3948, %v4374
  %v4640 = vadd.f32 %v3949, %v4377
  %v4641 = vadd.f32 %v3950, %v4382
  %v4642 = vadd.f32 %v3951, %v4385
  %v4643 = vadd.f32 %v3952, %v4390
  %v4644 = vadd.f32 %v3953, %v4393
  %v4645 = vadd.f32 %v3954, %v4398
  %v4646 = vadd.f32 %v3955, %v4401
  %v4647 = vadd.f32 %v3956, %v4406
  %v4648 = vadd.f32 %v3957, %v4409
  %v4649 = vadd.f32 %v3958, %v4414
  %v4650 = vadd.f32 %v3959, %v4417
  %v4651 = vadd.f32 %v3960, %v4422
  %v4652 = vadd.f32 %v3961, %v4425
  %v4653 = vadd.f32 %v3962, %v4430
  %v4654 = vadd.f32 %v3963, %v4433
  %v4655 = vadd.f32 %v3964, %v4438
  %v4656 = vadd.f32 %v3965, %v4441
  %v4657 = vadd.f32 %v3966, %v4446
  %v4658 = vadd.f32 %v3967, %v4449
  %v4659 = vadd.f32 %v3968, %v4454
  %v4660 = vadd.f32 %v3969, %v4457
  %v4661 = vadd.f32 %v3970, %v4462
  %v4662 = vadd.f32 %v3971, %v4465
  %v4663 = vadd.f32 %v3972, %v4470
  %v4664 = vadd.f32 %v3973, %v4473
  %v4665 = vadd.f32 %v3974, %v4478
  %v4666 = vadd.f32 %v3975, %v4481
  %v4667 = vadd.f32 %v3976, %v4486
  %v4668 = vadd.f32 %v3977, %v4489
  %v4669 = vadd.f32 %v3978, %v4494
  %v4670 = vadd.f32 %v3979, %v4497
  %v4671 = vadd.f32 %v3980, %v4502
  %v4672 = vadd.f32 %v3981, %v4505
  %v4673 = vadd.f32 %v3982, %v4510
  %v4674 = vadd.f32 %v3983, %v4513
  %v4675 = vadd.f32 %v3984, %v4518
  %v4676 = vadd.f32 %v3985, %v4521
  %v4677 = vadd.f32 %v3986, %v4526
  %v4678 = vadd.f32 %v3987, %v4529
  %v4679 = vadd.f32 %v3988, %v4534
  %v4680 = vadd.f32 %v3989, %v4537
  %v4681 = vadd.f32 %v3990, %v4542
  %v4682 = vadd.f32 %v3991, %v4545
  %v4683 = vadd.f32 %v3992, %v4550
  %v4684 = vadd.f32 %v3993, %v4553
  %v4685 = vadd.f32 %v3994, %v4558
  %v4686 = vadd.f32 %v3995, %v4561
  %v4687 = vadd.f32 %v3996, %v4566
  %v4688 = vadd.f32 %v3997, %v4569
  %v4689 = vadd.f32 %v3998, %v4574
  %v4690 = vadd.f32 %v3999, %v4577
  %v4691 = vadd.f32 %v4000, %v4582
  %v4692 = vadd.f32 %v4001, %v4585
  %v4693 = vadd.f32 %v4002, %v4590
  %v4694 = vadd.f32 %v4003, %v4593
  %v4695 = vadd.f32 %v4004, %v4598
  %v4696 = vadd.f32 %v4005, %v4601
  %v4697 = vadd.f32 %v4006, %v4606
  %v4698 = vadd.f32 %v4007, %v4609
  %v4699 = vadd.f32 %v4008, %v4614
  %v4700 = vld [vmem:[%s0 + $0x25] sm:$0xff]
  %v4701 = vld [vmem:[%s0 + $0x2d] sm:$0xff]
  %v4702 = vld [vmem:[%s0 + $0x35] sm:$0xff]
  %v4703 = vld [vmem:[%s0 + $0x3d] sm:$0xff]
  %v4704 = vld [vmem:[%s0 + $0x45] sm:$0xff]
  %v4705 = vld [vmem:[%s0 + $0x4d] sm:$0xff]
  %v4706 = vld [vmem:[%s0 + $0x55] sm:$0xff]
  %v4707 = vld [vmem:[%s0 + $0x5d] sm:$0xff]
  %v4708 = vld [vmem:[%s0 + $0x65] sm:$0xff]
  %v4709 = vld [vmem:[%s0 + $0x6d] sm:$0xff]
  %v4710 = vld [vmem:[%s0 + $0x75] sm:$0xff]
  %v4711 = vld [vmem:[%s0 + $0x7d] sm:$0xff]
  %v4712 = vld [vmem:[%s0 + $0x85] sm:$0xff]
  %v4713 = vld [vmem:[%s0 + $0x8d] sm:$0xff]
  %v4714 = vld [vmem:[%s0 + $0x95] sm:$0xff]
  %v4715 = vld [vmem:[%s0 + $0x9d] sm:$0xff]
  %v4716 = vld [vmem:[%s0 + $0xa5] sm:$0xff]
  %v4717 = vld [vmem:[%s0 + $0xad] sm:$0xff]
  %v4718 = vld [vmem:[%s0 + $0xb5] sm:$0xff]
  %v4719 = vld [vmem:[%s0 + $0xbd] sm:$0xff]
  %v4720 = vld [vmem:[%s0 + $0xc5] sm:$0xff]
  %v4721 = vld [vmem:[%s0 + $0xcd] sm:$0xff]
  %v4722 = vld [vmem:[%s0 + $0xd5] sm:$0xff]
  %v4723 = vld [vmem:[%s0 + $0xdd] sm:$0xff]
  %v4724 = vld [vmem:[%s0 + $0xe5] sm:$0xff]
  %v4725 = vld [vmem:[%s0 + $0xed] sm:$0xff]
  %v4726 = vld [vmem:[%s0 + $0xf5] sm:$0xff]
  %v4727 = vld [vmem:[%s0 + $0xfd] sm:$0xff]
  %v4728 = vld [vmem:[%s0 + $0x105] sm:$0xff]
  %v4729 = vld [vmem:[%s0 + $0x10d] sm:$0xff]
  %v4730 = vld [vmem:[%s0 + $0x115] sm:$0xff]
  %v4731 = vld [vmem:[%s0 + $0x11d] sm:$0xff]
  %v4732 = vld [vmem:[%s0 + $0x125] sm:$0xff]
  %v4733 = vld [vmem:[%s0 + $0x12d] sm:$0xff]
  %v4734 = vld [vmem:[%s0 + $0x135] sm:$0xff]
  %v4735 = vld [vmem:[%s0 + $0x13d] sm:$0xff]
  %v4736 = vld [vmem:[%s0 + $0x145] sm:$0xff]
  %v4737 = vld [vmem:[%s0 + $0x14d] sm:$0xff]
  %v4738 = vld [vmem:[%s0 + $0x155] sm:$0xff]
  %v4739 = vld [vmem:[%s0 + $0x15d] sm:$0xff]
  %v4740 = vld [vmem:[%s0 + $0x165] sm:$0xff]
  %v4741 = vld [vmem:[%s0 + $0x16d] sm:$0xff]
  %v4742 = vld [vmem:[%s0 + $0x175] sm:$0xff]
  %v4743 = vld [vmem:[%s0 + $0x17d] sm:$0xff]
  %v4744 = vld [vmem:[%s0 + $0x185] sm:$0xff]
  %v4745 = vld [vmem:[%s0 + $0x18d] sm:$0xff]
  %v4746 = vld [vmem:[%s0 + $0x195] sm:$0xff]
  %v4747 = vld [vmem:[%s0 + $0x19d] sm:$0xff]
  %v4748 = vld [vmem:[%s0 + $0x1a5] sm:$0xff]
  %v4749 = vld [vmem:[%s0 + $0x1ad] sm:$0xff]
  %v4750 = vld [vmem:[%s0 + $0x1b5] sm:$0xff]
  %v4751 = vld [vmem:[%s0 + $0x1bd] sm:$0xff]
  %v4752 = vld [vmem:[%s0 + $0x1c5] sm:$0xff]
  %v4753 = vld [vmem:[%s0 + $0x1cd] sm:$0xff]
  %v4754 = vld [vmem:[%s0 + $0x1d5] sm:$0xff]
  %v4755 = vld [vmem:[%s0 + $0x1dd] sm:$0xff]
  %v4756 = vld [vmem:[%s0 + $0x1e5] sm:$0xff]
  %v4757 = vld [vmem:[%s0 + $0x1ed] sm:$0xff]
  %v4758 = vld [vmem:[%s0 + $0x1f5] sm:$0xff]
  %v4759 = vld [vmem:[%s0 + $0x1fd] sm:$0xff]
  %v4760 = vld [vmem:[%s0 + $0x205] sm:$0xff]
  %v4761 = vld [vmem:[%s0 + $0x20d] sm:$0xff]
  %v4762 = vld [vmem:[%s0 + $0x215] sm:$0xff]
  %v4763 = vld [vmem:[%s0 + $0x21d] sm:$0xff]
  %v4764 = vld [vmem:[%s0 + $0x225] sm:$0xff]
  %v4765 = vld [vmem:[%s0 + $0x22d] sm:$0xff]
  %v4766 = vld [vmem:[%s0 + $0x235] sm:$0xff]
  %v4767 = vld [vmem:[%s0 + $0x23d] sm:$0xff]
  %v4768 = vld [vmem:[%s0 + $0x245] sm:$0xff]
  %v4769 = vld [vmem:[%s0 + $0x24d] sm:$0xff]
  %v4770 = vld [vmem:[%s0 + $0x255] sm:$0xff]
  %v4771 = vld [vmem:[%s0 + $0x25d] sm:$0xff]
  %v4772 = vld [vmem:[%s0 + $0x265] sm:$0xff]
  %v4773 = vld [vmem:[%s0 + $0x26d] sm:$0xff]
  %v4774 = vld [vmem:[%s0 + $0x275] sm:$0xff]
  %v4775 = vld [vmem:[%s0 + $0x27d] sm:$0xff]
  %v4776 = vld [vmem:[%s0 + $0x285] sm:$0xff]
  %v4777 = vld [vmem:[%s0 + $0x28d] sm:$0xff]
  %v4778 = vld [vmem:[%s0 + $0x295] sm:$0xff]
  %v4779 = vld [vmem:[%s0 + $0x29d] sm:$0xff]
  %v4780 = vld [vmem:[%s0 + $0x2a5] sm:$0xff]
  %v4781 = vpack.c.bf16 %v4701, %v4700
  %v4782 = vpack.c.bf16 %v4703, %v4702
  %v4783 = vpack.c.bf16 %v4705, %v4704
  %v4784 = vpack.c.bf16 %v4707, %v4706
  %v4785 = vpack.c.bf16 %v4709, %v4708
  %v4786 = vpack.c.bf16 %v4711, %v4710
  %v4787 = vpack.c.bf16 %v4713, %v4712
  %v4788 = vpack.c.bf16 %v4715, %v4714
  %v4789 = vpack.c.bf16 %v4717, %v4716
  %v4790 = vpack.c.bf16 %v4719, %v4718
  %v4791 = vpack.c.bf16 %v4721, %v4720
  %v4792 = vpack.c.bf16 %v4723, %v4722
  %v4793 = vpack.c.bf16 %v4725, %v4724
  %v4794 = vpack.c.bf16 %v4727, %v4726
  %v4795 = vpack.c.bf16 %v4729, %v4728
  %v4796 = vpack.c.bf16 %v4731, %v4730
  %v4797 = vpack.c.bf16 %v4733, %v4732
  %v4798 = vpack.c.bf16 %v4735, %v4734
  %v4799 = vpack.c.bf16 %v4737, %v4736
  %v4800 = vpack.c.bf16 %v4739, %v4738
  %v4801 = vpack.c.bf16 %v4741, %v4740
  %v4802 = vpack.c.bf16 %v4743, %v4742
  %v4803 = vpack.c.bf16 %v4745, %v4744
  %v4804 = vpack.c.bf16 %v4747, %v4746
  %v4805 = vpack.c.bf16 %v4749, %v4748
  %v4806 = vpack.c.bf16 %v4751, %v4750
  %v4807 = vpack.c.bf16 %v4753, %v4752
  %v4808 = vpack.c.bf16 %v4755, %v4754
  %v4809 = vpack.c.bf16 %v4757, %v4756
  %v4810 = vpack.c.bf16 %v4759, %v4758
  %v4811 = vpack.c.bf16 %v4761, %v4760
  %v4812 = vpack.c.bf16 %v4763, %v4762
  %v4813 = vpack.c.bf16 %v4765, %v4764
  %v4814 = vpack.c.bf16 %v4767, %v4766
  %v4815 = vpack.c.bf16 %v4769, %v4768
  %v4816 = vpack.c.bf16 %v4771, %v4770
  %v4817 = vpack.c.bf16 %v4773, %v4772
  %v4818 = vpack.c.bf16 %v4775, %v4774
  %v4819 = vpack.c.bf16 %v4777, %v4776
  %v4820 = vpack.c.bf16 %v4779, %v4778
  %v4821 = vpack.c.bf16 %v4780, %v4780
  %s4822 = scalar_lea.vmem %s1, 14
  %v4823 = vld [vmem:[%s4822] sm:$0x3]
  %v4825 = vsel %vm271, %v4781, 0
  %v4828 = vsel %vm271, %v4782, 0
  %v4831 = vsel %vm271, %v4783, 0
  %v4834 = vsel %vm271, %v4784, 0
  %v4837 = vsel %vm271, %v4785, 0
  %v4840 = vsel %vm271, %v4786, 0
  %v4843 = vsel %vm271, %v4787, 0
  %v4846 = vsel %vm271, %v4788, 0
  %v4849 = vsel %vm271, %v4789, 0
  %v4852 = vsel %vm271, %v4790, 0
  %v4855 = vsel %vm271, %v4791, 0
  %v4858 = vsel %vm271, %v4792, 0
  %v4861 = vsel %vm271, %v4793, 0
  %v4864 = vsel %vm271, %v4794, 0
  %v4867 = vsel %vm271, %v4795, 0
  %v4870 = vsel %vm271, %v4796, 0
  %v4873 = vsel %vm271, %v4797, 0
  %v4876 = vsel %vm271, %v4798, 0
  %v4879 = vsel %vm271, %v4799, 0
  %v4882 = vsel %vm271, %v4800, 0
  %v4885 = vsel %vm271, %v4801, 0
  %v4888 = vsel %vm271, %v4802, 0
  %v4891 = vsel %vm271, %v4803, 0
  %v4894 = vsel %vm271, %v4804, 0
  %v4897 = vsel %vm271, %v4805, 0
  %v4900 = vsel %vm271, %v4806, 0
  %v4903 = vsel %vm271, %v4807, 0
  %v4906 = vsel %vm271, %v4808, 0
  %v4909 = vsel %vm271, %v4809, 0
  %v4912 = vsel %vm271, %v4810, 0
  %v4915 = vsel %vm271, %v4811, 0
  %v4918 = vsel %vm271, %v4812, 0
  %v4921 = vsel %vm271, %v4813, 0
  %v4924 = vsel %vm271, %v4814, 0
  %v4927 = vsel %vm271, %v4815, 0
  %v4930 = vsel %vm271, %v4816, 0
  %v4933 = vsel %vm271, %v4817, 0
  %v4936 = vsel %vm271, %v4818, 0
  %v4939 = vsel %vm271, %v4819, 0
  %v4942 = vsel %vm271, %v4820, 0
  %v4945 = vsel %vm271, %v4821, 0
  %v4948 = vsel %vm395, %v4823, 0
  %4950 = vmatprep.subr.bf16.mxu0 0
  %4951 = vmatpush1.bf16.msra.mxu0 0
  %4952 = vmatprep.subr.bf16.mxu0 0
  %4953 = vmatpush1.bf16.msra.mxu0 0
  %4954 = vmatprep.subr.bf16.mxu0 0
  %4955 = vmatpush1.bf16.msra.mxu0 0
  %4956 = vmatprep.subr.bf16.mxu0 0
  %4957 = vmatpush1.bf16.msra.mxu0 0
  %4958 = vmatprep.subr.bf16.mxu0 0
  %4959 = vmatpush1.bf16.msra.mxu0 0
  %4960 = vmatprep.subr.bf16.mxu0 0
  %4961 = vmatpush1.bf16.msra.mxu0 0
  %4962 = vmatprep.subr.bf16.mxu0 0
  %4963 = vmatpush1.bf16.msra.mxu0 0
  %4964 = vmatprep.subr.bf16.mxu0 0
  %4965 = vmatpush1.bf16.msra.mxu0 %v4948
  %4966 = vmatprep.subr.bf16.mxu0 0
  %4967 = vmatpush2.bf16.msra.mxu0 0
  %4968 = vmatprep.subr.bf16.mxu0 0
  %4969 = vmatpush2.bf16.msra.mxu0 0
  %4970 = vmatprep.subr.bf16.mxu0 0
  %4971 = vmatpush2.bf16.msra.mxu0 0
  %4972 = vmatprep.subr.bf16.mxu0 0
  %4973 = vmatpush2.bf16.msra.mxu0 0
  %4974 = vmatprep.subr.bf16.mxu0 0
  %4975 = vmatpush2.bf16.msra.mxu0 0
  %4976 = vmatprep.subr.bf16.mxu0 0
  %4977 = vmatpush2.bf16.msra.mxu0 0
  %4978 = vmatprep.subr.bf16.mxu0 0
  %4979 = vmatpush2.bf16.msra.mxu0 0
  %4980 = vmatprep.subr.bf16.mxu0 0
  %4981 = vmatpush2.bf16.msra.mxu0 0
  %4982 = vmatprep.mubr.bf16.mxu0 0
  %4983 = vmatmul.mubr.bf16.gmra.mxu0 %v4825
  %v4984 = vpop.f32.mrf.mxu0
  %v4985 = vadd.f32 0.0, %v4984
  %v4986 = vpop.f32.mrf.mxu0
  %v4987 = vpop.f32.mrf.mxu0
  %v4988 = vadd.f32 0.0, %v4987
  %v4989 = vpop.f32.mrf.mxu0
  %4990 = vmatprep.mubr.bf16.mxu0 0
  %4991 = vmatmul.mubr.bf16.gmra.mxu0 %v4828
  %v4992 = vpop.f32.mrf.mxu0
  %v4993 = vadd.f32 0.0, %v4992
  %v4994 = vpop.f32.mrf.mxu0
  %v4995 = vpop.f32.mrf.mxu0
  %v4996 = vadd.f32 0.0, %v4995
  %v4997 = vpop.f32.mrf.mxu0
  %4998 = vmatprep.mubr.bf16.mxu0 0
  %4999 = vmatmul.mubr.bf16.gmra.mxu0 %v4831
  %v5000 = vpop.f32.mrf.mxu0
  %v5001 = vadd.f32 0.0, %v5000
  %v5002 = vpop.f32.mrf.mxu0
  %v5003 = vpop.f32.mrf.mxu0
  %v5004 = vadd.f32 0.0, %v5003
  %v5005 = vpop.f32.mrf.mxu0
  %5006 = vmatprep.mubr.bf16.mxu0 0
  %5007 = vmatmul.mubr.bf16.gmra.mxu0 %v4834
  %v5008 = vpop.f32.mrf.mxu0
  %v5009 = vadd.f32 0.0, %v5008
  %v5010 = vpop.f32.mrf.mxu0
  %v5011 = vpop.f32.mrf.mxu0
  %v5012 = vadd.f32 0.0, %v5011
  %v5013 = vpop.f32.mrf.mxu0
  %5014 = vmatprep.mubr.bf16.mxu0 0
  %5015 = vmatmul.mubr.bf16.gmra.mxu0 %v4837
  %v5016 = vpop.f32.mrf.mxu0
  %v5017 = vadd.f32 0.0, %v5016
  %v5018 = vpop.f32.mrf.mxu0
  %v5019 = vpop.f32.mrf.mxu0
  %v5020 = vadd.f32 0.0, %v5019
  %v5021 = vpop.f32.mrf.mxu0
  %5022 = vmatprep.mubr.bf16.mxu0 0
  %5023 = vmatmul.mubr.bf16.gmra.mxu0 %v4840
  %v5024 = vpop.f32.mrf.mxu0
  %v5025 = vadd.f32 0.0, %v5024
  %v5026 = vpop.f32.mrf.mxu0
  %v5027 = vpop.f32.mrf.mxu0
  %v5028 = vadd.f32 0.0, %v5027
  %v5029 = vpop.f32.mrf.mxu0
  %5030 = vmatprep.mubr.bf16.mxu0 0
  %5031 = vmatmul.mubr.bf16.gmra.mxu0 %v4843
  %v5032 = vpop.f32.mrf.mxu0
  %v5033 = vadd.f32 0.0, %v5032
  %v5034 = vpop.f32.mrf.mxu0
  %v5035 = vpop.f32.mrf.mxu0
  %v5036 = vadd.f32 0.0, %v5035
  %v5037 = vpop.f32.mrf.mxu0
  %5038 = vmatprep.mubr.bf16.mxu0 0
  %5039 = vmatmul.mubr.bf16.gmra.mxu0 %v4846
  %v5040 = vpop.f32.mrf.mxu0
  %v5041 = vadd.f32 0.0, %v5040
  %v5042 = vpop.f32.mrf.mxu0
  %v5043 = vpop.f32.mrf.mxu0
  %v5044 = vadd.f32 0.0, %v5043
  %v5045 = vpop.f32.mrf.mxu0
  %5046 = vmatprep.mubr.bf16.mxu0 0
  %5047 = vmatmul.mubr.bf16.gmra.mxu0 %v4849
  %v5048 = vpop.f32.mrf.mxu0
  %v5049 = vadd.f32 0.0, %v5048
  %v5050 = vpop.f32.mrf.mxu0
  %v5051 = vpop.f32.mrf.mxu0
  %v5052 = vadd.f32 0.0, %v5051
  %v5053 = vpop.f32.mrf.mxu0
  %5054 = vmatprep.mubr.bf16.mxu0 0
  %5055 = vmatmul.mubr.bf16.gmra.mxu0 %v4852
  %v5056 = vpop.f32.mrf.mxu0
  %v5057 = vadd.f32 0.0, %v5056
  %v5058 = vpop.f32.mrf.mxu0
  %v5059 = vpop.f32.mrf.mxu0
  %v5060 = vadd.f32 0.0, %v5059
  %v5061 = vpop.f32.mrf.mxu0
  %5062 = vmatprep.mubr.bf16.mxu0 0
  %5063 = vmatmul.mubr.bf16.gmra.mxu0 %v4855
  %v5064 = vpop.f32.mrf.mxu0
  %v5065 = vadd.f32 0.0, %v5064
  %v5066 = vpop.f32.mrf.mxu0
  %v5067 = vpop.f32.mrf.mxu0
  %v5068 = vadd.f32 0.0, %v5067
  %v5069 = vpop.f32.mrf.mxu0
  %5070 = vmatprep.mubr.bf16.mxu0 0
  %5071 = vmatmul.mubr.bf16.gmra.mxu0 %v4858
  %v5072 = vpop.f32.mrf.mxu0
  %v5073 = vadd.f32 0.0, %v5072
  %v5074 = vpop.f32.mrf.mxu0
  %v5075 = vpop.f32.mrf.mxu0
  %v5076 = vadd.f32 0.0, %v5075
  %v5077 = vpop.f32.mrf.mxu0
  %5078 = vmatprep.mubr.bf16.mxu0 0
  %5079 = vmatmul.mubr.bf16.gmra.mxu0 %v4861
  %v5080 = vpop.f32.mrf.mxu0
  %v5081 = vadd.f32 0.0, %v5080
  %v5082 = vpop.f32.mrf.mxu0
  %v5083 = vpop.f32.mrf.mxu0
  %v5084 = vadd.f32 0.0, %v5083
  %v5085 = vpop.f32.mrf.mxu0
  %5086 = vmatprep.mubr.bf16.mxu0 0
  %5087 = vmatmul.mubr.bf16.gmra.mxu0 %v4864
  %v5088 = vpop.f32.mrf.mxu0
  %v5089 = vadd.f32 0.0, %v5088
  %v5090 = vpop.f32.mrf.mxu0
  %v5091 = vpop.f32.mrf.mxu0
  %v5092 = vadd.f32 0.0, %v5091
  %v5093 = vpop.f32.mrf.mxu0
  %5094 = vmatprep.mubr.bf16.mxu0 0
  %5095 = vmatmul.mubr.bf16.gmra.mxu0 %v4867
  %v5096 = vpop.f32.mrf.mxu0
  %v5097 = vadd.f32 0.0, %v5096
  %v5098 = vpop.f32.mrf.mxu0
  %v5099 = vpop.f32.mrf.mxu0
  %v5100 = vadd.f32 0.0, %v5099
  %v5101 = vpop.f32.mrf.mxu0
  %5102 = vmatprep.mubr.bf16.mxu0 0
  %5103 = vmatmul.mubr.bf16.gmra.mxu0 %v4870
  %v5104 = vpop.f32.mrf.mxu0
  %v5105 = vadd.f32 0.0, %v5104
  %v5106 = vpop.f32.mrf.mxu0
  %v5107 = vpop.f32.mrf.mxu0
  %v5108 = vadd.f32 0.0, %v5107
  %v5109 = vpop.f32.mrf.mxu0
  %5110 = vmatprep.mubr.bf16.mxu0 0
  %5111 = vmatmul.mubr.bf16.gmra.mxu0 %v4873
  %v5112 = vpop.f32.mrf.mxu0
  %v5113 = vadd.f32 0.0, %v5112
  %v5114 = vpop.f32.mrf.mxu0
  %v5115 = vpop.f32.mrf.mxu0
  %v5116 = vadd.f32 0.0, %v5115
  %v5117 = vpop.f32.mrf.mxu0
  %5118 = vmatprep.mubr.bf16.mxu0 0
  %5119 = vmatmul.mubr.bf16.gmra.mxu0 %v4876
  %v5120 = vpop.f32.mrf.mxu0
  %v5121 = vadd.f32 0.0, %v5120
  %v5122 = vpop.f32.mrf.mxu0
  %v5123 = vpop.f32.mrf.mxu0
  %v5124 = vadd.f32 0.0, %v5123
  %v5125 = vpop.f32.mrf.mxu0
  %5126 = vmatprep.mubr.bf16.mxu0 0
  %5127 = vmatmul.mubr.bf16.gmra.mxu0 %v4879
  %v5128 = vpop.f32.mrf.mxu0
  %v5129 = vadd.f32 0.0, %v5128
  %v5130 = vpop.f32.mrf.mxu0
  %v5131 = vpop.f32.mrf.mxu0
  %v5132 = vadd.f32 0.0, %v5131
  %v5133 = vpop.f32.mrf.mxu0
  %5134 = vmatprep.mubr.bf16.mxu0 0
  %5135 = vmatmul.mubr.bf16.gmra.mxu0 %v4882
  %v5136 = vpop.f32.mrf.mxu0
  %v5137 = vadd.f32 0.0, %v5136
  %v5138 = vpop.f32.mrf.mxu0
  %v5139 = vpop.f32.mrf.mxu0
  %v5140 = vadd.f32 0.0, %v5139
  %v5141 = vpop.f32.mrf.mxu0
  %5142 = vmatprep.mubr.bf16.mxu0 0
  %5143 = vmatmul.mubr.bf16.gmra.mxu0 %v4885
  %v5144 = vpop.f32.mrf.mxu0
  %v5145 = vadd.f32 0.0, %v5144
  %v5146 = vpop.f32.mrf.mxu0
  %v5147 = vpop.f32.mrf.mxu0
  %v5148 = vadd.f32 0.0, %v5147
  %v5149 = vpop.f32.mrf.mxu0
  %5150 = vmatprep.mubr.bf16.mxu0 0
  %5151 = vmatmul.mubr.bf16.gmra.mxu0 %v4888
  %v5152 = vpop.f32.mrf.mxu0
  %v5153 = vadd.f32 0.0, %v5152
  %v5154 = vpop.f32.mrf.mxu0
  %v5155 = vpop.f32.mrf.mxu0
  %v5156 = vadd.f32 0.0, %v5155
  %v5157 = vpop.f32.mrf.mxu0
  %5158 = vmatprep.mubr.bf16.mxu0 0
  %5159 = vmatmul.mubr.bf16.gmra.mxu0 %v4891
  %v5160 = vpop.f32.mrf.mxu0
  %v5161 = vadd.f32 0.0, %v5160
  %v5162 = vpop.f32.mrf.mxu0
  %v5163 = vpop.f32.mrf.mxu0
  %v5164 = vadd.f32 0.0, %v5163
  %v5165 = vpop.f32.mrf.mxu0
  %5166 = vmatprep.mubr.bf16.mxu0 0
  %5167 = vmatmul.mubr.bf16.gmra.mxu0 %v4894
  %v5168 = vpop.f32.mrf.mxu0
  %v5169 = vadd.f32 0.0, %v5168
  %v5170 = vpop.f32.mrf.mxu0
  %v5171 = vpop.f32.mrf.mxu0
  %v5172 = vadd.f32 0.0, %v5171
  %v5173 = vpop.f32.mrf.mxu0
  %5174 = vmatprep.mubr.bf16.mxu0 0
  %5175 = vmatmul.mubr.bf16.gmra.mxu0 %v4897
  %v5176 = vpop.f32.mrf.mxu0
  %v5177 = vadd.f32 0.0, %v5176
  %v5178 = vpop.f32.mrf.mxu0
  %v5179 = vpop.f32.mrf.mxu0
  %v5180 = vadd.f32 0.0, %v5179
  %v5181 = vpop.f32.mrf.mxu0
  %5182 = vmatprep.mubr.bf16.mxu0 0
  %5183 = vmatmul.mubr.bf16.gmra.mxu0 %v4900
  %v5184 = vpop.f32.mrf.mxu0
  %v5185 = vadd.f32 0.0, %v5184
  %v5186 = vpop.f32.mrf.mxu0
  %v5187 = vpop.f32.mrf.mxu0
  %v5188 = vadd.f32 0.0, %v5187
  %v5189 = vpop.f32.mrf.mxu0
  %5190 = vmatprep.mubr.bf16.mxu0 0
  %5191 = vmatmul.mubr.bf16.gmra.mxu0 %v4903
  %v5192 = vpop.f32.mrf.mxu0
  %v5193 = vadd.f32 0.0, %v5192
  %v5194 = vpop.f32.mrf.mxu0
  %v5195 = vpop.f32.mrf.mxu0
  %v5196 = vadd.f32 0.0, %v5195
  %v5197 = vpop.f32.mrf.mxu0
  %5198 = vmatprep.mubr.bf16.mxu0 0
  %5199 = vmatmul.mubr.bf16.gmra.mxu0 %v4906
  %v5200 = vpop.f32.mrf.mxu0
  %v5201 = vadd.f32 0.0, %v5200
  %v5202 = vpop.f32.mrf.mxu0
  %v5203 = vpop.f32.mrf.mxu0
  %v5204 = vadd.f32 0.0, %v5203
  %v5205 = vpop.f32.mrf.mxu0
  %5206 = vmatprep.mubr.bf16.mxu0 0
  %5207 = vmatmul.mubr.bf16.gmra.mxu0 %v4909
  %v5208 = vpop.f32.mrf.mxu0
  %v5209 = vadd.f32 0.0, %v5208
  %v5210 = vpop.f32.mrf.mxu0
  %v5211 = vpop.f32.mrf.mxu0
  %v5212 = vadd.f32 0.0, %v5211
  %v5213 = vpop.f32.mrf.mxu0
  %5214 = vmatprep.mubr.bf16.mxu0 0
  %5215 = vmatmul.mubr.bf16.gmra.mxu0 %v4912
  %v5216 = vpop.f32.mrf.mxu0
  %v5217 = vadd.f32 0.0, %v5216
  %v5218 = vpop.f32.mrf.mxu0
  %v5219 = vpop.f32.mrf.mxu0
  %v5220 = vadd.f32 0.0, %v5219
  %v5221 = vpop.f32.mrf.mxu0
  %5222 = vmatprep.mubr.bf16.mxu0 0
  %5223 = vmatmul.mubr.bf16.gmra.mxu0 %v4915
  %v5224 = vpop.f32.mrf.mxu0
  %v5225 = vadd.f32 0.0, %v5224
  %v5226 = vpop.f32.mrf.mxu0
  %v5227 = vpop.f32.mrf.mxu0
  %v5228 = vadd.f32 0.0, %v5227
  %v5229 = vpop.f32.mrf.mxu0
  %5230 = vmatprep.mubr.bf16.mxu0 0
  %5231 = vmatmul.mubr.bf16.gmra.mxu0 %v4918
  %v5232 = vpop.f32.mrf.mxu0
  %v5233 = vadd.f32 0.0, %v5232
  %v5234 = vpop.f32.mrf.mxu0
  %v5235 = vpop.f32.mrf.mxu0
  %v5236 = vadd.f32 0.0, %v5235
  %v5237 = vpop.f32.mrf.mxu0
  %5238 = vmatprep.mubr.bf16.mxu0 0
  %5239 = vmatmul.mubr.bf16.gmra.mxu0 %v4921
  %v5240 = vpop.f32.mrf.mxu0
  %v5241 = vadd.f32 0.0, %v5240
  %v5242 = vpop.f32.mrf.mxu0
  %v5243 = vpop.f32.mrf.mxu0
  %v5244 = vadd.f32 0.0, %v5243
  %v5245 = vpop.f32.mrf.mxu0
  %5246 = vmatprep.mubr.bf16.mxu0 0
  %5247 = vmatmul.mubr.bf16.gmra.mxu0 %v4924
  %v5248 = vpop.f32.mrf.mxu0
  %v5249 = vadd.f32 0.0, %v5248
  %v5250 = vpop.f32.mrf.mxu0
  %v5251 = vpop.f32.mrf.mxu0
  %v5252 = vadd.f32 0.0, %v5251
  %v5253 = vpop.f32.mrf.mxu0
  %5254 = vmatprep.mubr.bf16.mxu0 0
  %5255 = vmatmul.mubr.bf16.gmra.mxu0 %v4927
  %v5256 = vpop.f32.mrf.mxu0
  %v5257 = vadd.f32 0.0, %v5256
  %v5258 = vpop.f32.mrf.mxu0
  %v5259 = vpop.f32.mrf.mxu0
  %v5260 = vadd.f32 0.0, %v5259
  %v5261 = vpop.f32.mrf.mxu0
  %5262 = vmatprep.mubr.bf16.mxu0 0
  %5263 = vmatmul.mubr.bf16.gmra.mxu0 %v4930
  %v5264 = vpop.f32.mrf.mxu0
  %v5265 = vadd.f32 0.0, %v5264
  %v5266 = vpop.f32.mrf.mxu0
  %v5267 = vpop.f32.mrf.mxu0
  %v5268 = vadd.f32 0.0, %v5267
  %v5269 = vpop.f32.mrf.mxu0
  %5270 = vmatprep.mubr.bf16.mxu0 0
  %5271 = vmatmul.mubr.bf16.gmra.mxu0 %v4933
  %v5272 = vpop.f32.mrf.mxu0
  %v5273 = vadd.f32 0.0, %v5272
  %v5274 = vpop.f32.mrf.mxu0
  %v5275 = vpop.f32.mrf.mxu0
  %v5276 = vadd.f32 0.0, %v5275
  %v5277 = vpop.f32.mrf.mxu0
  %5278 = vmatprep.mubr.bf16.mxu0 0
  %5279 = vmatmul.mubr.bf16.gmra.mxu0 %v4936
  %v5280 = vpop.f32.mrf.mxu0
  %v5281 = vadd.f32 0.0, %v5280
  %v5282 = vpop.f32.mrf.mxu0
  %v5283 = vpop.f32.mrf.mxu0
  %v5284 = vadd.f32 0.0, %v5283
  %v5285 = vpop.f32.mrf.mxu0
  %5286 = vmatprep.mubr.bf16.mxu0 0
  %5287 = vmatmul.mubr.bf16.gmra.mxu0 %v4939
  %v5288 = vpop.f32.mrf.mxu0
  %v5289 = vadd.f32 0.0, %v5288
  %v5290 = vpop.f32.mrf.mxu0
  %v5291 = vpop.f32.mrf.mxu0
  %v5292 = vadd.f32 0.0, %v5291
  %v5293 = vpop.f32.mrf.mxu0
  %5294 = vmatprep.mubr.bf16.mxu0 0
  %5295 = vmatmul.mubr.bf16.gmra.mxu0 %v4942
  %v5296 = vpop.f32.mrf.mxu0
  %v5297 = vadd.f32 0.0, %v5296
  %v5298 = vpop.f32.mrf.mxu0
  %v5299 = vpop.f32.mrf.mxu0
  %v5300 = vadd.f32 0.0, %v5299
  %v5301 = vpop.f32.mrf.mxu0
  %5302 = vmatprep.mubr.bf16.mxu0 0
  %5303 = vmatmul.mubr.bf16.gmra.mxu0 %v4945
  %v5304 = vpop.f32.mrf.mxu0
  %v5305 = vadd.f32 0.0, %v5304
  %v5306 = vpop.f32.mrf.mxu0
  %v5307 = vpop.f32.mrf.mxu0
  %v5308 = vpop.f32.mrf.mxu0
  %5309 = vdwg.mxu0
  %v5310 = vadd.f32 %v4619, %v4985
  %v5311 = vadd.f32 %v4620, %v4988
  %v5312 = vadd.f32 %v4621, %v4993
  %v5313 = vadd.f32 %v4622, %v4996
  %v5314 = vadd.f32 %v4623, %v5001
  %v5315 = vadd.f32 %v4624, %v5004
  %v5316 = vadd.f32 %v4625, %v5009
  %v5317 = vadd.f32 %v4626, %v5012
  %v5318 = vadd.f32 %v4627, %v5017
  %v5319 = vadd.f32 %v4628, %v5020
  %v5320 = vadd.f32 %v4629, %v5025
  %v5321 = vadd.f32 %v4630, %v5028
  %v5322 = vadd.f32 %v4631, %v5033
  %v5323 = vadd.f32 %v4632, %v5036
  %v5324 = vadd.f32 %v4633, %v5041
  %v5325 = vadd.f32 %v4634, %v5044
  %v5326 = vadd.f32 %v4635, %v5049
  %v5327 = vadd.f32 %v4636, %v5052
  %v5328 = vadd.f32 %v4637, %v5057
  %v5329 = vadd.f32 %v4638, %v5060
  %v5330 = vadd.f32 %v4639, %v5065
  %v5331 = vadd.f32 %v4640, %v5068
  %v5332 = vadd.f32 %v4641, %v5073
  %v5333 = vadd.f32 %v4642, %v5076
  %v5334 = vadd.f32 %v4643, %v5081
  %v5335 = vadd.f32 %v4644, %v5084
  %v5336 = vadd.f32 %v4645, %v5089
  %v5337 = vadd.f32 %v4646, %v5092
  %v5338 = vadd.f32 %v4647, %v5097
  %v5339 = vadd.f32 %v4648, %v5100
  %v5340 = vadd.f32 %v4649, %v5105
  %v5341 = vadd.f32 %v4650, %v5108
  %v5342 = vadd.f32 %v4651, %v5113
  %v5343 = vadd.f32 %v4652, %v5116
  %v5344 = vadd.f32 %v4653, %v5121
  %v5345 = vadd.f32 %v4654, %v5124
  %v5346 = vadd.f32 %v4655, %v5129
  %v5347 = vadd.f32 %v4656, %v5132
  %v5348 = vadd.f32 %v4657, %v5137
  %v5349 = vadd.f32 %v4658, %v5140
  %v5350 = vadd.f32 %v4659, %v5145
  %v5351 = vadd.f32 %v4660, %v5148
  %v5352 = vadd.f32 %v4661, %v5153
  %v5353 = vadd.f32 %v4662, %v5156
  %v5354 = vadd.f32 %v4663, %v5161
  %v5355 = vadd.f32 %v4664, %v5164
  %v5356 = vadd.f32 %v4665, %v5169
  %v5357 = vadd.f32 %v4666, %v5172
  %v5358 = vadd.f32 %v4667, %v5177
  %v5359 = vadd.f32 %v4668, %v5180
  %v5360 = vadd.f32 %v4669, %v5185
  %v5361 = vadd.f32 %v4670, %v5188
  %v5362 = vadd.f32 %v4671, %v5193
  %v5363 = vadd.f32 %v4672, %v5196
  %v5364 = vadd.f32 %v4673, %v5201
  %v5365 = vadd.f32 %v4674, %v5204
  %v5366 = vadd.f32 %v4675, %v5209
  %v5367 = vadd.f32 %v4676, %v5212
  %v5368 = vadd.f32 %v4677, %v5217
  %v5369 = vadd.f32 %v4678, %v5220
  %v5370 = vadd.f32 %v4679, %v5225
  %v5371 = vadd.f32 %v4680, %v5228
  %v5372 = vadd.f32 %v4681, %v5233
  %v5373 = vadd.f32 %v4682, %v5236
  %v5374 = vadd.f32 %v4683, %v5241
  %v5375 = vadd.f32 %v4684, %v5244
  %v5376 = vadd.f32 %v4685, %v5249
  %v5377 = vadd.f32 %v4686, %v5252
  %v5378 = vadd.f32 %v4687, %v5257
  %v5379 = vadd.f32 %v4688, %v5260
  %v5380 = vadd.f32 %v4689, %v5265
  %v5381 = vadd.f32 %v4690, %v5268
  %v5382 = vadd.f32 %v4691, %v5273
  %v5383 = vadd.f32 %v4692, %v5276
  %v5384 = vadd.f32 %v4693, %v5281
  %v5385 = vadd.f32 %v4694, %v5284
  %v5386 = vadd.f32 %v4695, %v5289
  %v5387 = vadd.f32 %v4696, %v5292
  %v5388 = vadd.f32 %v4697, %v5297
  %v5389 = vadd.f32 %v4698, %v5300
  %v5390 = vadd.f32 %v4699, %v5305
  %v5391 = vld [vmem:[%s0 + $0x26] sm:$0xff]
  %v5392 = vld [vmem:[%s0 + $0x2e] sm:$0xff]
  %v5393 = vld [vmem:[%s0 + $0x36] sm:$0xff]
  %v5394 = vld [vmem:[%s0 + $0x3e] sm:$0xff]
  %v5395 = vld [vmem:[%s0 + $0x46] sm:$0xff]
  %v5396 = vld [vmem:[%s0 + $0x4e] sm:$0xff]
  %v5397 = vld [vmem:[%s0 + $0x56] sm:$0xff]
  %v5398 = vld [vmem:[%s0 + $0x5e] sm:$0xff]
  %v5399 = vld [vmem:[%s0 + $0x66] sm:$0xff]
  %v5400 = vld [vmem:[%s0 + $0x6e] sm:$0xff]
  %v5401 = vld [vmem:[%s0 + $0x76] sm:$0xff]
  %v5402 = vld [vmem:[%s0 + $0x7e] sm:$0xff]
  %v5403 = vld [vmem:[%s0 + $0x86] sm:$0xff]
  %v5404 = vld [vmem:[%s0 + $0x8e] sm:$0xff]
  %v5405 = vld [vmem:[%s0 + $0x96] sm:$0xff]
  %v5406 = vld [vmem:[%s0 + $0x9e] sm:$0xff]
  %v5407 = vld [vmem:[%s0 + $0xa6] sm:$0xff]
  %v5408 = vld [vmem:[%s0 + $0xae] sm:$0xff]
  %v5409 = vld [vmem:[%s0 + $0xb6] sm:$0xff]
  %v5410 = vld [vmem:[%s0 + $0xbe] sm:$0xff]
  %v5411 = vld [vmem:[%s0 + $0xc6] sm:$0xff]
  %v5412 = vld [vmem:[%s0 + $0xce] sm:$0xff]
  %v5413 = vld [vmem:[%s0 + $0xd6] sm:$0xff]
  %v5414 = vld [vmem:[%s0 + $0xde] sm:$0xff]
  %v5415 = vld [vmem:[%s0 + $0xe6] sm:$0xff]
  %v5416 = vld [vmem:[%s0 + $0xee] sm:$0xff]
  %v5417 = vld [vmem:[%s0 + $0xf6] sm:$0xff]
  %v5418 = vld [vmem:[%s0 + $0xfe] sm:$0xff]
  %v5419 = vld [vmem:[%s0 + $0x106] sm:$0xff]
  %v5420 = vld [vmem:[%s0 + $0x10e] sm:$0xff]
  %v5421 = vld [vmem:[%s0 + $0x116] sm:$0xff]
  %v5422 = vld [vmem:[%s0 + $0x11e] sm:$0xff]
  %v5423 = vld [vmem:[%s0 + $0x126] sm:$0xff]
  %v5424 = vld [vmem:[%s0 + $0x12e] sm:$0xff]
  %v5425 = vld [vmem:[%s0 + $0x136] sm:$0xff]
  %v5426 = vld [vmem:[%s0 + $0x13e] sm:$0xff]
  %v5427 = vld [vmem:[%s0 + $0x146] sm:$0xff]
  %v5428 = vld [vmem:[%s0 + $0x14e] sm:$0xff]
  %v5429 = vld [vmem:[%s0 + $0x156] sm:$0xff]
  %v5430 = vld [vmem:[%s0 + $0x15e] sm:$0xff]
  %v5431 = vld [vmem:[%s0 + $0x166] sm:$0xff]
  %v5432 = vld [vmem:[%s0 + $0x16e] sm:$0xff]
  %v5433 = vld [vmem:[%s0 + $0x176] sm:$0xff]
  %v5434 = vld [vmem:[%s0 + $0x17e] sm:$0xff]
  %v5435 = vld [vmem:[%s0 + $0x186] sm:$0xff]
  %v5436 = vld [vmem:[%s0 + $0x18e] sm:$0xff]
  %v5437 = vld [vmem:[%s0 + $0x196] sm:$0xff]
  %v5438 = vld [vmem:[%s0 + $0x19e] sm:$0xff]
  %v5439 = vld [vmem:[%s0 + $0x1a6] sm:$0xff]
  %v5440 = vld [vmem:[%s0 + $0x1ae] sm:$0xff]
  %v5441 = vld [vmem:[%s0 + $0x1b6] sm:$0xff]
  %v5442 = vld [vmem:[%s0 + $0x1be] sm:$0xff]
  %v5443 = vld [vmem:[%s0 + $0x1c6] sm:$0xff]
  %v5444 = vld [vmem:[%s0 + $0x1ce] sm:$0xff]
  %v5445 = vld [vmem:[%s0 + $0x1d6] sm:$0xff]
  %v5446 = vld [vmem:[%s0 + $0x1de] sm:$0xff]
  %v5447 = vld [vmem:[%s0 + $0x1e6] sm:$0xff]
  %v5448 = vld [vmem:[%s0 + $0x1ee] sm:$0xff]
  %v5449 = vld [vmem:[%s0 + $0x1f6] sm:$0xff]
  %v5450 = vld [vmem:[%s0 + $0x1fe] sm:$0xff]
  %v5451 = vld [vmem:[%s0 + $0x206] sm:$0xff]
  %v5452 = vld [vmem:[%s0 + $0x20e] sm:$0xff]
  %v5453 = vld [vmem:[%s0 + $0x216] sm:$0xff]
  %v5454 = vld [vmem:[%s0 + $0x21e] sm:$0xff]
  %v5455 = vld [vmem:[%s0 + $0x226] sm:$0xff]
  %v5456 = vld [vmem:[%s0 + $0x22e] sm:$0xff]
  %v5457 = vld [vmem:[%s0 + $0x236] sm:$0xff]
  %v5458 = vld [vmem:[%s0 + $0x23e] sm:$0xff]
  %v5459 = vld [vmem:[%s0 + $0x246] sm:$0xff]
  %v5460 = vld [vmem:[%s0 + $0x24e] sm:$0xff]
  %v5461 = vld [vmem:[%s0 + $0x256] sm:$0xff]
  %v5462 = vld [vmem:[%s0 + $0x25e] sm:$0xff]
  %v5463 = vld [vmem:[%s0 + $0x266] sm:$0xff]
  %v5464 = vld [vmem:[%s0 + $0x26e] sm:$0xff]
  %v5465 = vld [vmem:[%s0 + $0x276] sm:$0xff]
  %v5466 = vld [vmem:[%s0 + $0x27e] sm:$0xff]
  %v5467 = vld [vmem:[%s0 + $0x286] sm:$0xff]
  %v5468 = vld [vmem:[%s0 + $0x28e] sm:$0xff]
  %v5469 = vld [vmem:[%s0 + $0x296] sm:$0xff]
  %v5470 = vld [vmem:[%s0 + $0x29e] sm:$0xff]
  %v5471 = vld [vmem:[%s0 + $0x2a6] sm:$0xff]
  %v5472 = vpack.c.bf16 %v5392, %v5391
  %v5473 = vpack.c.bf16 %v5394, %v5393
  %v5474 = vpack.c.bf16 %v5396, %v5395
  %v5475 = vpack.c.bf16 %v5398, %v5397
  %v5476 = vpack.c.bf16 %v5400, %v5399
  %v5477 = vpack.c.bf16 %v5402, %v5401
  %v5478 = vpack.c.bf16 %v5404, %v5403
  %v5479 = vpack.c.bf16 %v5406, %v5405
  %v5480 = vpack.c.bf16 %v5408, %v5407
  %v5481 = vpack.c.bf16 %v5410, %v5409
  %v5482 = vpack.c.bf16 %v5412, %v5411
  %v5483 = vpack.c.bf16 %v5414, %v5413
  %v5484 = vpack.c.bf16 %v5416, %v5415
  %v5485 = vpack.c.bf16 %v5418, %v5417
  %v5486 = vpack.c.bf16 %v5420, %v5419
  %v5487 = vpack.c.bf16 %v5422, %v5421
  %v5488 = vpack.c.bf16 %v5424, %v5423
  %v5489 = vpack.c.bf16 %v5426, %v5425
  %v5490 = vpack.c.bf16 %v5428, %v5427
  %v5491 = vpack.c.bf16 %v5430, %v5429
  %v5492 = vpack.c.bf16 %v5432, %v5431
  %v5493 = vpack.c.bf16 %v5434, %v5433
  %v5494 = vpack.c.bf16 %v5436, %v5435
  %v5495 = vpack.c.bf16 %v5438, %v5437
  %v5496 = vpack.c.bf16 %v5440, %v5439
  %v5497 = vpack.c.bf16 %v5442, %v5441
  %v5498 = vpack.c.bf16 %v5444, %v5443
  %v5499 = vpack.c.bf16 %v5446, %v5445
  %v5500 = vpack.c.bf16 %v5448, %v5447
  %v5501 = vpack.c.bf16 %v5450, %v5449
  %v5502 = vpack.c.bf16 %v5452, %v5451
  %v5503 = vpack.c.bf16 %v5454, %v5453
  %v5504 = vpack.c.bf16 %v5456, %v5455
  %v5505 = vpack.c.bf16 %v5458, %v5457
  %v5506 = vpack.c.bf16 %v5460, %v5459
  %v5507 = vpack.c.bf16 %v5462, %v5461
  %v5508 = vpack.c.bf16 %v5464, %v5463
  %v5509 = vpack.c.bf16 %v5466, %v5465
  %v5510 = vpack.c.bf16 %v5468, %v5467
  %v5511 = vpack.c.bf16 %v5470, %v5469
  %v5512 = vpack.c.bf16 %v5471, %v5471
  %s5513 = scalar_lea.vmem %s1, 16
  %v5514 = vld [vmem:[%s5513] sm:$0x3]
  %v5516 = vsel %vm271, %v5472, 0
  %v5519 = vsel %vm271, %v5473, 0
  %v5522 = vsel %vm271, %v5474, 0
  %v5525 = vsel %vm271, %v5475, 0
  %v5528 = vsel %vm271, %v5476, 0
  %v5531 = vsel %vm271, %v5477, 0
  %v5534 = vsel %vm271, %v5478, 0
  %v5537 = vsel %vm271, %v5479, 0
  %v5540 = vsel %vm271, %v5480, 0
  %v5543 = vsel %vm271, %v5481, 0
  %v5546 = vsel %vm271, %v5482, 0
  %v5549 = vsel %vm271, %v5483, 0
  %v5552 = vsel %vm271, %v5484, 0
  %v5555 = vsel %vm271, %v5485, 0
  %v5558 = vsel %vm271, %v5486, 0
  %v5561 = vsel %vm271, %v5487, 0
  %v5564 = vsel %vm271, %v5488, 0
  %v5567 = vsel %vm271, %v5489, 0
  %v5570 = vsel %vm271, %v5490, 0
  %v5573 = vsel %vm271, %v5491, 0
  %v5576 = vsel %vm271, %v5492, 0
  %v5579 = vsel %vm271, %v5493, 0
  %v5582 = vsel %vm271, %v5494, 0
  %v5585 = vsel %vm271, %v5495, 0
  %v5588 = vsel %vm271, %v5496, 0
  %v5591 = vsel %vm271, %v5497, 0
  %v5594 = vsel %vm271, %v5498, 0
  %v5597 = vsel %vm271, %v5499, 0
  %v5600 = vsel %vm271, %v5500, 0
  %v5603 = vsel %vm271, %v5501, 0
  %v5606 = vsel %vm271, %v5502, 0
  %v5609 = vsel %vm271, %v5503, 0
  %v5612 = vsel %vm271, %v5504, 0
  %v5615 = vsel %vm271, %v5505, 0
  %v5618 = vsel %vm271, %v5506, 0
  %v5621 = vsel %vm271, %v5507, 0
  %v5624 = vsel %vm271, %v5508, 0
  %v5627 = vsel %vm271, %v5509, 0
  %v5630 = vsel %vm271, %v5510, 0
  %v5633 = vsel %vm271, %v5511, 0
  %v5636 = vsel %vm271, %v5512, 0
  %v5639 = vsel %vm395, %v5514, 0
  %5641 = vmatprep.subr.bf16.mxu0 0
  %5642 = vmatpush1.bf16.msra.mxu0 0
  %5643 = vmatprep.subr.bf16.mxu0 0
  %5644 = vmatpush1.bf16.msra.mxu0 0
  %5645 = vmatprep.subr.bf16.mxu0 0
  %5646 = vmatpush1.bf16.msra.mxu0 0
  %5647 = vmatprep.subr.bf16.mxu0 0
  %5648 = vmatpush1.bf16.msra.mxu0 0
  %5649 = vmatprep.subr.bf16.mxu0 0
  %5650 = vmatpush1.bf16.msra.mxu0 0
  %5651 = vmatprep.subr.bf16.mxu0 0
  %5652 = vmatpush1.bf16.msra.mxu0 0
  %5653 = vmatprep.subr.bf16.mxu0 0
  %5654 = vmatpush1.bf16.msra.mxu0 0
  %5655 = vmatprep.subr.bf16.mxu0 0
  %5656 = vmatpush1.bf16.msra.mxu0 %v5639
  %5657 = vmatprep.subr.bf16.mxu0 0
  %5658 = vmatpush2.bf16.msra.mxu0 0
  %5659 = vmatprep.subr.bf16.mxu0 0
  %5660 = vmatpush2.bf16.msra.mxu0 0
  %5661 = vmatprep.subr.bf16.mxu0 0
  %5662 = vmatpush2.bf16.msra.mxu0 0
  %5663 = vmatprep.subr.bf16.mxu0 0
  %5664 = vmatpush2.bf16.msra.mxu0 0
  %5665 = vmatprep.subr.bf16.mxu0 0
  %5666 = vmatpush2.bf16.msra.mxu0 0
  %5667 = vmatprep.subr.bf16.mxu0 0
  %5668 = vmatpush2.bf16.msra.mxu0 0
  %5669 = vmatprep.subr.bf16.mxu0 0
  %5670 = vmatpush2.bf16.msra.mxu0 0
  %5671 = vmatprep.subr.bf16.mxu0 0
  %5672 = vmatpush2.bf16.msra.mxu0 0
  %5673 = vmatprep.mubr.bf16.mxu0 0
  %5674 = vmatmul.mubr.bf16.gmra.mxu0 %v5516
  %v5675 = vpop.f32.mrf.mxu0
  %v5676 = vadd.f32 0.0, %v5675
  %v5677 = vpop.f32.mrf.mxu0
  %v5678 = vpop.f32.mrf.mxu0
  %v5679 = vadd.f32 0.0, %v5678
  %v5680 = vpop.f32.mrf.mxu0
  %5681 = vmatprep.mubr.bf16.mxu0 0
  %5682 = vmatmul.mubr.bf16.gmra.mxu0 %v5519
  %v5683 = vpop.f32.mrf.mxu0
  %v5684 = vadd.f32 0.0, %v5683
  %v5685 = vpop.f32.mrf.mxu0
  %v5686 = vpop.f32.mrf.mxu0
  %v5687 = vadd.f32 0.0, %v5686
  %v5688 = vpop.f32.mrf.mxu0
  %5689 = vmatprep.mubr.bf16.mxu0 0
  %5690 = vmatmul.mubr.bf16.gmra.mxu0 %v5522
  %v5691 = vpop.f32.mrf.mxu0
  %v5692 = vadd.f32 0.0, %v5691
  %v5693 = vpop.f32.mrf.mxu0
  %v5694 = vpop.f32.mrf.mxu0
  %v5695 = vadd.f32 0.0, %v5694
  %v5696 = vpop.f32.mrf.mxu0
  %5697 = vmatprep.mubr.bf16.mxu0 0
  %5698 = vmatmul.mubr.bf16.gmra.mxu0 %v5525
  %v5699 = vpop.f32.mrf.mxu0
  %v5700 = vadd.f32 0.0, %v5699
  %v5701 = vpop.f32.mrf.mxu0
  %v5702 = vpop.f32.mrf.mxu0
  %v5703 = vadd.f32 0.0, %v5702
  %v5704 = vpop.f32.mrf.mxu0
  %5705 = vmatprep.mubr.bf16.mxu0 0
  %5706 = vmatmul.mubr.bf16.gmra.mxu0 %v5528
  %v5707 = vpop.f32.mrf.mxu0
  %v5708 = vadd.f32 0.0, %v5707
  %v5709 = vpop.f32.mrf.mxu0
  %v5710 = vpop.f32.mrf.mxu0
  %v5711 = vadd.f32 0.0, %v5710
  %v5712 = vpop.f32.mrf.mxu0
  %5713 = vmatprep.mubr.bf16.mxu0 0
  %5714 = vmatmul.mubr.bf16.gmra.mxu0 %v5531
  %v5715 = vpop.f32.mrf.mxu0
  %v5716 = vadd.f32 0.0, %v5715
  %v5717 = vpop.f32.mrf.mxu0
  %v5718 = vpop.f32.mrf.mxu0
  %v5719 = vadd.f32 0.0, %v5718
  %v5720 = vpop.f32.mrf.mxu0
  %5721 = vmatprep.mubr.bf16.mxu0 0
  %5722 = vmatmul.mubr.bf16.gmra.mxu0 %v5534
  %v5723 = vpop.f32.mrf.mxu0
  %v5724 = vadd.f32 0.0, %v5723
  %v5725 = vpop.f32.mrf.mxu0
  %v5726 = vpop.f32.mrf.mxu0
  %v5727 = vadd.f32 0.0, %v5726
  %v5728 = vpop.f32.mrf.mxu0
  %5729 = vmatprep.mubr.bf16.mxu0 0
  %5730 = vmatmul.mubr.bf16.gmra.mxu0 %v5537
  %v5731 = vpop.f32.mrf.mxu0
  %v5732 = vadd.f32 0.0, %v5731
  %v5733 = vpop.f32.mrf.mxu0
  %v5734 = vpop.f32.mrf.mxu0
  %v5735 = vadd.f32 0.0, %v5734
  %v5736 = vpop.f32.mrf.mxu0
  %5737 = vmatprep.mubr.bf16.mxu0 0
  %5738 = vmatmul.mubr.bf16.gmra.mxu0 %v5540
  %v5739 = vpop.f32.mrf.mxu0
  %v5740 = vadd.f32 0.0, %v5739
  %v5741 = vpop.f32.mrf.mxu0
  %v5742 = vpop.f32.mrf.mxu0
  %v5743 = vadd.f32 0.0, %v5742
  %v5744 = vpop.f32.mrf.mxu0
  %5745 = vmatprep.mubr.bf16.mxu0 0
  %5746 = vmatmul.mubr.bf16.gmra.mxu0 %v5543
  %v5747 = vpop.f32.mrf.mxu0
  %v5748 = vadd.f32 0.0, %v5747
  %v5749 = vpop.f32.mrf.mxu0
  %v5750 = vpop.f32.mrf.mxu0
  %v5751 = vadd.f32 0.0, %v5750
  %v5752 = vpop.f32.mrf.mxu0
  %5753 = vmatprep.mubr.bf16.mxu0 0
  %5754 = vmatmul.mubr.bf16.gmra.mxu0 %v5546
  %v5755 = vpop.f32.mrf.mxu0
  %v5756 = vadd.f32 0.0, %v5755
  %v5757 = vpop.f32.mrf.mxu0
  %v5758 = vpop.f32.mrf.mxu0
  %v5759 = vadd.f32 0.0, %v5758
  %v5760 = vpop.f32.mrf.mxu0
  %5761 = vmatprep.mubr.bf16.mxu0 0
  %5762 = vmatmul.mubr.bf16.gmra.mxu0 %v5549
  %v5763 = vpop.f32.mrf.mxu0
  %v5764 = vadd.f32 0.0, %v5763
  %v5765 = vpop.f32.mrf.mxu0
  %v5766 = vpop.f32.mrf.mxu0
  %v5767 = vadd.f32 0.0, %v5766
  %v5768 = vpop.f32.mrf.mxu0
  %5769 = vmatprep.mubr.bf16.mxu0 0
  %5770 = vmatmul.mubr.bf16.gmra.mxu0 %v5552
  %v5771 = vpop.f32.mrf.mxu0
  %v5772 = vadd.f32 0.0, %v5771
  %v5773 = vpop.f32.mrf.mxu0
  %v5774 = vpop.f32.mrf.mxu0
  %v5775 = vadd.f32 0.0, %v5774
  %v5776 = vpop.f32.mrf.mxu0
  %5777 = vmatprep.mubr.bf16.mxu0 0
  %5778 = vmatmul.mubr.bf16.gmra.mxu0 %v5555
  %v5779 = vpop.f32.mrf.mxu0
  %v5780 = vadd.f32 0.0, %v5779
  %v5781 = vpop.f32.mrf.mxu0
  %v5782 = vpop.f32.mrf.mxu0
  %v5783 = vadd.f32 0.0, %v5782
  %v5784 = vpop.f32.mrf.mxu0
  %5785 = vmatprep.mubr.bf16.mxu0 0
  %5786 = vmatmul.mubr.bf16.gmra.mxu0 %v5558
  %v5787 = vpop.f32.mrf.mxu0
  %v5788 = vadd.f32 0.0, %v5787
  %v5789 = vpop.f32.mrf.mxu0
  %v5790 = vpop.f32.mrf.mxu0
  %v5791 = vadd.f32 0.0, %v5790
  %v5792 = vpop.f32.mrf.mxu0
  %5793 = vmatprep.mubr.bf16.mxu0 0
  %5794 = vmatmul.mubr.bf16.gmra.mxu0 %v5561
  %v5795 = vpop.f32.mrf.mxu0
  %v5796 = vadd.f32 0.0, %v5795
  %v5797 = vpop.f32.mrf.mxu0
  %v5798 = vpop.f32.mrf.mxu0
  %v5799 = vadd.f32 0.0, %v5798
  %v5800 = vpop.f32.mrf.mxu0
  %5801 = vmatprep.mubr.bf16.mxu0 0
  %5802 = vmatmul.mubr.bf16.gmra.mxu0 %v5564
  %v5803 = vpop.f32.mrf.mxu0
  %v5804 = vadd.f32 0.0, %v5803
  %v5805 = vpop.f32.mrf.mxu0
  %v5806 = vpop.f32.mrf.mxu0
  %v5807 = vadd.f32 0.0, %v5806
  %v5808 = vpop.f32.mrf.mxu0
  %5809 = vmatprep.mubr.bf16.mxu0 0
  %5810 = vmatmul.mubr.bf16.gmra.mxu0 %v5567
  %v5811 = vpop.f32.mrf.mxu0
  %v5812 = vadd.f32 0.0, %v5811
  %v5813 = vpop.f32.mrf.mxu0
  %v5814 = vpop.f32.mrf.mxu0
  %v5815 = vadd.f32 0.0, %v5814
  %v5816 = vpop.f32.mrf.mxu0
  %5817 = vmatprep.mubr.bf16.mxu0 0
  %5818 = vmatmul.mubr.bf16.gmra.mxu0 %v5570
  %v5819 = vpop.f32.mrf.mxu0
  %v5820 = vadd.f32 0.0, %v5819
  %v5821 = vpop.f32.mrf.mxu0
  %v5822 = vpop.f32.mrf.mxu0
  %v5823 = vadd.f32 0.0, %v5822
  %v5824 = vpop.f32.mrf.mxu0
  %5825 = vmatprep.mubr.bf16.mxu0 0
  %5826 = vmatmul.mubr.bf16.gmra.mxu0 %v5573
  %v5827 = vpop.f32.mrf.mxu0
  %v5828 = vadd.f32 0.0, %v5827
  %v5829 = vpop.f32.mrf.mxu0
  %v5830 = vpop.f32.mrf.mxu0
  %v5831 = vadd.f32 0.0, %v5830
  %v5832 = vpop.f32.mrf.mxu0
  %5833 = vmatprep.mubr.bf16.mxu0 0
  %5834 = vmatmul.mubr.bf16.gmra.mxu0 %v5576
  %v5835 = vpop.f32.mrf.mxu0
  %v5836 = vadd.f32 0.0, %v5835
  %v5837 = vpop.f32.mrf.mxu0
  %v5838 = vpop.f32.mrf.mxu0
  %v5839 = vadd.f32 0.0, %v5838
  %v5840 = vpop.f32.mrf.mxu0
  %5841 = vmatprep.mubr.bf16.mxu0 0
  %5842 = vmatmul.mubr.bf16.gmra.mxu0 %v5579
  %v5843 = vpop.f32.mrf.mxu0
  %v5844 = vadd.f32 0.0, %v5843
  %v5845 = vpop.f32.mrf.mxu0
  %v5846 = vpop.f32.mrf.mxu0
  %v5847 = vadd.f32 0.0, %v5846
  %v5848 = vpop.f32.mrf.mxu0
  %5849 = vmatprep.mubr.bf16.mxu0 0
  %5850 = vmatmul.mubr.bf16.gmra.mxu0 %v5582
  %v5851 = vpop.f32.mrf.mxu0
  %v5852 = vadd.f32 0.0, %v5851
  %v5853 = vpop.f32.mrf.mxu0
  %v5854 = vpop.f32.mrf.mxu0
  %v5855 = vadd.f32 0.0, %v5854
  %v5856 = vpop.f32.mrf.mxu0
  %5857 = vmatprep.mubr.bf16.mxu0 0
  %5858 = vmatmul.mubr.bf16.gmra.mxu0 %v5585
  %v5859 = vpop.f32.mrf.mxu0
  %v5860 = vadd.f32 0.0, %v5859
  %v5861 = vpop.f32.mrf.mxu0
  %v5862 = vpop.f32.mrf.mxu0
  %v5863 = vadd.f32 0.0, %v5862
  %v5864 = vpop.f32.mrf.mxu0
  %5865 = vmatprep.mubr.bf16.mxu0 0
  %5866 = vmatmul.mubr.bf16.gmra.mxu0 %v5588
  %v5867 = vpop.f32.mrf.mxu0
  %v5868 = vadd.f32 0.0, %v5867
  %v5869 = vpop.f32.mrf.mxu0
  %v5870 = vpop.f32.mrf.mxu0
  %v5871 = vadd.f32 0.0, %v5870
  %v5872 = vpop.f32.mrf.mxu0
  %5873 = vmatprep.mubr.bf16.mxu0 0
  %5874 = vmatmul.mubr.bf16.gmra.mxu0 %v5591
  %v5875 = vpop.f32.mrf.mxu0
  %v5876 = vadd.f32 0.0, %v5875
  %v5877 = vpop.f32.mrf.mxu0
  %v5878 = vpop.f32.mrf.mxu0
  %v5879 = vadd.f32 0.0, %v5878
  %v5880 = vpop.f32.mrf.mxu0
  %5881 = vmatprep.mubr.bf16.mxu0 0
  %5882 = vmatmul.mubr.bf16.gmra.mxu0 %v5594
  %v5883 = vpop.f32.mrf.mxu0
  %v5884 = vadd.f32 0.0, %v5883
  %v5885 = vpop.f32.mrf.mxu0
  %v5886 = vpop.f32.mrf.mxu0
  %v5887 = vadd.f32 0.0, %v5886
  %v5888 = vpop.f32.mrf.mxu0
  %5889 = vmatprep.mubr.bf16.mxu0 0
  %5890 = vmatmul.mubr.bf16.gmra.mxu0 %v5597
  %v5891 = vpop.f32.mrf.mxu0
  %v5892 = vadd.f32 0.0, %v5891
  %v5893 = vpop.f32.mrf.mxu0
  %v5894 = vpop.f32.mrf.mxu0
  %v5895 = vadd.f32 0.0, %v5894
  %v5896 = vpop.f32.mrf.mxu0
  %5897 = vmatprep.mubr.bf16.mxu0 0
  %5898 = vmatmul.mubr.bf16.gmra.mxu0 %v5600
  %v5899 = vpop.f32.mrf.mxu0
  %v5900 = vadd.f32 0.0, %v5899
  %v5901 = vpop.f32.mrf.mxu0
  %v5902 = vpop.f32.mrf.mxu0
  %v5903 = vadd.f32 0.0, %v5902
  %v5904 = vpop.f32.mrf.mxu0
  %5905 = vmatprep.mubr.bf16.mxu0 0
  %5906 = vmatmul.mubr.bf16.gmra.mxu0 %v5603
  %v5907 = vpop.f32.mrf.mxu0
  %v5908 = vadd.f32 0.0, %v5907
  %v5909 = vpop.f32.mrf.mxu0
  %v5910 = vpop.f32.mrf.mxu0
  %v5911 = vadd.f32 0.0, %v5910
  %v5912 = vpop.f32.mrf.mxu0
  %5913 = vmatprep.mubr.bf16.mxu0 0
  %5914 = vmatmul.mubr.bf16.gmra.mxu0 %v5606
  %v5915 = vpop.f32.mrf.mxu0
  %v5916 = vadd.f32 0.0, %v5915
  %v5917 = vpop.f32.mrf.mxu0
  %v5918 = vpop.f32.mrf.mxu0
  %v5919 = vadd.f32 0.0, %v5918
  %v5920 = vpop.f32.mrf.mxu0
  %5921 = vmatprep.mubr.bf16.mxu0 0
  %5922 = vmatmul.mubr.bf16.gmra.mxu0 %v5609
  %v5923 = vpop.f32.mrf.mxu0
  %v5924 = vadd.f32 0.0, %v5923
  %v5925 = vpop.f32.mrf.mxu0
  %v5926 = vpop.f32.mrf.mxu0
  %v5927 = vadd.f32 0.0, %v5926
  %v5928 = vpop.f32.mrf.mxu0
  %5929 = vmatprep.mubr.bf16.mxu0 0
  %5930 = vmatmul.mubr.bf16.gmra.mxu0 %v5612
  %v5931 = vpop.f32.mrf.mxu0
  %v5932 = vadd.f32 0.0, %v5931
  %v5933 = vpop.f32.mrf.mxu0
  %v5934 = vpop.f32.mrf.mxu0
  %v5935 = vadd.f32 0.0, %v5934
  %v5936 = vpop.f32.mrf.mxu0
  %5937 = vmatprep.mubr.bf16.mxu0 0
  %5938 = vmatmul.mubr.bf16.gmra.mxu0 %v5615
  %v5939 = vpop.f32.mrf.mxu0
  %v5940 = vadd.f32 0.0, %v5939
  %v5941 = vpop.f32.mrf.mxu0
  %v5942 = vpop.f32.mrf.mxu0
  %v5943 = vadd.f32 0.0, %v5942
  %v5944 = vpop.f32.mrf.mxu0
  %5945 = vmatprep.mubr.bf16.mxu0 0
  %5946 = vmatmul.mubr.bf16.gmra.mxu0 %v5618
  %v5947 = vpop.f32.mrf.mxu0
  %v5948 = vadd.f32 0.0, %v5947
  %v5949 = vpop.f32.mrf.mxu0
  %v5950 = vpop.f32.mrf.mxu0
  %v5951 = vadd.f32 0.0, %v5950
  %v5952 = vpop.f32.mrf.mxu0
  %5953 = vmatprep.mubr.bf16.mxu0 0
  %5954 = vmatmul.mubr.bf16.gmra.mxu0 %v5621
  %v5955 = vpop.f32.mrf.mxu0
  %v5956 = vadd.f32 0.0, %v5955
  %v5957 = vpop.f32.mrf.mxu0
  %v5958 = vpop.f32.mrf.mxu0
  %v5959 = vadd.f32 0.0, %v5958
  %v5960 = vpop.f32.mrf.mxu0
  %5961 = vmatprep.mubr.bf16.mxu0 0
  %5962 = vmatmul.mubr.bf16.gmra.mxu0 %v5624
  %v5963 = vpop.f32.mrf.mxu0
  %v5964 = vadd.f32 0.0, %v5963
  %v5965 = vpop.f32.mrf.mxu0
  %v5966 = vpop.f32.mrf.mxu0
  %v5967 = vadd.f32 0.0, %v5966
  %v5968 = vpop.f32.mrf.mxu0
  %5969 = vmatprep.mubr.bf16.mxu0 0
  %5970 = vmatmul.mubr.bf16.gmra.mxu0 %v5627
  %v5971 = vpop.f32.mrf.mxu0
  %v5972 = vadd.f32 0.0, %v5971
  %v5973 = vpop.f32.mrf.mxu0
  %v5974 = vpop.f32.mrf.mxu0
  %v5975 = vadd.f32 0.0, %v5974
  %v5976 = vpop.f32.mrf.mxu0
  %5977 = vmatprep.mubr.bf16.mxu0 0
  %5978 = vmatmul.mubr.bf16.gmra.mxu0 %v5630
  %v5979 = vpop.f32.mrf.mxu0
  %v5980 = vadd.f32 0.0, %v5979
  %v5981 = vpop.f32.mrf.mxu0
  %v5982 = vpop.f32.mrf.mxu0
  %v5983 = vadd.f32 0.0, %v5982
  %v5984 = vpop.f32.mrf.mxu0
  %5985 = vmatprep.mubr.bf16.mxu0 0
  %5986 = vmatmul.mubr.bf16.gmra.mxu0 %v5633
  %v5987 = vpop.f32.mrf.mxu0
  %v5988 = vadd.f32 0.0, %v5987
  %v5989 = vpop.f32.mrf.mxu0
  %v5990 = vpop.f32.mrf.mxu0
  %v5991 = vadd.f32 0.0, %v5990
  %v5992 = vpop.f32.mrf.mxu0
  %5993 = vmatprep.mubr.bf16.mxu0 0
  %5994 = vmatmul.mubr.bf16.gmra.mxu0 %v5636
  %v5995 = vpop.f32.mrf.mxu0
  %v5996 = vadd.f32 0.0, %v5995
  %v5997 = vpop.f32.mrf.mxu0
  %v5998 = vpop.f32.mrf.mxu0
  %v5999 = vpop.f32.mrf.mxu0
  %6000 = vdwg.mxu0
  %v6001 = vadd.f32 %v5310, %v5676
  %v6002 = vadd.f32 %v5311, %v5679
  %v6003 = vadd.f32 %v5312, %v5684
  %v6004 = vadd.f32 %v5313, %v5687
  %v6005 = vadd.f32 %v5314, %v5692
  %v6006 = vadd.f32 %v5315, %v5695
  %v6007 = vadd.f32 %v5316, %v5700
  %v6008 = vadd.f32 %v5317, %v5703
  %v6009 = vadd.f32 %v5318, %v5708
  %v6010 = vadd.f32 %v5319, %v5711
  %v6011 = vadd.f32 %v5320, %v5716
  %v6012 = vadd.f32 %v5321, %v5719
  %v6013 = vadd.f32 %v5322, %v5724
  %v6014 = vadd.f32 %v5323, %v5727
  %v6015 = vadd.f32 %v5324, %v5732
  %v6016 = vadd.f32 %v5325, %v5735
  %v6017 = vadd.f32 %v5326, %v5740
  %v6018 = vadd.f32 %v5327, %v5743
  %v6019 = vadd.f32 %v5328, %v5748
  %v6020 = vadd.f32 %v5329, %v5751
  %v6021 = vadd.f32 %v5330, %v5756
  %v6022 = vadd.f32 %v5331, %v5759
  %v6023 = vadd.f32 %v5332, %v5764
  %v6024 = vadd.f32 %v5333, %v5767
  %v6025 = vadd.f32 %v5334, %v5772
  %v6026 = vadd.f32 %v5335, %v5775
  %v6027 = vadd.f32 %v5336, %v5780
  %v6028 = vadd.f32 %v5337, %v5783
  %v6029 = vadd.f32 %v5338, %v5788
  %v6030 = vadd.f32 %v5339, %v5791
  %v6031 = vadd.f32 %v5340, %v5796
  %v6032 = vadd.f32 %v5341, %v5799
  %v6033 = vadd.f32 %v5342, %v5804
  %v6034 = vadd.f32 %v5343, %v5807
  %v6035 = vadd.f32 %v5344, %v5812
  %v6036 = vadd.f32 %v5345, %v5815
  %v6037 = vadd.f32 %v5346, %v5820
  %v6038 = vadd.f32 %v5347, %v5823
  %v6039 = vadd.f32 %v5348, %v5828
  %v6040 = vadd.f32 %v5349, %v5831
  %v6041 = vadd.f32 %v5350, %v5836
  %v6042 = vadd.f32 %v5351, %v5839
  %v6043 = vadd.f32 %v5352, %v5844
  %v6044 = vadd.f32 %v5353, %v5847
  %v6045 = vadd.f32 %v5354, %v5852
  %v6046 = vadd.f32 %v5355, %v5855
  %v6047 = vadd.f32 %v5356, %v5860
  %v6048 = vadd.f32 %v5357, %v5863
  %v6049 = vadd.f32 %v5358, %v5868
  %v6050 = vadd.f32 %v5359, %v5871
  %v6051 = vadd.f32 %v5360, %v5876
  %v6052 = vadd.f32 %v5361, %v5879
  %v6053 = vadd.f32 %v5362, %v5884
  %v6054 = vadd.f32 %v5363, %v5887
  %v6055 = vadd.f32 %v5364, %v5892
  %v6056 = vadd.f32 %v5365, %v5895
  %v6057 = vadd.f32 %v5366, %v5900
  %v6058 = vadd.f32 %v5367, %v5903
  %v6059 = vadd.f32 %v5368, %v5908
  %v6060 = vadd.f32 %v5369, %v5911
  %v6061 = vadd.f32 %v5370, %v5916
  %v6062 = vadd.f32 %v5371, %v5919
  %v6063 = vadd.f32 %v5372, %v5924
  %v6064 = vadd.f32 %v5373, %v5927
  %v6065 = vadd.f32 %v5374, %v5932
  %v6066 = vadd.f32 %v5375, %v5935
  %v6067 = vadd.f32 %v5376, %v5940
  %v6068 = vadd.f32 %v5377, %v5943
  %v6069 = vadd.f32 %v5378, %v5948
  %v6070 = vadd.f32 %v5379, %v5951
  %v6071 = vadd.f32 %v5380, %v5956
  %v6072 = vadd.f32 %v5381, %v5959
  %v6073 = vadd.f32 %v5382, %v5964
  %v6074 = vadd.f32 %v5383, %v5967
  %v6075 = vadd.f32 %v5384, %v5972
  %v6076 = vadd.f32 %v5385, %v5975
  %v6077 = vadd.f32 %v5386, %v5980
  %v6078 = vadd.f32 %v5387, %v5983
  %v6079 = vadd.f32 %v5388, %v5988
  %v6080 = vadd.f32 %v5389, %v5991
  %v6081 = vadd.f32 %v5390, %v5996
  %v6082 = vlaneseq
  %v6083 = vshrl.u32 %v6082, 7
  %v6084 = vsub.s32 0, %v6083
  %v6085 = vrot.slane %v22, %v6084
  %v6086 = vadd.f32 %v6001, %v6085
  %v6087 = vadd.f32 %v6002, %v6085
  %v6088 = vadd.f32 %v6003, %v6085
  %v6089 = vadd.f32 %v6004, %v6085
  %v6090 = vadd.f32 %v6005, %v6085
  %v6091 = vadd.f32 %v6006, %v6085
  %v6092 = vadd.f32 %v6007, %v6085
  %v6093 = vadd.f32 %v6008, %v6085
  %v6094 = vadd.f32 %v6009, %v6085
  %v6095 = vadd.f32 %v6010, %v6085
  %v6096 = vadd.f32 %v6011, %v6085
  %v6097 = vadd.f32 %v6012, %v6085
  %v6098 = vadd.f32 %v6013, %v6085
  %v6099 = vadd.f32 %v6014, %v6085
  %v6100 = vadd.f32 %v6015, %v6085
  %v6101 = vadd.f32 %v6016, %v6085
  %v6102 = vadd.f32 %v6017, %v6085
  %v6103 = vadd.f32 %v6018, %v6085
  %v6104 = vadd.f32 %v6019, %v6085
  %v6105 = vadd.f32 %v6020, %v6085
  %v6106 = vadd.f32 %v6021, %v6085
  %v6107 = vadd.f32 %v6022, %v6085
  %v6108 = vadd.f32 %v6023, %v6085
  %v6109 = vadd.f32 %v6024, %v6085
  %v6110 = vadd.f32 %v6025, %v6085
  %v6111 = vadd.f32 %v6026, %v6085
  %v6112 = vadd.f32 %v6027, %v6085
  %v6113 = vadd.f32 %v6028, %v6085
  %v6114 = vadd.f32 %v6029, %v6085
  %v6115 = vadd.f32 %v6030, %v6085
  %v6116 = vadd.f32 %v6031, %v6085
  %v6117 = vadd.f32 %v6032, %v6085
  %v6118 = vadd.f32 %v6033, %v6085
  %v6119 = vadd.f32 %v6034, %v6085
  %v6120 = vadd.f32 %v6035, %v6085
  %v6121 = vadd.f32 %v6036, %v6085
  %v6122 = vadd.f32 %v6037, %v6085
  %v6123 = vadd.f32 %v6038, %v6085
  %v6124 = vadd.f32 %v6039, %v6085
  %v6125 = vadd.f32 %v6040, %v6085
  %v6126 = vadd.f32 %v6041, %v6085
  %v6127 = vadd.f32 %v6042, %v6085
  %v6128 = vadd.f32 %v6043, %v6085
  %v6129 = vadd.f32 %v6044, %v6085
  %v6130 = vadd.f32 %v6045, %v6085
  %v6131 = vadd.f32 %v6046, %v6085
  %v6132 = vadd.f32 %v6047, %v6085
  %v6133 = vadd.f32 %v6048, %v6085
  %v6134 = vadd.f32 %v6049, %v6085
  %v6135 = vadd.f32 %v6050, %v6085
  %v6136 = vadd.f32 %v6051, %v6085
  %v6137 = vadd.f32 %v6052, %v6085
  %v6138 = vadd.f32 %v6053, %v6085
  %v6139 = vadd.f32 %v6054, %v6085
  %v6140 = vadd.f32 %v6055, %v6085
  %v6141 = vadd.f32 %v6056, %v6085
  %v6142 = vadd.f32 %v6057, %v6085
  %v6143 = vadd.f32 %v6058, %v6085
  %v6144 = vadd.f32 %v6059, %v6085
  %v6145 = vadd.f32 %v6060, %v6085
  %v6146 = vadd.f32 %v6061, %v6085
  %v6147 = vadd.f32 %v6062, %v6085
  %v6148 = vadd.f32 %v6063, %v6085
  %v6149 = vadd.f32 %v6064, %v6085
  %v6150 = vadd.f32 %v6065, %v6085
  %v6151 = vadd.f32 %v6066, %v6085
  %v6152 = vadd.f32 %v6067, %v6085
  %v6153 = vadd.f32 %v6068, %v6085
  %v6154 = vadd.f32 %v6069, %v6085
  %v6155 = vadd.f32 %v6070, %v6085
  %v6156 = vadd.f32 %v6071, %v6085
  %v6157 = vadd.f32 %v6072, %v6085
  %v6158 = vadd.f32 %v6073, %v6085
  %v6159 = vadd.f32 %v6074, %v6085
  %v6160 = vadd.f32 %v6075, %v6085
  %v6161 = vadd.f32 %v6076, %v6085
  %v6162 = vadd.f32 %v6077, %v6085
  %v6163 = vadd.f32 %v6078, %v6085
  %v6164 = vadd.f32 %v6079, %v6085
  %v6165 = vadd.f32 %v6080, %v6085
  %v6166 = vadd.f32 %v6081, %v6085
  %v6167 = vmax.f32 %v6086, 0.0
  %v6168 = vmax.f32 %v6087, 0.0
  %v6169 = vmax.f32 %v6088, 0.0
  %v6170 = vmax.f32 %v6089, 0.0
  %v6171 = vmax.f32 %v6090, 0.0
  %v6172 = vmax.f32 %v6091, 0.0
  %v6173 = vmax.f32 %v6092, 0.0
  %v6174 = vmax.f32 %v6093, 0.0
  %v6175 = vmax.f32 %v6094, 0.0
  %v6176 = vmax.f32 %v6095, 0.0
  %v6177 = vmax.f32 %v6096, 0.0
  %v6178 = vmax.f32 %v6097, 0.0
  %v6179 = vmax.f32 %v6098, 0.0
  %v6180 = vmax.f32 %v6099, 0.0
  %v6181 = vmax.f32 %v6100, 0.0
  %v6182 = vmax.f32 %v6101, 0.0
  %v6183 = vmax.f32 %v6102, 0.0
  %v6184 = vmax.f32 %v6103, 0.0
  %v6185 = vmax.f32 %v6104, 0.0
  %v6186 = vmax.f32 %v6105, 0.0
  %v6187 = vmax.f32 %v6106, 0.0
  %v6188 = vmax.f32 %v6107, 0.0
  %v6189 = vmax.f32 %v6108, 0.0
  %v6190 = vmax.f32 %v6109, 0.0
  %v6191 = vmax.f32 %v6110, 0.0
  %v6192 = vmax.f32 %v6111, 0.0
  %v6193 = vmax.f32 %v6112, 0.0
  %v6194 = vmax.f32 %v6113, 0.0
  %v6195 = vmax.f32 %v6114, 0.0
  %v6196 = vmax.f32 %v6115, 0.0
  %v6197 = vmax.f32 %v6116, 0.0
  %v6198 = vmax.f32 %v6117, 0.0
  %v6199 = vmax.f32 %v6118, 0.0
  %v6200 = vmax.f32 %v6119, 0.0
  %v6201 = vmax.f32 %v6120, 0.0
  %v6202 = vmax.f32 %v6121, 0.0
  %v6203 = vmax.f32 %v6122, 0.0
  %v6204 = vmax.f32 %v6123, 0.0
  %v6205 = vmax.f32 %v6124, 0.0
  %v6206 = vmax.f32 %v6125, 0.0
  %v6207 = vmax.f32 %v6126, 0.0
  %v6208 = vmax.f32 %v6127, 0.0
  %v6209 = vmax.f32 %v6128, 0.0
  %v6210 = vmax.f32 %v6129, 0.0
  %v6211 = vmax.f32 %v6130, 0.0
  %v6212 = vmax.f32 %v6131, 0.0
  %v6213 = vmax.f32 %v6132, 0.0
  %v6214 = vmax.f32 %v6133, 0.0
  %v6215 = vmax.f32 %v6134, 0.0
  %v6216 = vmax.f32 %v6135, 0.0
  %v6217 = vmax.f32 %v6136, 0.0
  %v6218 = vmax.f32 %v6137, 0.0
  %v6219 = vmax.f32 %v6138, 0.0
  %v6220 = vmax.f32 %v6139, 0.0
  %v6221 = vmax.f32 %v6140, 0.0
  %v6222 = vmax.f32 %v6141, 0.0
  %v6223 = vmax.f32 %v6142, 0.0
  %v6224 = vmax.f32 %v6143, 0.0
  %v6225 = vmax.f32 %v6144, 0.0
  %v6226 = vmax.f32 %v6145, 0.0
  %v6227 = vmax.f32 %v6146, 0.0
  %v6228 = vmax.f32 %v6147, 0.0
  %v6229 = vmax.f32 %v6148, 0.0
  %v6230 = vmax.f32 %v6149, 0.0
  %v6231 = vmax.f32 %v6150, 0.0
  %v6232 = vmax.f32 %v6151, 0.0
  %v6233 = vmax.f32 %v6152, 0.0
  %v6234 = vmax.f32 %v6153, 0.0
  %v6235 = vmax.f32 %v6154, 0.0
  %v6236 = vmax.f32 %v6155, 0.0
  %v6237 = vmax.f32 %v6156, 0.0
  %v6238 = vmax.f32 %v6157, 0.0
  %v6239 = vmax.f32 %v6158, 0.0
  %v6240 = vmax.f32 %v6159, 0.0
  %v6241 = vmax.f32 %v6160, 0.0
  %v6242 = vmax.f32 %v6161, 0.0
  %v6243 = vmax.f32 %v6162, 0.0
  %v6244 = vmax.f32 %v6163, 0.0
  %v6245 = vmax.f32 %v6164, 0.0
  %v6246 = vmax.f32 %v6165, 0.0
  %v6247 = vmax.f32 %v6166, 0.0
  %v6248 = vld [vmem:[%s2] sm:$0xff]
  %v6249 = vld [vmem:[%s2 + $0x8] sm:$0xf]
  %v6252 = vcombine.high %v6248, %v6248
  %v6254 = vunpack.c.l.s4 1983009808
  %v6255 = vunpack.c.0.s8 %v6254
  %v6256 = vlaneseq
  %v6257 = vshrl.u32 %v6256, 7
  %v6258 = vsub.s32 %v6255, %v6257
  %v6259 = vrot.slane %v6248, %v6258
  %v6261 = vunpack.c.l.s4 1983009808
  %v6262 = vunpack.c.0.s8 %v6261
  %v6263 = vlaneseq
  %v6264 = vshrl.u32 %v6263, 7
  %v6265 = vsub.s32 %v6262, %v6264
  %v6266 = vrot.slane %v6252, %v6265
  %v6267 = vcombine.high %v6259, %v6259
  %v6268 = vcombine.high %v6266, %v6266
  %v6270 = vunpack.c.l.s4 1983009808
  %v6271 = vunpack.c.0.s8 %v6270
  %v6272 = vlaneseq
  %v6273 = vshrl.u32 %v6272, 7
  %v6274 = vsub.s32 %v6271, %v6273
  %v6275 = vrot.slane %v6249, %v6274
  %v6276 = vcombine.high %v6275, %v6275
  %vm6282 = vcmask 64512
  %v6283 = vsel %vm6282, %v6276, 0
  %6285 = vmatprep.subr.mxu0 0.0
  %6286 = vmatpush1.msra.mxu0 %v6182
  %6287 = vmatprep.subr.mxu0 0.0
  %6288 = vmatpush1.msra.mxu0 %v6181
  %6289 = vmatprep.subr.mxu0 0.0
  %6290 = vmatpush1.msra.mxu0 %v6180
  %6291 = vmatprep.subr.mxu0 0.0
  %6292 = vmatpush1.msra.mxu0 %v6179
  %6293 = vmatprep.subr.mxu0 0.0
  %6294 = vmatpush1.msra.mxu0 %v6178
  %6295 = vmatprep.subr.mxu0 0.0
  %6296 = vmatpush1.msra.mxu0 %v6177
  %6297 = vmatprep.subr.mxu0 0.0
  %6298 = vmatpush1.msra.mxu0 %v6176
  %6299 = vmatprep.subr.mxu0 0.0
  %6300 = vmatpush1.msra.mxu0 %v6175
  %6301 = vmatprep.subr.mxu0 0.0
  %6302 = vmatpush1.msra.mxu0 %v6174
  %6303 = vmatprep.subr.mxu0 0.0
  %6304 = vmatpush1.msra.mxu0 %v6173
  %6305 = vmatprep.subr.mxu0 0.0
  %6306 = vmatpush1.msra.mxu0 %v6172
  %6307 = vmatprep.subr.mxu0 0.0
  %6308 = vmatpush1.msra.mxu0 %v6171
  %6309 = vmatprep.subr.mxu0 0.0
  %6310 = vmatpush1.msra.mxu0 %v6170
  %6311 = vmatprep.subr.mxu0 0.0
  %6312 = vmatpush1.msra.mxu0 %v6169
  %6313 = vmatprep.subr.mxu0 0.0
  %6314 = vmatpush1.msra.mxu0 %v6168
  %6315 = vmatprep.subr.mxu0 0.0
  %6316 = vmatpush1.msra.mxu0 %v6167
  %6317 = vmatprep.subr.mxu0 0.0
  %6318 = vmatpush2.msra.mxu0 %v6198
  %6319 = vmatprep.subr.mxu0 0.0
  %6320 = vmatpush2.msra.mxu0 %v6197
  %6321 = vmatprep.subr.mxu0 0.0
  %6322 = vmatpush2.msra.mxu0 %v6196
  %6323 = vmatprep.subr.mxu0 0.0
  %6324 = vmatpush2.msra.mxu0 %v6195
  %6325 = vmatprep.subr.mxu0 0.0
  %6326 = vmatpush2.msra.mxu0 %v6194
  %6327 = vmatprep.subr.mxu0 0.0
  %6328 = vmatpush2.msra.mxu0 %v6193
  %6329 = vmatprep.subr.mxu0 0.0
  %6330 = vmatpush2.msra.mxu0 %v6192
  %6331 = vmatprep.subr.mxu0 0.0
  %6332 = vmatpush2.msra.mxu0 %v6191
  %6333 = vmatprep.subr.mxu0 0.0
  %6334 = vmatpush2.msra.mxu0 %v6190
  %6335 = vmatprep.subr.mxu0 0.0
  %6336 = vmatpush2.msra.mxu0 %v6189
  %6337 = vmatprep.subr.mxu0 0.0
  %6338 = vmatpush2.msra.mxu0 %v6188
  %6339 = vmatprep.subr.mxu0 0.0
  %6340 = vmatpush2.msra.mxu0 %v6187
  %6341 = vmatprep.subr.mxu0 0.0
  %6342 = vmatpush2.msra.mxu0 %v6186
  %6343 = vmatprep.subr.mxu0 0.0
  %6344 = vmatpush2.msra.mxu0 %v6185
  %6345 = vmatprep.subr.mxu0 0.0
  %6346 = vmatpush2.msra.mxu0 %v6184
  %6347 = vmatprep.subr.mxu0 0.0
  %6348 = vmatpush2.msra.mxu0 %v6183
  %6349 = vmatprep.mubr.f32.mxu0 %v6267
  %6350 = vmatmul.mubr.f32.gmra.mxu0 %v6259
  %v6351 = vpop.f32.mrf.mxu0
  %v6352 = vadd.f32 0.0, %v6351
  %v6353 = vpop.f32.mrf.mxu0
  %6354 = vdwg.mxu0
  %6355 = vmatprep.subr.mxu0 0.0
  %6356 = vmatpush1.msra.mxu0 %v6214
  %6357 = vmatprep.subr.mxu0 0.0
  %6358 = vmatpush1.msra.mxu0 %v6213
  %6359 = vmatprep.subr.mxu0 0.0
  %6360 = vmatpush1.msra.mxu0 %v6212
  %6361 = vmatprep.subr.mxu0 0.0
  %6362 = vmatpush1.msra.mxu0 %v6211
  %6363 = vmatprep.subr.mxu0 0.0
  %6364 = vmatpush1.msra.mxu0 %v6210
  %6365 = vmatprep.subr.mxu0 0.0
  %6366 = vmatpush1.msra.mxu0 %v6209
  %6367 = vmatprep.subr.mxu0 0.0
  %6368 = vmatpush1.msra.mxu0 %v6208
  %6369 = vmatprep.subr.mxu0 0.0
  %6370 = vmatpush1.msra.mxu0 %v6207
  %6371 = vmatprep.subr.mxu0 0.0
  %6372 = vmatpush1.msra.mxu0 %v6206
  %6373 = vmatprep.subr.mxu0 0.0
  %6374 = vmatpush1.msra.mxu0 %v6205
  %6375 = vmatprep.subr.mxu0 0.0
  %6376 = vmatpush1.msra.mxu0 %v6204
  %6377 = vmatprep.subr.mxu0 0.0
  %6378 = vmatpush1.msra.mxu0 %v6203
  %6379 = vmatprep.subr.mxu0 0.0
  %6380 = vmatpush1.msra.mxu0 %v6202
  %6381 = vmatprep.subr.mxu0 0.0
  %6382 = vmatpush1.msra.mxu0 %v6201
  %6383 = vmatprep.subr.mxu0 0.0
  %6384 = vmatpush1.msra.mxu0 %v6200
  %6385 = vmatprep.subr.mxu0 0.0
  %6386 = vmatpush1.msra.mxu0 %v6199
  %6387 = vmatprep.subr.mxu0 0.0
  %6388 = vmatpush2.msra.mxu0 %v6230
  %6389 = vmatprep.subr.mxu0 0.0
  %6390 = vmatpush2.msra.mxu0 %v6229
  %6391 = vmatprep.subr.mxu0 0.0
  %6392 = vmatpush2.msra.mxu0 %v6228
  %6393 = vmatprep.subr.mxu0 0.0
  %6394 = vmatpush2.msra.mxu0 %v6227
  %6395 = vmatprep.subr.mxu0 0.0
  %6396 = vmatpush2.msra.mxu0 %v6226
  %6397 = vmatprep.subr.mxu0 0.0
  %6398 = vmatpush2.msra.mxu0 %v6225
  %6399 = vmatprep.subr.mxu0 0.0
  %6400 = vmatpush2.msra.mxu0 %v6224
  %6401 = vmatprep.subr.mxu0 0.0
  %6402 = vmatpush2.msra.mxu0 %v6223
  %6403 = vmatprep.subr.mxu0 0.0
  %6404 = vmatpush2.msra.mxu0 %v6222
  %6405 = vmatprep.subr.mxu0 0.0
  %6406 = vmatpush2.msra.mxu0 %v6221
  %6407 = vmatprep.subr.mxu0 0.0
  %6408 = vmatpush2.msra.mxu0 %v6220
  %6409 = vmatprep.subr.mxu0 0.0
  %6410 = vmatpush2.msra.mxu0 %v6219
  %6411 = vmatprep.subr.mxu0 0.0
  %6412 = vmatpush2.msra.mxu0 %v6218
  %6413 = vmatprep.subr.mxu0 0.0
  %6414 = vmatpush2.msra.mxu0 %v6217
  %6415 = vmatprep.subr.mxu0 0.0
  %6416 = vmatpush2.msra.mxu0 %v6216
  %6417 = vmatprep.subr.mxu0 0.0
  %6418 = vmatpush2.msra.mxu0 %v6215
  %6419 = vmatprep.mubr.f32.mxu0 %v6268
  %6420 = vmatmul.mubr.f32.gmra.mxu0 %v6266
  %v6421 = vpop.f32.mrf.mxu0
  %v6422 = vadd.f32 %v6352, %v6421
  %v6423 = vpop.f32.mrf.mxu0
  %6424 = vdwg.mxu0
  %6425 = vmatprep.subr.mxu0 0.0
  %6426 = vmatpush1.msra.mxu0 %v6246
  %6427 = vmatprep.subr.mxu0 0.0
  %6428 = vmatpush1.msra.mxu0 %v6245
  %6429 = vmatprep.subr.mxu0 0.0
  %6430 = vmatpush1.msra.mxu0 %v6244
  %6431 = vmatprep.subr.mxu0 0.0
  %6432 = vmatpush1.msra.mxu0 %v6243
  %6433 = vmatprep.subr.mxu0 0.0
  %6434 = vmatpush1.msra.mxu0 %v6242
  %6435 = vmatprep.subr.mxu0 0.0
  %6436 = vmatpush1.msra.mxu0 %v6241
  %6437 = vmatprep.subr.mxu0 0.0
  %6438 = vmatpush1.msra.mxu0 %v6240
  %6439 = vmatprep.subr.mxu0 0.0
  %6440 = vmatpush1.msra.mxu0 %v6239
  %6441 = vmatprep.subr.mxu0 0.0
  %6442 = vmatpush1.msra.mxu0 %v6238
  %6443 = vmatprep.subr.mxu0 0.0
  %6444 = vmatpush1.msra.mxu0 %v6237
  %6445 = vmatprep.subr.mxu0 0.0
  %6446 = vmatpush1.msra.mxu0 %v6236
  %6447 = vmatprep.subr.mxu0 0.0
  %6448 = vmatpush1.msra.mxu0 %v6235
  %6449 = vmatprep.subr.mxu0 0.0
  %6450 = vmatpush1.msra.mxu0 %v6234
  %6451 = vmatprep.subr.mxu0 0.0
  %6452 = vmatpush1.msra.mxu0 %v6233
  %6453 = vmatprep.subr.mxu0 0.0
  %6454 = vmatpush1.msra.mxu0 %v6232
  %6455 = vmatprep.subr.mxu0 0.0
  %6456 = vmatpush1.msra.mxu0 %v6231
  %6457 = vmatprep.subr.mxu0 0.0
  %6458 = vmatpush2.msra.mxu0 0.0
  %6459 = vmatprep.subr.mxu0 0.0
  %6460 = vmatpush2.msra.mxu0 0.0
  %6461 = vmatprep.subr.mxu0 0.0
  %6462 = vmatpush2.msra.mxu0 0.0
  %6463 = vmatprep.subr.mxu0 0.0
  %6464 = vmatpush2.msra.mxu0 0.0
  %6465 = vmatprep.subr.mxu0 0.0
  %6466 = vmatpush2.msra.mxu0 0.0
  %6467 = vmatprep.subr.mxu0 0.0
  %6468 = vmatpush2.msra.mxu0 0.0
  %6469 = vmatprep.subr.mxu0 0.0
  %6470 = vmatpush2.msra.mxu0 0.0
  %6471 = vmatprep.subr.mxu0 0.0
  %6472 = vmatpush2.msra.mxu0 0.0
  %6473 = vmatprep.subr.mxu0 0.0
  %6474 = vmatpush2.msra.mxu0 0.0
  %6475 = vmatprep.subr.mxu0 0.0
  %6476 = vmatpush2.msra.mxu0 0.0
  %6477 = vmatprep.subr.mxu0 0.0
  %6478 = vmatpush2.msra.mxu0 0.0
  %6479 = vmatprep.subr.mxu0 0.0
  %6480 = vmatpush2.msra.mxu0 0.0
  %6481 = vmatprep.subr.mxu0 0.0
  %6482 = vmatpush2.msra.mxu0 0.0
  %6483 = vmatprep.subr.mxu0 0.0
  %6484 = vmatpush2.msra.mxu0 0.0
  %6485 = vmatprep.subr.mxu0 0.0
  %6486 = vmatpush2.msra.mxu0 0.0
  %6487 = vmatprep.subr.mxu0 0.0
  %6488 = vmatpush2.msra.mxu0 %v6247
  %6489 = vmatprep.mubr.f32.mxu0 %v6283
  %6490 = vmatmul.mubr.f32.gmra.mxu0 %v6275
  %v6491 = vpop.f32.mrf.mxu0
  %v6492 = vadd.f32 %v6422, %v6491
  %v6493 = vpop.f32.mrf.mxu0
  %6494 = vdwg.mxu0
  %v6495 = vlaneseq
  %v6496 = vshrl.u32 %v6495, 7
  %v6497 = vsub.s32 0, %v6496
  %v6498 = vrot.slane %v23, %v6497
  %vm6499 = vcmask 261120
  %v6501 = vsel %vm6499, %v6492, 0
  %6503 = vmatprep.subr.mxu0 0.0
  %6504 = vmatpush1.msra.mxu0 0.0
  %6505 = vmatprep.subr.mxu0 0.0
  %6506 = vmatpush1.msra.mxu0 0.0
  %6507 = vmatprep.subr.mxu0 0.0
  %6508 = vmatpush1.msra.mxu0 0.0
  %6509 = vmatprep.subr.mxu0 0.0
  %6510 = vmatpush1.msra.mxu0 0.0
  %6511 = vmatprep.subr.mxu0 0.0
  %6512 = vmatpush1.msra.mxu0 0.0
  %6513 = vmatprep.subr.mxu0 0.0
  %6514 = vmatpush1.msra.mxu0 0.0
  %6515 = vmatprep.subr.mxu0 0.0
  %6516 = vmatpush1.msra.mxu0 0.0
  %6517 = vmatprep.subr.mxu0 0.0
  %6518 = vmatpush1.msra.mxu0 0.0
  %6519 = vmatprep.subr.mxu0 0.0
  %6520 = vmatpush1.msra.mxu0 0.0
  %6521 = vmatprep.subr.mxu0 0.0
  %6522 = vmatpush1.msra.mxu0 0.0
  %6523 = vmatprep.subr.mxu0 0.0
  %6524 = vmatpush1.msra.mxu0 0.0
  %6525 = vmatprep.subr.mxu0 0.0
  %6526 = vmatpush1.msra.mxu0 0.0
  %6527 = vmatprep.subr.mxu0 0.0
  %6528 = vmatpush1.msra.mxu0 %v21
  %6529 = vmatprep.subr.mxu0 0.0
  %6530 = vmatpush1.msra.mxu0 %v20
  %6531 = vmatprep.subr.mxu0 0.0
  %6532 = vmatpush1.msra.mxu0 %v19
  %6533 = vmatprep.subr.mxu0 0.0
  %6534 = vmatpush1.msra.mxu0 %v18
  %6535 = vmatprep.subr.mxu0 0.0
  %6536 = vmatpush2.msra.mxu0 0.0
  %6537 = vmatprep.subr.mxu0 0.0
  %6538 = vmatpush2.msra.mxu0 0.0
  %6539 = vmatprep.subr.mxu0 0.0
  %6540 = vmatpush2.msra.mxu0 0.0
  %6541 = vmatprep.subr.mxu0 0.0
  %6542 = vmatpush2.msra.mxu0 0.0
  %6543 = vmatprep.subr.mxu0 0.0
  %6544 = vmatpush2.msra.mxu0 0.0
  %6545 = vmatprep.subr.mxu0 0.0
  %6546 = vmatpush2.msra.mxu0 0.0
  %6547 = vmatprep.subr.mxu0 0.0
  %6548 = vmatpush2.msra.mxu0 0.0
  %6549 = vmatprep.subr.mxu0 0.0
  %6550 = vmatpush2.msra.mxu0 0.0
  %6551 = vmatprep.subr.mxu0 0.0
  %6552 = vmatpush2.msra.mxu0 0.0
  %6553 = vmatprep.subr.mxu0 0.0
  %6554 = vmatpush2.msra.mxu0 0.0
  %6555 = vmatprep.subr.mxu0 0.0
  %6556 = vmatpush2.msra.mxu0 0.0
  %6557 = vmatprep.subr.mxu0 0.0
  %6558 = vmatpush2.msra.mxu0 0.0
  %6559 = vmatprep.subr.mxu0 0.0
  %6560 = vmatpush2.msra.mxu0 0.0
  %6561 = vmatprep.subr.mxu0 0.0
  %6562 = vmatpush2.msra.mxu0 0.0
  %6563 = vmatprep.subr.mxu0 0.0
  %6564 = vmatpush2.msra.mxu0 0.0
  %6565 = vmatprep.subr.mxu0 0.0
  %6566 = vmatpush2.msra.mxu0 0.0
  %6567 = vmatprep.mubr.f32.mxu0 0.0
  %6568 = vmatmul.mubr.f32.gmra.mxu0 %v6501
  %v6569 = vpop.f32.mrf.mxu0
  %v6570 = vadd.f32 %v6498, %v6569
  %v6571 = vpop.f32.mrf.mxu0
  %6572 = vdwg.mxu0
  %vm6573 = vcmask 123904
  %v6574 = vsel %vm6573, %v6570, -inf
  %6575 = vmax.xlane.f32.xlu0 %v6574
  %v6576 = vpop.xlane.xlu0 %6575
  %v6577 = vsub.f32 %v6570, %v6576
  %v6578 = vmul.f32 %v6577, 1.442695
  %v6579 = vpow.pop %v6578
  %v6580 = vsel %vm6573, %v6579, 0.0
  %6581 = vadd.xlane.f32.xlu0 %v6580
  %v6582 = vpop.xlane.xlu0 %6581
  %v6583 = vlog2.pop %v6582
  %v6584 = vmul.f32 %v6583, 0.6931472
  %v6585 = vmul.f32 %v6579, %v6577
  %v6586 = vsel %vm6573, %v6585, 0.0
  %6587 = vadd.xlane.f32.xlu0 %v6586
  %v6588 = vpop.xlane.xlu0 %6587
  %v6589 = vrcp.pop %v6582
  %v6590 = vmul.f32 %v6588, %v6589
  %v6591 = vsub.f32 %v6584, %v6590
  %vm6592 = vcmask 130048
  %v6593 = vsel %vm6592, %v6570, %v6591
  %vm6594 = vcmask 138240
  %v6595 = vsel %vm6594, %v6593, 0.0
  %6596 = vst [vmem:[%s4] sm:$0x3] %v6595
  // Predicated region
  $region18: #{tent_ext_forward.1} parent=0 // pred_check
    _
  $region19: #{tent_ext_forward.1} parent=0 // pred_check_branch
    %6598 = sbr.rel (0) target = $region21
  $region20: #{tent_ext_forward.1} parent=0 // pred_region
    _
  $region21: #{tent_ext_forward.1} parent=0 // pred_fallthru
    _
  // Predicated region
  $region22: #{tent_ext_forward.1} parent=0 // pred_check
    _
  $region23: #{tent_ext_forward.1} parent=0 // pred_check_branch
    %6600 = sbr.rel (0) target = $region25
  $region24: #{tent_ext_forward.1} parent=0 // pred_region
    _
  $region25: #{tent_ext_forward.1} parent=0 // pred_fallthru
    _

</llo_original>
